<compile_context>
chip_gen: v6e
topology: v6e:2x2x1
jax: 0.10.0
libtpu: 0.0.40
codegen_flags: <defaults>
</compile_context>

<pallas_src>
import jax
import jax.numpy as jnp
from jax.experimental import pallas as pl
from jax.experimental.pallas import tpu as pltpu


# ---------------------------------------------------------------------------
# Kernel 1: fused im2col conv matmul + folded (eval-mode) BatchNorm + ReLU
# ---------------------------------------------------------------------------
def conv_bn_relu_kernel(p_ref, w_ref, scale_ref, bias_ref, o_ref):
    acc = jnp.dot(p_ref[...], w_ref[...], preferred_element_type=jnp.float32)
    acc = acc * scale_ref[...] + bias_ref[...]       # per-channel scale/shift
    o_ref[...] = jnp.maximum(acc, 0.0)               # ReLU


def conv_bn_relu(patches, w, scale, bias, *, tm=2400):
    M, K = patches.shape
    _, N = w.shape
    assert M % tm == 0, (M, tm)
    return pl.pallas_call(
        conv_bn_relu_kernel,
        out_shape=jax.ShapeDtypeStruct((M, N), jnp.float32),
        grid_spec=pltpu.PrefetchScalarGridSpec(
            num_scalar_prefetch=0,
            grid=(M // tm,),
            in_specs=[
                pl.BlockSpec((tm, K), lambda i: (i, 0)),   # patch tile
                pl.BlockSpec((K, N), lambda i: (0, 0)),    # conv weight (full)
                pl.BlockSpec((1, N), lambda i: (0, 0)),    # folded BN scale
                pl.BlockSpec((1, N), lambda i: (0, 0)),    # folded BN+conv bias
            ],
            out_specs=pl.BlockSpec((tm, N), lambda i: (i, 0)),
        ),
        compiler_params=pltpu.CompilerParams(
            dimension_semantics=("parallel",)),
    )(patches, w, scale, bias)


# ---------------------------------------------------------------------------
# Kernel 2: linear head.  Weight is K-major (N, K); K reduction is the grid.
# ---------------------------------------------------------------------------
def linear_kernel(x_ref, w_ref, b_ref, o_ref):
    k = pl.program_id(0)

    @pl.when(k == 0)
    def _():
        # Initialize the resident accumulator with the bias (saves an epilogue).
        o_ref[...] = jnp.broadcast_to(b_ref[...], o_ref.shape)

    o_ref[...] += jax.lax.dot_general(
        x_ref[...], w_ref[...],
        dimension_numbers=(((1,), (1,)), ((), ())),   # contract K with K
        preferred_element_type=jnp.float32)


def linear_head(x, w_km, b, *, tk=38400):
    M, K = x.shape
    N, K2 = w_km.shape
    assert K == K2 and K % tk == 0, (K, K2, tk)
    return pl.pallas_call(
        linear_kernel,
        out_shape=jax.ShapeDtypeStruct((M, N), jnp.float32),
        grid_spec=pltpu.PrefetchScalarGridSpec(
            num_scalar_prefetch=0,
            grid=(K // tk,),
            in_specs=[
                pl.BlockSpec((M, tk), lambda k: (0, k)),   # activations
                pl.BlockSpec((N, tk), lambda k: (0, k)),   # K-major weight
                pl.BlockSpec((1, N), lambda k: (0, 0)),    # bias
            ],
            out_specs=pl.BlockSpec((M, N), lambda k: (0, 0)),
        ),
        compiler_params=pltpu.CompilerParams(
            dimension_semantics=("arbitrary",)),
    )(x, w_km, b)


# ---------------------------------------------------------------------------
# Forward pass (glue in plain JAX, hot paths in Pallas)
# ---------------------------------------------------------------------------
EPS = 1e-5


def dqn_forward(x, params):
    B, C, H, W = x.shape
    k = s = 5
    Ho, Wo = H // s, W // s
    OC = params["conv_w"].shape[0]

    # im2col for stride == kernel (non-overlapping patches): (B*Ho*Wo, C*k*k).
    # TODO(synk): this transpose is an XLA-side HBM shuffle; reading x directly
    # in-kernel (or casting to bf16) would shave it but adds lowering risk.
    p = x.reshape(B, C, Ho, k, Wo, k)
    p = p.transpose(0, 2, 4, 1, 3, 5).reshape(B * Ho * Wo, C * k * k)

    w_conv = params["conv_w"].reshape(OC, C * k * k).T          # (75, 16)

    # Fold conv bias + eval-mode BatchNorm into per-channel scale / shift.
    # TODO(synk): BN uses running stats (eval mode); train-mode batch
    # statistics are not computed here.
    bn_scale = params["bn_gamma"] / jnp.sqrt(params["bn_var"] + EPS)
    eff_scale = bn_scale
    eff_bias = bn_scale * (params["conv_b"] - params["bn_mean"]) + params["bn_beta"]

    y = conv_bn_relu(p, w_conv,
                     eff_scale.reshape(1, OC), eff_bias.reshape(1, OC))

    # Conv output rows are (b, h, w)-major with channels last (NHWC flatten):
    # a pure row-major reshape; no activation-side transpose kernel anymore.
    y = y.reshape(B, Ho * Wo * OC)

    # Permute head-weight columns once (static) from torch's NCHW flatten
    # order (c*Ho*Wo + h*Wo + w) to NHWC order ((h*Wo + w)*OC + c), and keep
    # the weight K-major (2, K) so kernel DMAs are contiguous and lane-dense.
    w_head = params["head_w"].reshape(2, OC, Ho, Wo)
    w_head = w_head.transpose(0, 2, 3, 1).reshape(2, Ho * Wo * OC)

    return linear_head(y, w_head, params["head_b"].reshape(1, 2))


# ---------------------------------------------------------------------------
# Pure-JAX reference (independent path, for verification only)
# ---------------------------------------------------------------------------
def dqn_reference(x, params):
    y = jax.lax.conv_general_dilated(
        x, params["conv_w"], window_strides=(5, 5), padding="VALID",
        dimension_numbers=("NCHW", "OIHW", "NCHW"))
    y = y + params["conv_b"].reshape(1, 16, 1, 1)
    y = (y - params["bn_mean"].reshape(1, 16, 1, 1)) / jnp.sqrt(
        params["bn_var"].reshape(1, 16, 1, 1) + EPS)
    y = y * params["bn_gamma"].reshape(1, 16, 1, 1) + params["bn_beta"].reshape(1, 16, 1, 1)
    y = jnp.maximum(y, 0.0)
    y = y.reshape(y.shape[0], -1)
    return y @ params["head_w"].T + params["head_b"]


def init_params(key):
    ks = jax.random.split(key, 8)
    fan_conv = 3 * 5 * 5
    fan_head = 153600
    b_conv = 1.0 / jnp.sqrt(fan_conv)
    b_head = 1.0 / jnp.sqrt(fan_head)
    return {
        "conv_w": jax.random.uniform(ks[0], (16, 3, 5, 5), jnp.float32, -b_conv, b_conv),
        "conv_b": jax.random.uniform(ks[1], (16,), jnp.float32, -b_conv, b_conv),
        "bn_gamma": jax.random.uniform(ks[2], (16,), jnp.float32, 0.5, 1.5),
        "bn_beta": jax.random.uniform(ks[3], (16,), jnp.float32, -0.1, 0.1),
        "bn_mean": jax.random.uniform(ks[4], (16,), jnp.float32, -0.1, 0.1),
        "bn_var": jax.random.uniform(ks[5], (16,), jnp.float32, 0.5, 1.5),
        "head_w": jax.random.uniform(ks[6], (2, 153600), jnp.float32, -b_head, b_head),
        "head_b": jax.random.uniform(ks[7], (2,), jnp.float32, -b_head, b_head),
    }


if __name__ == "__main__":
    key = jax.random.PRNGKey(0)
    pkey, xkey = jax.random.split(key)
    params = init_params(pkey)

    # Input consistent with head=Linear(153600, 2): (B,3,400,600) -> conv out
    # (B,16,80,120) -> flatten 16*80*120 = 153600.
    x = jax.random.normal(xkey, (2, 3, 400, 600), jnp.float32)

    out = jax.block_until_ready(dqn_forward(x, params))
    ref = jax.block_until_ready(dqn_reference(x, params))

    assert out.shape == (2, 2), out.shape
    assert jnp.allclose(out, ref, rtol=1e-3, atol=1e-3), (out, ref)
    print("KERNEL_OK")
</pallas_src>

<mosaic_0001>
module attributes {stable_mosaic.version = 11 : i64} {
  func.func @conv_bn_relu_kernel(%arg0: i32, %arg1: memref<2400x75xf32, #tpu.memory_space<vmem>>, %arg2: memref<75x16xf32, #tpu.memory_space<vmem>>, %arg3: memref<1x16xf32, #tpu.memory_space<vmem>>, %arg4: memref<1x16xf32, #tpu.memory_space<vmem>>, %arg5: memref<2400x16xf32, #tpu.memory_space<vmem>>) attributes {dimension_semantics = [#tpu.dimension_semantics<parallel>], iteration_bounds = array<i64: 8>, scalar_prefetch = 0 : i64, scratch_operands = 0 : i64, tpu.core_type = #tpu.core_type<tc>, window_params = [{transform_indices = @transform_0, window_bounds = array<i64: 2400, 75>}, {pipeline_mode = #tpu.pipeline_mode<synchronous>, transform_indices = @transform_1, window_bounds = array<i64: 75, 16>}, {pipeline_mode = #tpu.pipeline_mode<synchronous>, transform_indices = @transform_2, window_bounds = array<i64: 1, 16>}, {pipeline_mode = #tpu.pipeline_mode<synchronous>, transform_indices = @transform_3, window_bounds = array<i64: 1, 16>}, {transform_indices = @transform_4, window_bounds = array<i64: 2400, 16>}]} {
    %c0 = arith.constant 0 : index
    %c0_0 = arith.constant 0 : index
    %0 = vector.load %arg1[%c0, %c0_0] : memref<2400x75xf32, #tpu.memory_space<vmem>>, vector<2400x75xf32>
    %c0_1 = arith.constant 0 : index
    %c0_2 = arith.constant 0 : index
    %1 = vector.load %arg2[%c0_1, %c0_2] : memref<75x16xf32, #tpu.memory_space<vmem>>, vector<75x16xf32>
    %cst = arith.constant dense<0.000000e+00> : vector<2400x16xf32>
    %2 = tpu.matmul %0, %1, %cst {dimension_numbers = #tpu.dot_dimension_numbers<[1], [0], [0], [1], [0, 0, 1, 1], [], []>} : vector<2400x75xf32>, vector<75x16xf32>, vector<2400x16xf32> -> vector<2400x16xf32>
    %c0_3 = arith.constant 0 : index
    %c0_4 = arith.constant 0 : index
    %3 = vector.load %arg3[%c0_3, %c0_4] : memref<1x16xf32, #tpu.memory_space<vmem>>, vector<1x16xf32>
    %4 = vector.broadcast %3 : vector<1x16xf32> to vector<2400x16xf32>
    %5 = arith.mulf %2, %4 : vector<2400x16xf32>
    %c0_5 = arith.constant 0 : index
    %c0_6 = arith.constant 0 : index
    %6 = vector.load %arg4[%c0_5, %c0_6] : memref<1x16xf32, #tpu.memory_space<vmem>>, vector<1x16xf32>
    %7 = vector.broadcast %6 : vector<1x16xf32> to vector<2400x16xf32>
    %8 = arith.addf %5, %7 : vector<2400x16xf32>
    %cst_7 = arith.constant 0.000000e+00 : f32
    %9 = vector.broadcast %cst_7 : f32 to vector<2400x16xf32>
    %10 = arith.maximumf %8, %9 : vector<2400x16xf32>
    %c0_8 = arith.constant 0 : index
    %c0_9 = arith.constant 0 : index
    %11 = vector.load %arg5[%c0_8, %c0_9] : memref<2400x16xf32, #tpu.memory_space<vmem>>, vector<2400x16xf32>
    tpu.vector_store %arg5[%c0_8, %c0_9], %10 {strides = array<i32>} : memref<2400x16xf32, #tpu.memory_space<vmem>>, vector<2400x16xf32>,
    return
  }
  func.func @transform_0(%arg0: i32) -> (i32, i32) {
    %c0_i32 = arith.constant 0 : i32
    %c0_i32_0 = arith.constant 0 : i32
    return %arg0, %c0_i32 : i32, i32
  }
  func.func @transform_1(%arg0: i32) -> (i32, i32) {
    %c0_i32 = arith.constant 0 : i32
    %c0_i32_0 = arith.constant 0 : i32
    %c0_i32_1 = arith.constant 0 : i32
    return %c0_i32, %c0_i32_0 : i32, i32
  }
  func.func @transform_2(%arg0: i32) -> (i32, i32) {
    %c0_i32 = arith.constant 0 : i32
    %c0_i32_0 = arith.constant 0 : i32
    %c0_i32_1 = arith.constant 0 : i32
    return %c0_i32, %c0_i32_0 : i32, i32
  }
  func.func @transform_3(%arg0: i32) -> (i32, i32) {
    %c0_i32 = arith.constant 0 : i32
    %c0_i32_0 = arith.constant 0 : i32
    %c0_i32_1 = arith.constant 0 : i32
    return %c0_i32, %c0_i32_0 : i32, i32
  }
  func.func @transform_4(%arg0: i32) -> (i32, i32) {
    %c0_i32 = arith.constant 0 : i32
    %c0_i32_0 = arith.constant 0 : i32
    return %arg0, %c0_i32 : i32, i32
  }
}

</mosaic_0001>

<llo_original>
// kernel: tpu_custom_call.1
$region0: #{tpu_custom_call.1}
  #allocation0 [shape = 'u32[]', space=smem, size = 0x4, offset = 0x4, fixed_abs, tag = 'smem constant byte address 0x4 - core index']
  #allocation1 [shape = 'u32[144,128]{1,0:T(1,128)}', space=vmem, size = 0x12000, scoped, tag = 'internal scratch']
  %s0 = inlined_call_operand.vmem [shape: f32[19200,75], index: 0, kind: input, shape index: {}]
  %s1 = inlined_call_operand.vmem [shape: f32[75,16], index: 1, kind: input, shape index: {}]
  %s2 = inlined_call_operand.vmem [shape: f32[1,16], index: 2, kind: input, shape index: {}]
  %s3 = inlined_call_operand.vmem [shape: f32[1,16], index: 3, kind: input, shape index: {}]
  %s4 = inlined_call_operand.vmem [shape: f32[19200,16], index: 4, kind: output, shape index: {}]
  %s5 = sld [smem:[#allocation0]]
  $region49: #{tpu_custom_call.1} parent=0
    _
  %s7 = ssub.s32 1, %s5
  %s8 = scalar_select 0, %s7, %s5
  loop: start=0, step=1, limit=10
  $region2: #{tpu_custom_call.1} parent=0 // loop_pre_header
    _
  $region3: #{tpu_custom_call.1} parent=0 // loop_header
    %s10 = sphi 0, %s14
    %p11 = scmp.ge.s32.totalorder %s10, 10
    %s20 = sphi 0, %s22
    %s23 = sphi 0, %s20
    %s24 = sphi 0, %s23
    %s40 = sphi 0, %s24
    %s44 = sphi 0, %s44
    %s46 = sphi 0, %s44
    %s47 = sphi 0, %s46
    %s61 = sphi 0, %s47
    %s65 = sphi 0, %s65
    %s67 = sphi 0, %s65
    %s68 = sphi 0, %s67
    %s82 = sphi 0, %s68
    %s86 = sphi 0, %s86
    %s88 = sphi 0, %s86
    %s89 = sphi 0, %s88
    %s103 = sphi 0, %s89
    %s109 = sphi 0, %s111
    %s112 = sphi 0, %s109
    %s113 = sphi 0, %s112
    %s129 = sphi 0, %s113
  $region4: #{tpu_custom_call.1} parent=0 // loop_header_branch
    %13 = sbr.rel (%p11) target = $region8
  $region5: #{tpu_custom_call.1} parent=0 // loop_body
    %s15 = ssub.s32 %s10, 1
    %s16 = ssub.s32 %s10, 2
    %s17 = sadd.s32 %s10, 1
    %s18 = ssub.s32 %s10, %s17
    %p19 = scmp.eq.s32.totalorder %s18, 0
    %s21 = sadd.s32 %s20, 1
    %s22 = scalar_select %p19, %s20, %s21
    %p25 = pneg %p19
    %p26 = scmp.eq.s32.totalorder %s10, 7
    %p27 = por %p25, %p26
    %p28 = scmp.ne.s32.totalorder %s20, %s23
    %p29 = scmp.eq.s32.totalorder %s10, 0
    %p30 = por %p28, %p29
    %p31 = scmp.ne.s32.totalorder %s20, %s23
    %p32 = scmp.eq.s32.totalorder %s15, 7
    %p33 = por %p31, %p32
    %p34 = scmp.ne.s32.totalorder %s23, %s24
    %p35 = scmp.eq.s32.totalorder %s15, 0
    %p36 = por %p34, %p35
    %p37 = scmp.ne.s32.totalorder %s23, %s24
    %p38 = scmp.eq.s32.totalorder %s16, 7
    %p39 = por %p37, %p38
    %p41 = scmp.ne.s32.totalorder %s24, %s40
    %p42 = scmp.eq.s32.totalorder %s16, 0
    %p43 = por %p41, %p42
    %s45 = sadd.s32 %s44, 1
    %p48 = scmp.eq.s32.totalorder %s10, 7
    %p49 = scmp.ne.s32.totalorder %s44, %s46
    %p50 = scmp.eq.s32.totalorder %s10, 0
    %p51 = por %p49, %p50
    %p52 = scmp.ne.s32.totalorder %s44, %s46
    %p53 = scmp.eq.s32.totalorder %s15, 7
    %p54 = por %p52, %p53
    %p55 = scmp.ne.s32.totalorder %s46, %s47
    %p56 = scmp.eq.s32.totalorder %s15, 0
    %p57 = por %p55, %p56
    %p58 = scmp.ne.s32.totalorder %s46, %s47
    %p59 = scmp.eq.s32.totalorder %s16, 7
    %p60 = por %p58, %p59
    %p62 = scmp.ne.s32.totalorder %s47, %s61
    %p63 = scmp.eq.s32.totalorder %s16, 0
    %p64 = por %p62, %p63
    %s66 = sadd.s32 %s65, 1
    %p69 = scmp.eq.s32.totalorder %s10, 7
    %p70 = scmp.ne.s32.totalorder %s65, %s67
    %p71 = scmp.eq.s32.totalorder %s10, 0
    %p72 = por %p70, %p71
    %p73 = scmp.ne.s32.totalorder %s65, %s67
    %p74 = scmp.eq.s32.totalorder %s15, 7
    %p75 = por %p73, %p74
    %p76 = scmp.ne.s32.totalorder %s67, %s68
    %p77 = scmp.eq.s32.totalorder %s15, 0
    %p78 = por %p76, %p77
    %p79 = scmp.ne.s32.totalorder %s67, %s68
    %p80 = scmp.eq.s32.totalorder %s16, 7
    %p81 = por %p79, %p80
    %p83 = scmp.ne.s32.totalorder %s68, %s82
    %p84 = scmp.eq.s32.totalorder %s16, 0
    %p85 = por %p83, %p84
    %s87 = sadd.s32 %s86, 1
    %p90 = scmp.eq.s32.totalorder %s10, 7
    %p91 = scmp.ne.s32.totalorder %s86, %s88
    %p92 = scmp.eq.s32.totalorder %s10, 0
    %p93 = por %p91, %p92
    %p94 = scmp.ne.s32.totalorder %s86, %s88
    %p95 = scmp.eq.s32.totalorder %s15, 7
    %p96 = por %p94, %p95
    %p97 = scmp.ne.s32.totalorder %s88, %s89
    %p98 = scmp.eq.s32.totalorder %s15, 0
    %p99 = por %p97, %p98
    %p100 = scmp.ne.s32.totalorder %s88, %s89
    %p101 = scmp.eq.s32.totalorder %s16, 7
    %p102 = por %p100, %p101
    %p104 = scmp.ne.s32.totalorder %s89, %s103
    %p105 = scmp.eq.s32.totalorder %s16, 0
    %p106 = por %p104, %p105
    %s107 = ssub.s32 %s10, %s17
    %p108 = scmp.eq.s32.totalorder %s107, 0
    %s110 = sadd.s32 %s109, 1
    %s111 = scalar_select %p108, %s109, %s110
    %p114 = pneg %p108
    %p115 = scmp.eq.s32.totalorder %s10, 7
    %p116 = por %p114, %p115
    %p117 = scmp.ne.s32.totalorder %s109, %s112
    %p118 = scmp.eq.s32.totalorder %s10, 0
    %p119 = por %p117, %p118
    %p120 = scmp.ne.s32.totalorder %s109, %s112
    %p121 = scmp.eq.s32.totalorder %s15, 7
    %p122 = por %p120, %p121
    %p123 = scmp.ne.s32.totalorder %s112, %s113
    %p124 = scmp.eq.s32.totalorder %s15, 0
    %p125 = por %p123, %p124
    %p126 = scmp.ne.s32.totalorder %s112, %s113
    %p127 = scmp.eq.s32.totalorder %s16, 7
    %p128 = por %p126, %p127
    %p130 = scmp.ne.s32.totalorder %s113, %s129
    %p131 = scmp.eq.s32.totalorder %s16, 0
    %p132 = por %p130, %p131
    %p133 = scmp.le.s32.totalorder 1, %s10
    %p134 = scmp.lt.s32.totalorder %s10, 9
    %p135 = pnand %p133, %p134
    %p136 = pneg %p135
    // Predicated region
    $region9: #{tpu_custom_call.1} parent=5 // pred_check
      _
    $region10: #{tpu_custom_call.1} parent=5 // pred_check_branch
      %138 = sbr.rel (%p135) target = $region12
    $region11: #{tpu_custom_call.1} parent=5 // pred_region
      %s139 = ssub.s32 %s10, 1
      // Predicated region
      $region13: #{tpu_custom_call.1} parent=11 // pred_check
        %p140 = pneg %p57
      $region14: #{tpu_custom_call.1} parent=11 // pred_check_branch
        %142 = sbr.rel (%p140) target = $region16
      $region15: #{tpu_custom_call.1} parent=11 // pred_region
        _
      $region16: #{tpu_custom_call.1} parent=11 // pred_fallthru
        _
      // Predicated region
      $region17: #{tpu_custom_call.1} parent=11 // pred_check
        %p143 = pneg %p78
      $region18: #{tpu_custom_call.1} parent=11 // pred_check_branch
        %145 = sbr.rel (%p143) target = $region20
      $region19: #{tpu_custom_call.1} parent=11 // pred_region
        _
      $region20: #{tpu_custom_call.1} parent=11 // pred_fallthru
        _
      // Predicated region
      $region21: #{tpu_custom_call.1} parent=11 // pred_check
        %p146 = pneg %p99
      $region22: #{tpu_custom_call.1} parent=11 // pred_check_branch
        %148 = sbr.rel (%p146) target = $region24
      $region23: #{tpu_custom_call.1} parent=11 // pred_region
        _
      $region24: #{tpu_custom_call.1} parent=11 // pred_fallthru
        _
    $region12: #{tpu_custom_call.1} parent=5 // pred_fallthru
      _
    %p149 = scmp.lt.s32.totalorder %s10, 8
    // Predicated region
    $region25: #{tpu_custom_call.1} parent=5 // pred_check
      %p150 = pneg %p149
    $region26: #{tpu_custom_call.1} parent=5 // pred_check_branch
      %152 = sbr.rel (%p150) target = $region28
    $region27: #{tpu_custom_call.1} parent=5 // pred_region
      // Predicated region
      $region29: #{tpu_custom_call.1} parent=27 // pred_check
        %p153 = pneg %p30
      $region30: #{tpu_custom_call.1} parent=27 // pred_check_branch
        %155 = sbr.rel (%p153) target = $region32
      $region31: #{tpu_custom_call.1} parent=27 // pred_region
        %s156 = smul.u32 300, %s10
        %p157 = scmp.lt.s32.totalorder %s156, 2399
        %s158 = scalar_select %p157, %s156, 2399
        %s159 = smul.addr %s158, 8
        %s160 = scalar_lea.vmem %s0, %s159
        %s161 = smul.u32 300, %s10
      $region32: #{tpu_custom_call.1} parent=27 // pred_fallthru
        _
    $region28: #{tpu_custom_call.1} parent=5 // pred_fallthru
      _
    %p162 = scmp.le.s32.totalorder 1, %s10
    %p163 = scmp.lt.s32.totalorder %s10, 9
    %p164 = pnand %p162, %p163
    %p165 = pneg %p164
    // Predicated region
    $region33: #{tpu_custom_call.1} parent=5 // pred_check
      _
    $region34: #{tpu_custom_call.1} parent=5 // pred_check_branch
      %167 = sbr.rel (%p164) target = $region36
    $region35: #{tpu_custom_call.1} parent=5 // pred_region
      %s168 = ssub.s32 %s10, 1
      %s169 = smul.u32 300, %s15
      %p170 = scmp.lt.s32.totalorder %s169, 2399
      %s171 = scalar_select %p170, %s169, 2399
      %s172 = smul.addr %s171, 8
      %s173 = scalar_lea.vmem %s0, %s172
      %p174 = pneg %p36
      %p175 = pneg %p33
      %p176 = pneg %p57
      %p177 = pneg %p54
      %p178 = pneg %p78
      %p179 = pneg %p75
      %p180 = pneg %p99
      %p181 = pneg %p96
      %p182 = pneg %p125
      %p183 = pneg %p122
      %s184 = smul.u32 300, %s15
      %p185 = scmp.lt.s32.totalorder %s184, 2399
      %s186 = scalar_select %p185, %s184, 2399
      %s187 = smul.addr %s186, 8
      %s188 = scalar_lea.vmem %s4, %s187
      %s189 = smul.u32 300, %s15
      %p190 = scmp.lt.s32.totalorder %s189, 2399
      %s191 = scalar_select %p190, %s189, 2399
      %s192 = smul.addr %s191, 8
      %s193 = scalar_lea.vmem %s0, %s192
      %s194 = smul.u32 300, %s15
      %s195 = smul.u32 300, %s15
      %p196 = scmp.lt.s32.totalorder %s195, 2399
      %s197 = scalar_select %p196, %s195, 2399
      %s198 = smul.addr %s197, 8
      %s199 = scalar_lea.vmem %s4, %s198
      %s200 = smul.u32 300, %s15
      %v201 = vld [vmem:[%s193] sm:$0xff]
      %v202 = vld [vmem:[%s193 + $0x8] sm:$0xff]
      %v203 = vld [vmem:[%s193 + $0x10] sm:$0xff]
      %v204 = vld [vmem:[%s193 + $0x18] sm:$0xff]
      %v205 = vld [vmem:[%s193 + $0x20] sm:$0xff]
      %v206 = vld [vmem:[%s193 + $0x28] sm:$0xff]
      %v207 = vld [vmem:[%s193 + $0x30] sm:$0xff]
      %v208 = vld [vmem:[%s193 + $0x38] sm:$0xff]
      %v209 = vld [vmem:[%s193 + $0x40] sm:$0xff]
      %v210 = vld [vmem:[%s193 + $0x48] sm:$0xff]
      %v211 = vld [vmem:[%s193 + $0x50] sm:$0xff]
      %v212 = vld [vmem:[%s193 + $0x58] sm:$0xff]
      %v213 = vld [vmem:[%s193 + $0x60] sm:$0xff]
      %v214 = vld [vmem:[%s193 + $0x68] sm:$0xff]
      %v215 = vld [vmem:[%s193 + $0x70] sm:$0xff]
      %v216 = vld [vmem:[%s193 + $0x78] sm:$0xff]
      %v217 = vld [vmem:[%s193 + $0x80] sm:$0xff]
      %v218 = vld [vmem:[%s193 + $0x88] sm:$0xff]
      %v219 = vld [vmem:[%s193 + $0x90] sm:$0xff]
      %v220 = vld [vmem:[%s193 + $0x98] sm:$0xff]
      %v221 = vld [vmem:[%s193 + $0xa0] sm:$0xff]
      %v222 = vld [vmem:[%s193 + $0xa8] sm:$0xff]
      %v223 = vld [vmem:[%s193 + $0xb0] sm:$0xff]
      %v224 = vld [vmem:[%s193 + $0xb8] sm:$0xff]
      %v225 = vld [vmem:[%s193 + $0xc0] sm:$0xff]
      %v226 = vld [vmem:[%s193 + $0xc8] sm:$0xff]
      %v227 = vld [vmem:[%s193 + $0xd0] sm:$0xff]
      %v228 = vld [vmem:[%s193 + $0xd8] sm:$0xff]
      %v229 = vld [vmem:[%s193 + $0xe0] sm:$0xff]
      %v230 = vld [vmem:[%s193 + $0xe8] sm:$0xff]
      %v231 = vld [vmem:[%s193 + $0xf0] sm:$0xff]
      %v232 = vld [vmem:[%s193 + $0xf8] sm:$0xff]
      %v233 = vld [vmem:[%s193 + $0x100] sm:$0xff]
      %v234 = vld [vmem:[%s193 + $0x108] sm:$0xff]
      %v235 = vld [vmem:[%s193 + $0x110] sm:$0xff]
      %v236 = vld [vmem:[%s193 + $0x118] sm:$0xff]
      %v237 = vld [vmem:[%s193 + $0x120] sm:$0xff]
      %v238 = vld [vmem:[%s193 + $0x128] sm:$0xff]
      %v239 = vld [vmem:[%s193 + $0x130] sm:$0xff]
      %v240 = vld [vmem:[%s193 + $0x138] sm:$0xff]
      %v241 = vld [vmem:[%s193 + $0x140] sm:$0xff]
      %v242 = vld [vmem:[%s193 + $0x148] sm:$0xff]
      %v243 = vld [vmem:[%s193 + $0x150] sm:$0xff]
      %v244 = vld [vmem:[%s193 + $0x158] sm:$0xff]
      %v245 = vld [vmem:[%s193 + $0x160] sm:$0xff]
      %v246 = vld [vmem:[%s193 + $0x168] sm:$0xff]
      %v247 = vld [vmem:[%s193 + $0x170] sm:$0xff]
      %v248 = vld [vmem:[%s193 + $0x178] sm:$0xff]
      %v249 = vld [vmem:[%s193 + $0x180] sm:$0xff]
      %v250 = vld [vmem:[%s193 + $0x188] sm:$0xff]
      %v251 = vld [vmem:[%s193 + $0x190] sm:$0xff]
      %v252 = vld [vmem:[%s193 + $0x198] sm:$0xff]
      %v253 = vld [vmem:[%s193 + $0x1a0] sm:$0xff]
      %v254 = vld [vmem:[%s193 + $0x1a8] sm:$0xff]
      %v255 = vld [vmem:[%s193 + $0x1b0] sm:$0xff]
      %v256 = vld [vmem:[%s193 + $0x1b8] sm:$0xff]
      %v257 = vld [vmem:[%s193 + $0x1c0] sm:$0xff]
      %v258 = vld [vmem:[%s193 + $0x1c8] sm:$0xff]
      %v259 = vld [vmem:[%s193 + $0x1d0] sm:$0xff]
      %v260 = vld [vmem:[%s193 + $0x1d8] sm:$0xff]
      %v261 = vld [vmem:[%s193 + $0x1e0] sm:$0xff]
      %v262 = vld [vmem:[%s193 + $0x1e8] sm:$0xff]
      %v263 = vld [vmem:[%s193 + $0x1f0] sm:$0xff]
      %v264 = vld [vmem:[%s193 + $0x1f8] sm:$0xff]
      %v265 = vld [vmem:[%s193 + $0x200] sm:$0xff]
      %v266 = vld [vmem:[%s193 + $0x208] sm:$0xff]
      %v267 = vld [vmem:[%s193 + $0x210] sm:$0xff]
      %v268 = vld [vmem:[%s193 + $0x218] sm:$0xff]
      %v269 = vld [vmem:[%s193 + $0x220] sm:$0xff]
      %v270 = vld [vmem:[%s193 + $0x228] sm:$0xff]
      %v271 = vld [vmem:[%s193 + $0x230] sm:$0xff]
      %v272 = vld [vmem:[%s193 + $0x238] sm:$0xff]
      %v273 = vld [vmem:[%s193 + $0x240] sm:$0xff]
      %v274 = vld [vmem:[%s193 + $0x248] sm:$0xff]
      %v275 = vld [vmem:[%s193 + $0x250] sm:$0xff]
      %v276 = vld [vmem:[%s193 + $0x258] sm:$0xff]
      %v277 = vld [vmem:[%s193 + $0x260] sm:$0xff]
      %v278 = vld [vmem:[%s193 + $0x268] sm:$0xff]
      %v279 = vld [vmem:[%s193 + $0x270] sm:$0xff]
      %v280 = vld [vmem:[%s193 + $0x278] sm:$0xff]
      %v281 = vld [vmem:[%s193 + $0x280] sm:$0xff]
      %v282 = vld [vmem:[%s193 + $0x288] sm:$0xff]
      %v283 = vld [vmem:[%s193 + $0x290] sm:$0xff]
      %v284 = vld [vmem:[%s193 + $0x298] sm:$0xff]
      %v285 = vld [vmem:[%s193 + $0x2a0] sm:$0xff]
      %v286 = vld [vmem:[%s193 + $0x2a8] sm:$0xff]
      %v287 = vld [vmem:[%s193 + $0x2b0] sm:$0xff]
      %v288 = vld [vmem:[%s193 + $0x2b8] sm:$0xff]
      %v289 = vld [vmem:[%s193 + $0x2c0] sm:$0xff]
      %v290 = vld [vmem:[%s193 + $0x2c8] sm:$0xff]
      %v291 = vld [vmem:[%s193 + $0x2d0] sm:$0xff]
      %v292 = vld [vmem:[%s193 + $0x2d8] sm:$0xff]
      %v293 = vld [vmem:[%s193 + $0x2e0] sm:$0xff]
      %v294 = vld [vmem:[%s193 + $0x2e8] sm:$0xff]
      %v295 = vld [vmem:[%s193 + $0x2f0] sm:$0xff]
      %v296 = vld [vmem:[%s193 + $0x2f8] sm:$0xff]
      %v297 = vld [vmem:[%s193 + $0x300] sm:$0xff]
      %v298 = vld [vmem:[%s193 + $0x308] sm:$0xff]
      %v299 = vld [vmem:[%s193 + $0x310] sm:$0xff]
      %v300 = vld [vmem:[%s193 + $0x318] sm:$0xff]
      %v301 = vld [vmem:[%s193 + $0x320] sm:$0xff]
      %v302 = vld [vmem:[%s193 + $0x328] sm:$0xff]
      %v303 = vld [vmem:[%s193 + $0x330] sm:$0xff]
      %v304 = vld [vmem:[%s193 + $0x338] sm:$0xff]
      %v305 = vld [vmem:[%s193 + $0x340] sm:$0xff]
      %v306 = vld [vmem:[%s193 + $0x348] sm:$0xff]
      %v307 = vld [vmem:[%s193 + $0x350] sm:$0xff]
      %v308 = vld [vmem:[%s193 + $0x358] sm:$0xff]
      %v309 = vld [vmem:[%s193 + $0x360] sm:$0xff]
      %v310 = vld [vmem:[%s193 + $0x368] sm:$0xff]
      %v311 = vld [vmem:[%s193 + $0x370] sm:$0xff]
      %v312 = vld [vmem:[%s193 + $0x378] sm:$0xff]
      %v313 = vld [vmem:[%s193 + $0x380] sm:$0xff]
      %v314 = vld [vmem:[%s193 + $0x388] sm:$0xff]
      %v315 = vld [vmem:[%s193 + $0x390] sm:$0xff]
      %v316 = vld [vmem:[%s193 + $0x398] sm:$0xff]
      %v317 = vld [vmem:[%s193 + $0x3a0] sm:$0xff]
      %v318 = vld [vmem:[%s193 + $0x3a8] sm:$0xff]
      %v319 = vld [vmem:[%s193 + $0x3b0] sm:$0xff]
      %v320 = vld [vmem:[%s193 + $0x3b8] sm:$0xff]
      %v321 = vld [vmem:[%s193 + $0x3c0] sm:$0xff]
      %v322 = vld [vmem:[%s193 + $0x3c8] sm:$0xff]
      %v323 = vld [vmem:[%s193 + $0x3d0] sm:$0xff]
      %v324 = vld [vmem:[%s193 + $0x3d8] sm:$0xff]
      %v325 = vld [vmem:[%s193 + $0x3e0] sm:$0xff]
      %v326 = vld [vmem:[%s193 + $0x3e8] sm:$0xff]
      %v327 = vld [vmem:[%s193 + $0x3f0] sm:$0xff]
      %v328 = vld [vmem:[%s193 + $0x3f8] sm:$0xff]
      %v329 = vld [vmem:[%s193 + $0x400] sm:$0xff]
      %v330 = vld [vmem:[%s193 + $0x408] sm:$0xff]
      %v331 = vld [vmem:[%s193 + $0x410] sm:$0xff]
      %v332 = vld [vmem:[%s193 + $0x418] sm:$0xff]
      %v333 = vld [vmem:[%s193 + $0x420] sm:$0xff]
      %v334 = vld [vmem:[%s193 + $0x428] sm:$0xff]
      %v335 = vld [vmem:[%s193 + $0x430] sm:$0xff]
      %v336 = vld [vmem:[%s193 + $0x438] sm:$0xff]
      %v337 = vld [vmem:[%s193 + $0x440] sm:$0xff]
      %v338 = vld [vmem:[%s193 + $0x448] sm:$0xff]
      %v339 = vld [vmem:[%s193 + $0x450] sm:$0xff]
      %v340 = vld [vmem:[%s193 + $0x458] sm:$0xff]
      %v341 = vld [vmem:[%s193 + $0x460] sm:$0xff]
      %v342 = vld [vmem:[%s193 + $0x468] sm:$0xff]
      %v343 = vld [vmem:[%s193 + $0x470] sm:$0xff]
      %v344 = vld [vmem:[%s193 + $0x478] sm:$0xff]
      %v345 = vld [vmem:[%s193 + $0x480] sm:$0xff]
      %v346 = vld [vmem:[%s193 + $0x488] sm:$0xff]
      %v347 = vld [vmem:[%s193 + $0x490] sm:$0xff]
      %v348 = vld [vmem:[%s193 + $0x498] sm:$0xff]
      %v349 = vld [vmem:[%s193 + $0x4a0] sm:$0xff]
      %v350 = vld [vmem:[%s193 + $0x4a8] sm:$0xff]
      %v351 = vld [vmem:[%s193 + $0x4b0] sm:$0xff]
      %v352 = vld [vmem:[%s193 + $0x4b8] sm:$0xff]
      %v353 = vld [vmem:[%s193 + $0x4c0] sm:$0xff]
      %v354 = vld [vmem:[%s193 + $0x4c8] sm:$0xff]
      %v355 = vld [vmem:[%s193 + $0x4d0] sm:$0xff]
      %v356 = vld [vmem:[%s193 + $0x4d8] sm:$0xff]
      %v357 = vld [vmem:[%s193 + $0x4e0] sm:$0xff]
      %v358 = vld [vmem:[%s193 + $0x4e8] sm:$0xff]
      %v359 = vld [vmem:[%s193 + $0x4f0] sm:$0xff]
      %v360 = vld [vmem:[%s193 + $0x4f8] sm:$0xff]
      %v361 = vld [vmem:[%s193 + $0x500] sm:$0xff]
      %v362 = vld [vmem:[%s193 + $0x508] sm:$0xff]
      %v363 = vld [vmem:[%s193 + $0x510] sm:$0xff]
      %v364 = vld [vmem:[%s193 + $0x518] sm:$0xff]
      %v365 = vld [vmem:[%s193 + $0x520] sm:$0xff]
      %v366 = vld [vmem:[%s193 + $0x528] sm:$0xff]
      %v367 = vld [vmem:[%s193 + $0x530] sm:$0xff]
      %v368 = vld [vmem:[%s193 + $0x538] sm:$0xff]
      %v369 = vld [vmem:[%s193 + $0x540] sm:$0xff]
      %v370 = vld [vmem:[%s193 + $0x548] sm:$0xff]
      %v371 = vld [vmem:[%s193 + $0x550] sm:$0xff]
      %v372 = vld [vmem:[%s193 + $0x558] sm:$0xff]
      %v373 = vld [vmem:[%s193 + $0x560] sm:$0xff]
      %v374 = vld [vmem:[%s193 + $0x568] sm:$0xff]
      %v375 = vld [vmem:[%s193 + $0x570] sm:$0xff]
      %v376 = vld [vmem:[%s193 + $0x578] sm:$0xff]
      %v377 = vld [vmem:[%s193 + $0x580] sm:$0xff]
      %v378 = vld [vmem:[%s193 + $0x588] sm:$0xff]
      %v379 = vld [vmem:[%s193 + $0x590] sm:$0xff]
      %v380 = vld [vmem:[%s193 + $0x598] sm:$0xff]
      %v381 = vld [vmem:[%s193 + $0x5a0] sm:$0xff]
      %v382 = vld [vmem:[%s193 + $0x5a8] sm:$0xff]
      %v383 = vld [vmem:[%s193 + $0x5b0] sm:$0xff]
      %v384 = vld [vmem:[%s193 + $0x5b8] sm:$0xff]
      %v385 = vld [vmem:[%s193 + $0x5c0] sm:$0xff]
      %v386 = vld [vmem:[%s193 + $0x5c8] sm:$0xff]
      %v387 = vld [vmem:[%s193 + $0x5d0] sm:$0xff]
      %v388 = vld [vmem:[%s193 + $0x5d8] sm:$0xff]
      %v389 = vld [vmem:[%s193 + $0x5e0] sm:$0xff]
      %v390 = vld [vmem:[%s193 + $0x5e8] sm:$0xff]
      %v391 = vld [vmem:[%s193 + $0x5f0] sm:$0xff]
      %v392 = vld [vmem:[%s193 + $0x5f8] sm:$0xff]
      %v393 = vld [vmem:[%s193 + $0x600] sm:$0xff]
      %v394 = vld [vmem:[%s193 + $0x608] sm:$0xff]
      %v395 = vld [vmem:[%s193 + $0x610] sm:$0xff]
      %v396 = vld [vmem:[%s193 + $0x618] sm:$0xff]
      %v397 = vld [vmem:[%s193 + $0x620] sm:$0xff]
      %v398 = vld [vmem:[%s193 + $0x628] sm:$0xff]
      %v399 = vld [vmem:[%s193 + $0x630] sm:$0xff]
      %v400 = vld [vmem:[%s193 + $0x638] sm:$0xff]
      %v401 = vld [vmem:[%s193 + $0x640] sm:$0xff]
      %v402 = vld [vmem:[%s193 + $0x648] sm:$0xff]
      %v403 = vld [vmem:[%s193 + $0x650] sm:$0xff]
      %v404 = vld [vmem:[%s193 + $0x658] sm:$0xff]
      %v405 = vld [vmem:[%s193 + $0x660] sm:$0xff]
      %v406 = vld [vmem:[%s193 + $0x668] sm:$0xff]
      %v407 = vld [vmem:[%s193 + $0x670] sm:$0xff]
      %v408 = vld [vmem:[%s193 + $0x678] sm:$0xff]
      %v409 = vld [vmem:[%s193 + $0x680] sm:$0xff]
      %v410 = vld [vmem:[%s193 + $0x688] sm:$0xff]
      %v411 = vld [vmem:[%s193 + $0x690] sm:$0xff]
      %v412 = vld [vmem:[%s193 + $0x698] sm:$0xff]
      %v413 = vld [vmem:[%s193 + $0x6a0] sm:$0xff]
      %v414 = vld [vmem:[%s193 + $0x6a8] sm:$0xff]
      %v415 = vld [vmem:[%s193 + $0x6b0] sm:$0xff]
      %v416 = vld [vmem:[%s193 + $0x6b8] sm:$0xff]
      %v417 = vld [vmem:[%s193 + $0x6c0] sm:$0xff]
      %v418 = vld [vmem:[%s193 + $0x6c8] sm:$0xff]
      %v419 = vld [vmem:[%s193 + $0x6d0] sm:$0xff]
      %v420 = vld [vmem:[%s193 + $0x6d8] sm:$0xff]
      %v421 = vld [vmem:[%s193 + $0x6e0] sm:$0xff]
      %v422 = vld [vmem:[%s193 + $0x6e8] sm:$0xff]
      %v423 = vld [vmem:[%s193 + $0x6f0] sm:$0xff]
      %v424 = vld [vmem:[%s193 + $0x6f8] sm:$0xff]
      %v425 = vld [vmem:[%s193 + $0x700] sm:$0xff]
      %v426 = vld [vmem:[%s193 + $0x708] sm:$0xff]
      %v427 = vld [vmem:[%s193 + $0x710] sm:$0xff]
      %v428 = vld [vmem:[%s193 + $0x718] sm:$0xff]
      %v429 = vld [vmem:[%s193 + $0x720] sm:$0xff]
      %v430 = vld [vmem:[%s193 + $0x728] sm:$0xff]
      %v431 = vld [vmem:[%s193 + $0x730] sm:$0xff]
      %v432 = vld [vmem:[%s193 + $0x738] sm:$0xff]
      %v433 = vld [vmem:[%s193 + $0x740] sm:$0xff]
      %v434 = vld [vmem:[%s193 + $0x748] sm:$0xff]
      %v435 = vld [vmem:[%s193 + $0x750] sm:$0xff]
      %v436 = vld [vmem:[%s193 + $0x758] sm:$0xff]
      %v437 = vld [vmem:[%s193 + $0x760] sm:$0xff]
      %v438 = vld [vmem:[%s193 + $0x768] sm:$0xff]
      %v439 = vld [vmem:[%s193 + $0x770] sm:$0xff]
      %v440 = vld [vmem:[%s193 + $0x778] sm:$0xff]
      %v441 = vld [vmem:[%s193 + $0x780] sm:$0xff]
      %v442 = vld [vmem:[%s193 + $0x788] sm:$0xff]
      %v443 = vld [vmem:[%s193 + $0x790] sm:$0xff]
      %v444 = vld [vmem:[%s193 + $0x798] sm:$0xff]
      %v445 = vld [vmem:[%s193 + $0x7a0] sm:$0xff]
      %v446 = vld [vmem:[%s193 + $0x7a8] sm:$0xff]
      %v447 = vld [vmem:[%s193 + $0x7b0] sm:$0xff]
      %v448 = vld [vmem:[%s193 + $0x7b8] sm:$0xff]
      %v449 = vld [vmem:[%s193 + $0x7c0] sm:$0xff]
      %v450 = vld [vmem:[%s193 + $0x7c8] sm:$0xff]
      %v451 = vld [vmem:[%s193 + $0x7d0] sm:$0xff]
      %v452 = vld [vmem:[%s193 + $0x7d8] sm:$0xff]
      %v453 = vld [vmem:[%s193 + $0x7e0] sm:$0xff]
      %v454 = vld [vmem:[%s193 + $0x7e8] sm:$0xff]
      %v455 = vld [vmem:[%s193 + $0x7f0] sm:$0xff]
      %v456 = vld [vmem:[%s193 + $0x7f8] sm:$0xff]
      %v457 = vld [vmem:[%s193 + $0x800] sm:$0xff]
      %v458 = vld [vmem:[%s193 + $0x808] sm:$0xff]
      %v459 = vld [vmem:[%s193 + $0x810] sm:$0xff]
      %v460 = vld [vmem:[%s193 + $0x818] sm:$0xff]
      %v461 = vld [vmem:[%s193 + $0x820] sm:$0xff]
      %v462 = vld [vmem:[%s193 + $0x828] sm:$0xff]
      %v463 = vld [vmem:[%s193 + $0x830] sm:$0xff]
      %v464 = vld [vmem:[%s193 + $0x838] sm:$0xff]
      %v465 = vld [vmem:[%s193 + $0x840] sm:$0xff]
      %v466 = vld [vmem:[%s193 + $0x848] sm:$0xff]
      %v467 = vld [vmem:[%s193 + $0x850] sm:$0xff]
      %v468 = vld [vmem:[%s193 + $0x858] sm:$0xff]
      %v469 = vld [vmem:[%s193 + $0x860] sm:$0xff]
      %v470 = vld [vmem:[%s193 + $0x868] sm:$0xff]
      %v471 = vld [vmem:[%s193 + $0x870] sm:$0xff]
      %v472 = vld [vmem:[%s193 + $0x878] sm:$0xff]
      %v473 = vld [vmem:[%s193 + $0x880] sm:$0xff]
      %v474 = vld [vmem:[%s193 + $0x888] sm:$0xff]
      %v475 = vld [vmem:[%s193 + $0x890] sm:$0xff]
      %v476 = vld [vmem:[%s193 + $0x898] sm:$0xff]
      %v477 = vld [vmem:[%s193 + $0x8a0] sm:$0xff]
      %v478 = vld [vmem:[%s193 + $0x8a8] sm:$0xff]
      %v479 = vld [vmem:[%s193 + $0x8b0] sm:$0xff]
      %v480 = vld [vmem:[%s193 + $0x8b8] sm:$0xff]
      %v481 = vld [vmem:[%s193 + $0x8c0] sm:$0xff]
      %v482 = vld [vmem:[%s193 + $0x8c8] sm:$0xff]
      %v483 = vld [vmem:[%s193 + $0x8d0] sm:$0xff]
      %v484 = vld [vmem:[%s193 + $0x8d8] sm:$0xff]
      %v485 = vld [vmem:[%s193 + $0x8e0] sm:$0xff]
      %v486 = vld [vmem:[%s193 + $0x8e8] sm:$0xff]
      %v487 = vld [vmem:[%s193 + $0x8f0] sm:$0xff]
      %v488 = vld [vmem:[%s193 + $0x8f8] sm:$0xff]
      %v489 = vld [vmem:[%s193 + $0x900] sm:$0xff]
      %v490 = vld [vmem:[%s193 + $0x908] sm:$0xff]
      %v491 = vld [vmem:[%s193 + $0x910] sm:$0xff]
      %v492 = vld [vmem:[%s193 + $0x918] sm:$0xff]
      %v493 = vld [vmem:[%s193 + $0x920] sm:$0xff]
      %v494 = vld [vmem:[%s193 + $0x928] sm:$0xff]
      %v495 = vld [vmem:[%s193 + $0x930] sm:$0xff]
      %v496 = vld [vmem:[%s193 + $0x938] sm:$0xff]
      %v497 = vld [vmem:[%s193 + $0x940] sm:$0xff]
      %v498 = vld [vmem:[%s193 + $0x948] sm:$0xff]
      %v499 = vld [vmem:[%s193 + $0x950] sm:$0xff]
      %v500 = vld [vmem:[%s193 + $0x958] sm:$0xff]
      %v501 = vld [vmem:[%s1] sm:$0xff]
      %v502 = vld [vmem:[%s1 + $0x8] sm:$0xff]
      %v503 = vld [vmem:[%s1 + $0x10] sm:$0xff]
      %v504 = vld [vmem:[%s1 + $0x18] sm:$0xff]
      %v505 = vld [vmem:[%s1 + $0x20] sm:$0xff]
      %v506 = vld [vmem:[%s1 + $0x28] sm:$0xff]
      %v507 = vld [vmem:[%s1 + $0x30] sm:$0xff]
      %v508 = vld [vmem:[%s1 + $0x38] sm:$0xff]
      %v509 = vld [vmem:[%s1 + $0x40] sm:$0xff]
      %v510 = vld [vmem:[%s1 + $0x48] sm:$0x7]
      %vm511 = vcmask 613376
      %v513 = vsel %vm511, %v201, 0
      %v516 = vsel %vm511, %v202, 0
      %v519 = vsel %vm511, %v203, 0
      %v522 = vsel %vm511, %v204, 0
      %v525 = vsel %vm511, %v205, 0
      %v528 = vsel %vm511, %v206, 0
      %v531 = vsel %vm511, %v207, 0
      %v534 = vsel %vm511, %v208, 0
      %v537 = vsel %vm511, %v209, 0
      %v540 = vsel %vm511, %v210, 0
      %v543 = vsel %vm511, %v211, 0
      %v546 = vsel %vm511, %v212, 0
      %v549 = vsel %vm511, %v213, 0
      %v552 = vsel %vm511, %v214, 0
      %v555 = vsel %vm511, %v215, 0
      %v558 = vsel %vm511, %v216, 0
      %v561 = vsel %vm511, %v217, 0
      %v564 = vsel %vm511, %v218, 0
      %v567 = vsel %vm511, %v219, 0
      %v570 = vsel %vm511, %v220, 0
      %v573 = vsel %vm511, %v221, 0
      %v576 = vsel %vm511, %v222, 0
      %v579 = vsel %vm511, %v223, 0
      %v582 = vsel %vm511, %v224, 0
      %v585 = vsel %vm511, %v225, 0
      %v588 = vsel %vm511, %v226, 0
      %v591 = vsel %vm511, %v227, 0
      %v594 = vsel %vm511, %v228, 0
      %v597 = vsel %vm511, %v229, 0
      %v600 = vsel %vm511, %v230, 0
      %v603 = vsel %vm511, %v231, 0
      %v606 = vsel %vm511, %v232, 0
      %v609 = vsel %vm511, %v233, 0
      %v612 = vsel %vm511, %v234, 0
      %v615 = vsel %vm511, %v235, 0
      %v618 = vsel %vm511, %v236, 0
      %v621 = vsel %vm511, %v237, 0
      %v624 = vsel %vm511, %v238, 0
      %v627 = vsel %vm511, %v239, 0
      %v630 = vsel %vm511, %v240, 0
      %v633 = vsel %vm511, %v241, 0
      %v636 = vsel %vm511, %v242, 0
      %v639 = vsel %vm511, %v243, 0
      %v642 = vsel %vm511, %v244, 0
      %v645 = vsel %vm511, %v245, 0
      %v648 = vsel %vm511, %v246, 0
      %v651 = vsel %vm511, %v247, 0
      %v654 = vsel %vm511, %v248, 0
      %v657 = vsel %vm511, %v249, 0
      %v660 = vsel %vm511, %v250, 0
      %v663 = vsel %vm511, %v251, 0
      %v666 = vsel %vm511, %v252, 0
      %v669 = vsel %vm511, %v253, 0
      %v672 = vsel %vm511, %v254, 0
      %v675 = vsel %vm511, %v255, 0
      %v678 = vsel %vm511, %v256, 0
      %v681 = vsel %vm511, %v257, 0
      %v684 = vsel %vm511, %v258, 0
      %v687 = vsel %vm511, %v259, 0
      %v690 = vsel %vm511, %v260, 0
      %v693 = vsel %vm511, %v261, 0
      %v696 = vsel %vm511, %v262, 0
      %v699 = vsel %vm511, %v263, 0
      %v702 = vsel %vm511, %v264, 0
      %v705 = vsel %vm511, %v265, 0
      %v708 = vsel %vm511, %v266, 0
      %v711 = vsel %vm511, %v267, 0
      %v714 = vsel %vm511, %v268, 0
      %v717 = vsel %vm511, %v269, 0
      %v720 = vsel %vm511, %v270, 0
      %v723 = vsel %vm511, %v271, 0
      %v726 = vsel %vm511, %v272, 0
      %v729 = vsel %vm511, %v273, 0
      %v732 = vsel %vm511, %v274, 0
      %v735 = vsel %vm511, %v275, 0
      %v738 = vsel %vm511, %v276, 0
      %v741 = vsel %vm511, %v277, 0
      %v744 = vsel %vm511, %v278, 0
      %v747 = vsel %vm511, %v279, 0
      %v750 = vsel %vm511, %v280, 0
      %v753 = vsel %vm511, %v281, 0
      %v756 = vsel %vm511, %v282, 0
      %v759 = vsel %vm511, %v283, 0
      %v762 = vsel %vm511, %v284, 0
      %v765 = vsel %vm511, %v285, 0
      %v768 = vsel %vm511, %v286, 0
      %v771 = vsel %vm511, %v287, 0
      %v774 = vsel %vm511, %v288, 0
      %v777 = vsel %vm511, %v289, 0
      %v780 = vsel %vm511, %v290, 0
      %v783 = vsel %vm511, %v291, 0
      %v786 = vsel %vm511, %v292, 0
      %v789 = vsel %vm511, %v293, 0
      %v792 = vsel %vm511, %v294, 0
      %v795 = vsel %vm511, %v295, 0
      %v798 = vsel %vm511, %v296, 0
      %v801 = vsel %vm511, %v297, 0
      %v804 = vsel %vm511, %v298, 0
      %v807 = vsel %vm511, %v299, 0
      %v810 = vsel %vm511, %v300, 0
      %v813 = vsel %vm511, %v301, 0
      %v816 = vsel %vm511, %v302, 0
      %v819 = vsel %vm511, %v303, 0
      %v822 = vsel %vm511, %v304, 0
      %v825 = vsel %vm511, %v305, 0
      %v828 = vsel %vm511, %v306, 0
      %v831 = vsel %vm511, %v307, 0
      %v834 = vsel %vm511, %v308, 0
      %v837 = vsel %vm511, %v309, 0
      %v840 = vsel %vm511, %v310, 0
      %v843 = vsel %vm511, %v311, 0
      %v846 = vsel %vm511, %v312, 0
      %v849 = vsel %vm511, %v313, 0
      %v852 = vsel %vm511, %v314, 0
      %v855 = vsel %vm511, %v315, 0
      %v858 = vsel %vm511, %v316, 0
      %v861 = vsel %vm511, %v317, 0
      %v864 = vsel %vm511, %v318, 0
      %v867 = vsel %vm511, %v319, 0
      %v870 = vsel %vm511, %v320, 0
      %v873 = vsel %vm511, %v321, 0
      %v876 = vsel %vm511, %v322, 0
      %v879 = vsel %vm511, %v323, 0
      %v882 = vsel %vm511, %v324, 0
      %v885 = vsel %vm511, %v325, 0
      %v888 = vsel %vm511, %v326, 0
      %v891 = vsel %vm511, %v327, 0
      %v894 = vsel %vm511, %v328, 0
      %v897 = vsel %vm511, %v329, 0
      %v900 = vsel %vm511, %v330, 0
      %v903 = vsel %vm511, %v331, 0
      %v906 = vsel %vm511, %v332, 0
      %v909 = vsel %vm511, %v333, 0
      %v912 = vsel %vm511, %v334, 0
      %v915 = vsel %vm511, %v335, 0
      %v918 = vsel %vm511, %v336, 0
      %v921 = vsel %vm511, %v337, 0
      %v924 = vsel %vm511, %v338, 0
      %v927 = vsel %vm511, %v339, 0
      %v930 = vsel %vm511, %v340, 0
      %v933 = vsel %vm511, %v341, 0
      %v936 = vsel %vm511, %v342, 0
      %v939 = vsel %vm511, %v343, 0
      %v942 = vsel %vm511, %v344, 0
      %v945 = vsel %vm511, %v345, 0
      %v948 = vsel %vm511, %v346, 0
      %v951 = vsel %vm511, %v347, 0
      %v954 = vsel %vm511, %v348, 0
      %v957 = vsel %vm511, %v349, 0
      %v960 = vsel %vm511, %v350, 0
      %v963 = vsel %vm511, %v351, 0
      %v966 = vsel %vm511, %v352, 0
      %v969 = vsel %vm511, %v353, 0
      %v972 = vsel %vm511, %v354, 0
      %v975 = vsel %vm511, %v355, 0
      %v978 = vsel %vm511, %v356, 0
      %v981 = vsel %vm511, %v357, 0
      %v984 = vsel %vm511, %v358, 0
      %v987 = vsel %vm511, %v359, 0
      %v990 = vsel %vm511, %v360, 0
      %v993 = vsel %vm511, %v361, 0
      %v996 = vsel %vm511, %v362, 0
      %v999 = vsel %vm511, %v363, 0
      %v1002 = vsel %vm511, %v364, 0
      %v1005 = vsel %vm511, %v365, 0
      %v1008 = vsel %vm511, %v366, 0
      %v1011 = vsel %vm511, %v367, 0
      %v1014 = vsel %vm511, %v368, 0
      %v1017 = vsel %vm511, %v369, 0
      %v1020 = vsel %vm511, %v370, 0
      %v1023 = vsel %vm511, %v371, 0
      %v1026 = vsel %vm511, %v372, 0
      %v1029 = vsel %vm511, %v373, 0
      %v1032 = vsel %vm511, %v374, 0
      %v1035 = vsel %vm511, %v375, 0
      %v1038 = vsel %vm511, %v376, 0
      %v1041 = vsel %vm511, %v377, 0
      %v1044 = vsel %vm511, %v378, 0
      %v1047 = vsel %vm511, %v379, 0
      %v1050 = vsel %vm511, %v380, 0
      %v1053 = vsel %vm511, %v381, 0
      %v1056 = vsel %vm511, %v382, 0
      %v1059 = vsel %vm511, %v383, 0
      %v1062 = vsel %vm511, %v384, 0
      %v1065 = vsel %vm511, %v385, 0
      %v1068 = vsel %vm511, %v386, 0
      %v1071 = vsel %vm511, %v387, 0
      %v1074 = vsel %vm511, %v388, 0
      %v1077 = vsel %vm511, %v389, 0
      %v1080 = vsel %vm511, %v390, 0
      %v1083 = vsel %vm511, %v391, 0
      %v1086 = vsel %vm511, %v392, 0
      %v1089 = vsel %vm511, %v393, 0
      %v1092 = vsel %vm511, %v394, 0
      %v1095 = vsel %vm511, %v395, 0
      %v1098 = vsel %vm511, %v396, 0
      %v1101 = vsel %vm511, %v397, 0
      %v1104 = vsel %vm511, %v398, 0
      %v1107 = vsel %vm511, %v399, 0
      %v1110 = vsel %vm511, %v400, 0
      %v1113 = vsel %vm511, %v401, 0
      %v1116 = vsel %vm511, %v402, 0
      %v1119 = vsel %vm511, %v403, 0
      %v1122 = vsel %vm511, %v404, 0
      %v1125 = vsel %vm511, %v405, 0
      %v1128 = vsel %vm511, %v406, 0
      %v1131 = vsel %vm511, %v407, 0
      %v1134 = vsel %vm511, %v408, 0
      %v1137 = vsel %vm511, %v409, 0
      %v1140 = vsel %vm511, %v410, 0
      %v1143 = vsel %vm511, %v411, 0
      %v1146 = vsel %vm511, %v412, 0
      %v1149 = vsel %vm511, %v413, 0
      %v1152 = vsel %vm511, %v414, 0
      %v1155 = vsel %vm511, %v415, 0
      %v1158 = vsel %vm511, %v416, 0
      %v1161 = vsel %vm511, %v417, 0
      %v1164 = vsel %vm511, %v418, 0
      %v1167 = vsel %vm511, %v419, 0
      %v1170 = vsel %vm511, %v420, 0
      %v1173 = vsel %vm511, %v421, 0
      %v1176 = vsel %vm511, %v422, 0
      %v1179 = vsel %vm511, %v423, 0
      %v1182 = vsel %vm511, %v424, 0
      %v1185 = vsel %vm511, %v425, 0
      %v1188 = vsel %vm511, %v426, 0
      %v1191 = vsel %vm511, %v427, 0
      %v1194 = vsel %vm511, %v428, 0
      %v1197 = vsel %vm511, %v429, 0
      %v1200 = vsel %vm511, %v430, 0
      %v1203 = vsel %vm511, %v431, 0
      %v1206 = vsel %vm511, %v432, 0
      %v1209 = vsel %vm511, %v433, 0
      %v1212 = vsel %vm511, %v434, 0
      %v1215 = vsel %vm511, %v435, 0
      %v1218 = vsel %vm511, %v436, 0
      %v1221 = vsel %vm511, %v437, 0
      %v1224 = vsel %vm511, %v438, 0
      %v1227 = vsel %vm511, %v439, 0
      %v1230 = vsel %vm511, %v440, 0
      %v1233 = vsel %vm511, %v441, 0
      %v1236 = vsel %vm511, %v442, 0
      %v1239 = vsel %vm511, %v443, 0
      %v1242 = vsel %vm511, %v444, 0
      %v1245 = vsel %vm511, %v445, 0
      %v1248 = vsel %vm511, %v446, 0
      %v1251 = vsel %vm511, %v447, 0
      %v1254 = vsel %vm511, %v448, 0
      %v1257 = vsel %vm511, %v449, 0
      %v1260 = vsel %vm511, %v450, 0
      %v1263 = vsel %vm511, %v451, 0
      %v1266 = vsel %vm511, %v452, 0
      %v1269 = vsel %vm511, %v453, 0
      %v1272 = vsel %vm511, %v454, 0
      %v1275 = vsel %vm511, %v455, 0
      %v1278 = vsel %vm511, %v456, 0
      %v1281 = vsel %vm511, %v457, 0
      %v1284 = vsel %vm511, %v458, 0
      %v1287 = vsel %vm511, %v459, 0
      %v1290 = vsel %vm511, %v460, 0
      %v1293 = vsel %vm511, %v461, 0
      %v1296 = vsel %vm511, %v462, 0
      %v1299 = vsel %vm511, %v463, 0
      %v1302 = vsel %vm511, %v464, 0
      %v1305 = vsel %vm511, %v465, 0
      %v1308 = vsel %vm511, %v466, 0
      %v1311 = vsel %vm511, %v467, 0
      %v1314 = vsel %vm511, %v468, 0
      %v1317 = vsel %vm511, %v469, 0
      %v1320 = vsel %vm511, %v470, 0
      %v1323 = vsel %vm511, %v471, 0
      %v1326 = vsel %vm511, %v472, 0
      %v1329 = vsel %vm511, %v473, 0
      %v1332 = vsel %vm511, %v474, 0
      %v1335 = vsel %vm511, %v475, 0
      %v1338 = vsel %vm511, %v476, 0
      %v1341 = vsel %vm511, %v477, 0
      %v1344 = vsel %vm511, %v478, 0
      %v1347 = vsel %vm511, %v479, 0
      %v1350 = vsel %vm511, %v480, 0
      %v1353 = vsel %vm511, %v481, 0
      %v1356 = vsel %vm511, %v482, 0
      %v1359 = vsel %vm511, %v483, 0
      %v1362 = vsel %vm511, %v484, 0
      %v1365 = vsel %vm511, %v485, 0
      %v1368 = vsel %vm511, %v486, 0
      %v1371 = vsel %vm511, %v487, 0
      %v1374 = vsel %vm511, %v488, 0
      %v1377 = vsel %vm511, %v489, 0
      %v1380 = vsel %vm511, %v490, 0
      %v1383 = vsel %vm511, %v491, 0
      %v1386 = vsel %vm511, %v492, 0
      %v1389 = vsel %vm511, %v493, 0
      %v1392 = vsel %vm511, %v494, 0
      %v1395 = vsel %vm511, %v495, 0
      %v1398 = vsel %vm511, %v496, 0
      %v1401 = vsel %vm511, %v497, 0
      %v1404 = vsel %vm511, %v498, 0
      %v1407 = vsel %vm511, %v499, 0
      %v1410 = vsel %vm511, %v500, 0
      %vm1412 = vcmask 1042432
      %v1414 = vsel %vm1412, %v510, 0
      %1416 = vmatprep.subr.mxu0 0.0
      %1417 = vmatpush1.msra.mxu0 0.0
      %1418 = vmatprep.subr.mxu0 0.0
      %1419 = vmatpush1.msra.mxu0 0.0
      %1420 = vmatprep.subr.mxu0 0.0
      %1421 = vmatpush1.msra.mxu0 0.0
      %1422 = vmatprep.subr.mxu0 0.0
      %1423 = vmatpush1.msra.mxu0 0.0
      %1424 = vmatprep.subr.mxu0 0.0
      %1425 = vmatpush1.msra.mxu0 0.0
      %1426 = vmatprep.subr.mxu0 0.0
      %1427 = vmatpush1.msra.mxu0 0.0
      %1428 = vmatprep.subr.mxu0 0.0
      %1429 = vmatpush1.msra.mxu0 %v1414
      %1430 = vmatprep.subr.mxu0 0.0
      %1431 = vmatpush1.msra.mxu0 %v509
      %1432 = vmatprep.subr.mxu0 0.0
      %1433 = vmatpush1.msra.mxu0 %v508
      %1434 = vmatprep.subr.mxu0 0.0
      %1435 = vmatpush1.msra.mxu0 %v507
      %1436 = vmatprep.subr.mxu0 0.0
      %1437 = vmatpush1.msra.mxu0 %v506
      %1438 = vmatprep.subr.mxu0 0.0
      %1439 = vmatpush1.msra.mxu0 %v505
      %1440 = vmatprep.subr.mxu0 0.0
      %1441 = vmatpush1.msra.mxu0 %v504
      %1442 = vmatprep.subr.mxu0 0.0
      %1443 = vmatpush1.msra.mxu0 %v503
      %1444 = vmatprep.subr.mxu0 0.0
      %1445 = vmatpush1.msra.mxu0 %v502
      %1446 = vmatprep.subr.mxu0 0.0
      %1447 = vmatpush1.msra.mxu0 %v501
      %1448 = vmatprep.subr.mxu0 0.0
      %1449 = vmatpush2.msra.mxu0 0.0
      %1450 = vmatprep.subr.mxu0 0.0
      %1451 = vmatpush2.msra.mxu0 0.0
      %1452 = vmatprep.subr.mxu0 0.0
      %1453 = vmatpush2.msra.mxu0 0.0
      %1454 = vmatprep.subr.mxu0 0.0
      %1455 = vmatpush2.msra.mxu0 0.0
      %1456 = vmatprep.subr.mxu0 0.0
      %1457 = vmatpush2.msra.mxu0 0.0
      %1458 = vmatprep.subr.mxu0 0.0
      %1459 = vmatpush2.msra.mxu0 0.0
      %1460 = vmatprep.subr.mxu0 0.0
      %1461 = vmatpush2.msra.mxu0 0.0
      %1462 = vmatprep.subr.mxu0 0.0
      %1463 = vmatpush2.msra.mxu0 0.0
      %1464 = vmatprep.subr.mxu0 0.0
      %1465 = vmatpush2.msra.mxu0 0.0
      %1466 = vmatprep.subr.mxu0 0.0
      %1467 = vmatpush2.msra.mxu0 0.0
      %1468 = vmatprep.subr.mxu0 0.0
      %1469 = vmatpush2.msra.mxu0 0.0
      %1470 = vmatprep.subr.mxu0 0.0
      %1471 = vmatpush2.msra.mxu0 0.0
      %1472 = vmatprep.subr.mxu0 0.0
      %1473 = vmatpush2.msra.mxu0 0.0
      %1474 = vmatprep.subr.mxu0 0.0
      %1475 = vmatpush2.msra.mxu0 0.0
      %1476 = vmatprep.subr.mxu0 0.0
      %1477 = vmatpush2.msra.mxu0 0.0
      %1478 = vmatprep.subr.mxu0 0.0
      %1479 = vmatpush2.msra.mxu0 0.0
      %1480 = vmatprep.mubr.f32.mxu0 0.0
      %1481 = vmatmul.mubr.f32.gmra.mxu0 %v513
      %v1482 = vpop.f32.mrf.mxu0
      %v1483 = vadd.f32 0.0, %v1482
      %v1484 = vpop.f32.mrf.mxu0
      %1485 = vmatprep.mubr.f32.mxu0 0.0
      %1486 = vmatmul.mubr.f32.gmra.mxu0 %v516
      %v1487 = vpop.f32.mrf.mxu0
      %v1488 = vadd.f32 0.0, %v1487
      %v1489 = vpop.f32.mrf.mxu0
      %1490 = vmatprep.mubr.f32.mxu0 0.0
      %1491 = vmatmul.mubr.f32.gmra.mxu0 %v519
      %v1492 = vpop.f32.mrf.mxu0
      %v1493 = vadd.f32 0.0, %v1492
      %v1494 = vpop.f32.mrf.mxu0
      %1495 = vmatprep.mubr.f32.mxu0 0.0
      %1496 = vmatmul.mubr.f32.gmra.mxu0 %v522
      %v1497 = vpop.f32.mrf.mxu0
      %v1498 = vadd.f32 0.0, %v1497
      %v1499 = vpop.f32.mrf.mxu0
      %1500 = vmatprep.mubr.f32.mxu0 0.0
      %1501 = vmatmul.mubr.f32.gmra.mxu0 %v525
      %v1502 = vpop.f32.mrf.mxu0
      %v1503 = vadd.f32 0.0, %v1502
      %v1504 = vpop.f32.mrf.mxu0
      %1505 = vmatprep.mubr.f32.mxu0 0.0
      %1506 = vmatmul.mubr.f32.gmra.mxu0 %v528
      %v1507 = vpop.f32.mrf.mxu0
      %v1508 = vadd.f32 0.0, %v1507
      %v1509 = vpop.f32.mrf.mxu0
      %1510 = vmatprep.mubr.f32.mxu0 0.0
      %1511 = vmatmul.mubr.f32.gmra.mxu0 %v531
      %v1512 = vpop.f32.mrf.mxu0
      %v1513 = vadd.f32 0.0, %v1512
      %v1514 = vpop.f32.mrf.mxu0
      %1515 = vmatprep.mubr.f32.mxu0 0.0
      %1516 = vmatmul.mubr.f32.gmra.mxu0 %v534
      %v1517 = vpop.f32.mrf.mxu0
      %v1518 = vadd.f32 0.0, %v1517
      %v1519 = vpop.f32.mrf.mxu0
      %1520 = vmatprep.mubr.f32.mxu0 0.0
      %1521 = vmatmul.mubr.f32.gmra.mxu0 %v537
      %v1522 = vpop.f32.mrf.mxu0
      %v1523 = vadd.f32 0.0, %v1522
      %v1524 = vpop.f32.mrf.mxu0
      %1525 = vmatprep.mubr.f32.mxu0 0.0
      %1526 = vmatmul.mubr.f32.gmra.mxu0 %v540
      %v1527 = vpop.f32.mrf.mxu0
      %v1528 = vadd.f32 0.0, %v1527
      %v1529 = vpop.f32.mrf.mxu0
      %1530 = vmatprep.mubr.f32.mxu0 0.0
      %1531 = vmatmul.mubr.f32.gmra.mxu0 %v543
      %v1532 = vpop.f32.mrf.mxu0
      %v1533 = vadd.f32 0.0, %v1532
      %v1534 = vpop.f32.mrf.mxu0
      %1535 = vmatprep.mubr.f32.mxu0 0.0
      %1536 = vmatmul.mubr.f32.gmra.mxu0 %v546
      %v1537 = vpop.f32.mrf.mxu0
      %v1538 = vadd.f32 0.0, %v1537
      %v1539 = vpop.f32.mrf.mxu0
      %1540 = vmatprep.mubr.f32.mxu0 0.0
      %1541 = vmatmul.mubr.f32.gmra.mxu0 %v549
      %v1542 = vpop.f32.mrf.mxu0
      %v1543 = vadd.f32 0.0, %v1542
      %v1544 = vpop.f32.mrf.mxu0
      %1545 = vmatprep.mubr.f32.mxu0 0.0
      %1546 = vmatmul.mubr.f32.gmra.mxu0 %v552
      %v1547 = vpop.f32.mrf.mxu0
      %v1548 = vadd.f32 0.0, %v1547
      %v1549 = vpop.f32.mrf.mxu0
      %1550 = vmatprep.mubr.f32.mxu0 0.0
      %1551 = vmatmul.mubr.f32.gmra.mxu0 %v555
      %v1552 = vpop.f32.mrf.mxu0
      %v1553 = vadd.f32 0.0, %v1552
      %v1554 = vpop.f32.mrf.mxu0
      %1555 = vmatprep.mubr.f32.mxu0 0.0
      %1556 = vmatmul.mubr.f32.gmra.mxu0 %v558
      %v1557 = vpop.f32.mrf.mxu0
      %v1558 = vadd.f32 0.0, %v1557
      %v1559 = vpop.f32.mrf.mxu0
      %1560 = vmatprep.mubr.f32.mxu0 0.0
      %1561 = vmatmul.mubr.f32.gmra.mxu0 %v561
      %v1562 = vpop.f32.mrf.mxu0
      %v1563 = vadd.f32 0.0, %v1562
      %v1564 = vpop.f32.mrf.mxu0
      %1565 = vmatprep.mubr.f32.mxu0 0.0
      %1566 = vmatmul.mubr.f32.gmra.mxu0 %v564
      %v1567 = vpop.f32.mrf.mxu0
      %v1568 = vadd.f32 0.0, %v1567
      %v1569 = vpop.f32.mrf.mxu0
      %1570 = vmatprep.mubr.f32.mxu0 0.0
      %1571 = vmatmul.mubr.f32.gmra.mxu0 %v567
      %v1572 = vpop.f32.mrf.mxu0
      %v1573 = vadd.f32 0.0, %v1572
      %v1574 = vpop.f32.mrf.mxu0
      %1575 = vmatprep.mubr.f32.mxu0 0.0
      %1576 = vmatmul.mubr.f32.gmra.mxu0 %v570
      %v1577 = vpop.f32.mrf.mxu0
      %v1578 = vadd.f32 0.0, %v1577
      %v1579 = vpop.f32.mrf.mxu0
      %1580 = vmatprep.mubr.f32.mxu0 0.0
      %1581 = vmatmul.mubr.f32.gmra.mxu0 %v573
      %v1582 = vpop.f32.mrf.mxu0
      %v1583 = vadd.f32 0.0, %v1582
      %v1584 = vpop.f32.mrf.mxu0
      %1585 = vmatprep.mubr.f32.mxu0 0.0
      %1586 = vmatmul.mubr.f32.gmra.mxu0 %v576
      %v1587 = vpop.f32.mrf.mxu0
      %v1588 = vadd.f32 0.0, %v1587
      %v1589 = vpop.f32.mrf.mxu0
      %1590 = vmatprep.mubr.f32.mxu0 0.0
      %1591 = vmatmul.mubr.f32.gmra.mxu0 %v579
      %v1592 = vpop.f32.mrf.mxu0
      %v1593 = vadd.f32 0.0, %v1592
      %v1594 = vpop.f32.mrf.mxu0
      %1595 = vmatprep.mubr.f32.mxu0 0.0
      %1596 = vmatmul.mubr.f32.gmra.mxu0 %v582
      %v1597 = vpop.f32.mrf.mxu0
      %v1598 = vadd.f32 0.0, %v1597
      %v1599 = vpop.f32.mrf.mxu0
      %1600 = vmatprep.mubr.f32.mxu0 0.0
      %1601 = vmatmul.mubr.f32.gmra.mxu0 %v585
      %v1602 = vpop.f32.mrf.mxu0
      %v1603 = vadd.f32 0.0, %v1602
      %v1604 = vpop.f32.mrf.mxu0
      %1605 = vmatprep.mubr.f32.mxu0 0.0
      %1606 = vmatmul.mubr.f32.gmra.mxu0 %v588
      %v1607 = vpop.f32.mrf.mxu0
      %v1608 = vadd.f32 0.0, %v1607
      %v1609 = vpop.f32.mrf.mxu0
      %1610 = vmatprep.mubr.f32.mxu0 0.0
      %1611 = vmatmul.mubr.f32.gmra.mxu0 %v591
      %v1612 = vpop.f32.mrf.mxu0
      %v1613 = vadd.f32 0.0, %v1612
      %v1614 = vpop.f32.mrf.mxu0
      %1615 = vmatprep.mubr.f32.mxu0 0.0
      %1616 = vmatmul.mubr.f32.gmra.mxu0 %v594
      %v1617 = vpop.f32.mrf.mxu0
      %v1618 = vadd.f32 0.0, %v1617
      %v1619 = vpop.f32.mrf.mxu0
      %1620 = vmatprep.mubr.f32.mxu0 0.0
      %1621 = vmatmul.mubr.f32.gmra.mxu0 %v597
      %v1622 = vpop.f32.mrf.mxu0
      %v1623 = vadd.f32 0.0, %v1622
      %v1624 = vpop.f32.mrf.mxu0
      %1625 = vmatprep.mubr.f32.mxu0 0.0
      %1626 = vmatmul.mubr.f32.gmra.mxu0 %v600
      %v1627 = vpop.f32.mrf.mxu0
      %v1628 = vadd.f32 0.0, %v1627
      %v1629 = vpop.f32.mrf.mxu0
      %1630 = vmatprep.mubr.f32.mxu0 0.0
      %1631 = vmatmul.mubr.f32.gmra.mxu0 %v603
      %v1632 = vpop.f32.mrf.mxu0
      %v1633 = vadd.f32 0.0, %v1632
      %v1634 = vpop.f32.mrf.mxu0
      %1635 = vmatprep.mubr.f32.mxu0 0.0
      %1636 = vmatmul.mubr.f32.gmra.mxu0 %v606
      %v1637 = vpop.f32.mrf.mxu0
      %v1638 = vadd.f32 0.0, %v1637
      %v1639 = vpop.f32.mrf.mxu0
      %1640 = vmatprep.mubr.f32.mxu0 0.0
      %1641 = vmatmul.mubr.f32.gmra.mxu0 %v609
      %v1642 = vpop.f32.mrf.mxu0
      %v1643 = vadd.f32 0.0, %v1642
      %v1644 = vpop.f32.mrf.mxu0
      %1645 = vmatprep.mubr.f32.mxu0 0.0
      %1646 = vmatmul.mubr.f32.gmra.mxu0 %v612
      %v1647 = vpop.f32.mrf.mxu0
      %v1648 = vadd.f32 0.0, %v1647
      %v1649 = vpop.f32.mrf.mxu0
      %1650 = vmatprep.mubr.f32.mxu0 0.0
      %1651 = vmatmul.mubr.f32.gmra.mxu0 %v615
      %v1652 = vpop.f32.mrf.mxu0
      %v1653 = vadd.f32 0.0, %v1652
      %v1654 = vpop.f32.mrf.mxu0
      %1655 = vmatprep.mubr.f32.mxu0 0.0
      %1656 = vmatmul.mubr.f32.gmra.mxu0 %v618
      %v1657 = vpop.f32.mrf.mxu0
      %v1658 = vadd.f32 0.0, %v1657
      %v1659 = vpop.f32.mrf.mxu0
      %1660 = vmatprep.mubr.f32.mxu0 0.0
      %1661 = vmatmul.mubr.f32.gmra.mxu0 %v621
      %v1662 = vpop.f32.mrf.mxu0
      %v1663 = vadd.f32 0.0, %v1662
      %v1664 = vpop.f32.mrf.mxu0
      %1665 = vmatprep.mubr.f32.mxu0 0.0
      %1666 = vmatmul.mubr.f32.gmra.mxu0 %v624
      %v1667 = vpop.f32.mrf.mxu0
      %v1668 = vadd.f32 0.0, %v1667
      %v1669 = vpop.f32.mrf.mxu0
      %1670 = vmatprep.mubr.f32.mxu0 0.0
      %1671 = vmatmul.mubr.f32.gmra.mxu0 %v627
      %v1672 = vpop.f32.mrf.mxu0
      %v1673 = vadd.f32 0.0, %v1672
      %v1674 = vpop.f32.mrf.mxu0
      %1675 = vmatprep.mubr.f32.mxu0 0.0
      %1676 = vmatmul.mubr.f32.gmra.mxu0 %v630
      %v1677 = vpop.f32.mrf.mxu0
      %v1678 = vadd.f32 0.0, %v1677
      %v1679 = vpop.f32.mrf.mxu0
      %1680 = vmatprep.mubr.f32.mxu0 0.0
      %1681 = vmatmul.mubr.f32.gmra.mxu0 %v633
      %v1682 = vpop.f32.mrf.mxu0
      %v1683 = vadd.f32 0.0, %v1682
      %v1684 = vpop.f32.mrf.mxu0
      %1685 = vmatprep.mubr.f32.mxu0 0.0
      %1686 = vmatmul.mubr.f32.gmra.mxu0 %v636
      %v1687 = vpop.f32.mrf.mxu0
      %v1688 = vadd.f32 0.0, %v1687
      %v1689 = vpop.f32.mrf.mxu0
      %1690 = vmatprep.mubr.f32.mxu0 0.0
      %1691 = vmatmul.mubr.f32.gmra.mxu0 %v639
      %v1692 = vpop.f32.mrf.mxu0
      %v1693 = vadd.f32 0.0, %v1692
      %v1694 = vpop.f32.mrf.mxu0
      %1695 = vmatprep.mubr.f32.mxu0 0.0
      %1696 = vmatmul.mubr.f32.gmra.mxu0 %v642
      %v1697 = vpop.f32.mrf.mxu0
      %v1698 = vadd.f32 0.0, %v1697
      %v1699 = vpop.f32.mrf.mxu0
      %1700 = vmatprep.mubr.f32.mxu0 0.0
      %1701 = vmatmul.mubr.f32.gmra.mxu0 %v645
      %v1702 = vpop.f32.mrf.mxu0
      %v1703 = vadd.f32 0.0, %v1702
      %v1704 = vpop.f32.mrf.mxu0
      %1705 = vmatprep.mubr.f32.mxu0 0.0
      %1706 = vmatmul.mubr.f32.gmra.mxu0 %v648
      %v1707 = vpop.f32.mrf.mxu0
      %v1708 = vadd.f32 0.0, %v1707
      %v1709 = vpop.f32.mrf.mxu0
      %1710 = vmatprep.mubr.f32.mxu0 0.0
      %1711 = vmatmul.mubr.f32.gmra.mxu0 %v651
      %v1712 = vpop.f32.mrf.mxu0
      %v1713 = vadd.f32 0.0, %v1712
      %v1714 = vpop.f32.mrf.mxu0
      %1715 = vmatprep.mubr.f32.mxu0 0.0
      %1716 = vmatmul.mubr.f32.gmra.mxu0 %v654
      %v1717 = vpop.f32.mrf.mxu0
      %v1718 = vadd.f32 0.0, %v1717
      %v1719 = vpop.f32.mrf.mxu0
      %1720 = vmatprep.mubr.f32.mxu0 0.0
      %1721 = vmatmul.mubr.f32.gmra.mxu0 %v657
      %v1722 = vpop.f32.mrf.mxu0
      %v1723 = vadd.f32 0.0, %v1722
      %v1724 = vpop.f32.mrf.mxu0
      %1725 = vmatprep.mubr.f32.mxu0 0.0
      %1726 = vmatmul.mubr.f32.gmra.mxu0 %v660
      %v1727 = vpop.f32.mrf.mxu0
      %v1728 = vadd.f32 0.0, %v1727
      %v1729 = vpop.f32.mrf.mxu0
      %1730 = vmatprep.mubr.f32.mxu0 0.0
      %1731 = vmatmul.mubr.f32.gmra.mxu0 %v663
      %v1732 = vpop.f32.mrf.mxu0
      %v1733 = vadd.f32 0.0, %v1732
      %v1734 = vpop.f32.mrf.mxu0
      %1735 = vmatprep.mubr.f32.mxu0 0.0
      %1736 = vmatmul.mubr.f32.gmra.mxu0 %v666
      %v1737 = vpop.f32.mrf.mxu0
      %v1738 = vadd.f32 0.0, %v1737
      %v1739 = vpop.f32.mrf.mxu0
      %1740 = vmatprep.mubr.f32.mxu0 0.0
      %1741 = vmatmul.mubr.f32.gmra.mxu0 %v669
      %v1742 = vpop.f32.mrf.mxu0
      %v1743 = vadd.f32 0.0, %v1742
      %v1744 = vpop.f32.mrf.mxu0
      %1745 = vmatprep.mubr.f32.mxu0 0.0
      %1746 = vmatmul.mubr.f32.gmra.mxu0 %v672
      %v1747 = vpop.f32.mrf.mxu0
      %v1748 = vadd.f32 0.0, %v1747
      %v1749 = vpop.f32.mrf.mxu0
      %1750 = vmatprep.mubr.f32.mxu0 0.0
      %1751 = vmatmul.mubr.f32.gmra.mxu0 %v675
      %v1752 = vpop.f32.mrf.mxu0
      %v1753 = vadd.f32 0.0, %v1752
      %v1754 = vpop.f32.mrf.mxu0
      %1755 = vmatprep.mubr.f32.mxu0 0.0
      %1756 = vmatmul.mubr.f32.gmra.mxu0 %v678
      %v1757 = vpop.f32.mrf.mxu0
      %v1758 = vadd.f32 0.0, %v1757
      %v1759 = vpop.f32.mrf.mxu0
      %1760 = vmatprep.mubr.f32.mxu0 0.0
      %1761 = vmatmul.mubr.f32.gmra.mxu0 %v681
      %v1762 = vpop.f32.mrf.mxu0
      %v1763 = vadd.f32 0.0, %v1762
      %v1764 = vpop.f32.mrf.mxu0
      %1765 = vmatprep.mubr.f32.mxu0 0.0
      %1766 = vmatmul.mubr.f32.gmra.mxu0 %v684
      %v1767 = vpop.f32.mrf.mxu0
      %v1768 = vadd.f32 0.0, %v1767
      %v1769 = vpop.f32.mrf.mxu0
      %1770 = vmatprep.mubr.f32.mxu0 0.0
      %1771 = vmatmul.mubr.f32.gmra.mxu0 %v687
      %v1772 = vpop.f32.mrf.mxu0
      %v1773 = vadd.f32 0.0, %v1772
      %v1774 = vpop.f32.mrf.mxu0
      %1775 = vmatprep.mubr.f32.mxu0 0.0
      %1776 = vmatmul.mubr.f32.gmra.mxu0 %v690
      %v1777 = vpop.f32.mrf.mxu0
      %v1778 = vadd.f32 0.0, %v1777
      %v1779 = vpop.f32.mrf.mxu0
      %1780 = vmatprep.mubr.f32.mxu0 0.0
      %1781 = vmatmul.mubr.f32.gmra.mxu0 %v693
      %v1782 = vpop.f32.mrf.mxu0
      %v1783 = vadd.f32 0.0, %v1782
      %v1784 = vpop.f32.mrf.mxu0
      %1785 = vmatprep.mubr.f32.mxu0 0.0
      %1786 = vmatmul.mubr.f32.gmra.mxu0 %v696
      %v1787 = vpop.f32.mrf.mxu0
      %v1788 = vadd.f32 0.0, %v1787
      %v1789 = vpop.f32.mrf.mxu0
      %1790 = vmatprep.mubr.f32.mxu0 0.0
      %1791 = vmatmul.mubr.f32.gmra.mxu0 %v699
      %v1792 = vpop.f32.mrf.mxu0
      %v1793 = vadd.f32 0.0, %v1792
      %v1794 = vpop.f32.mrf.mxu0
      %1795 = vmatprep.mubr.f32.mxu0 0.0
      %1796 = vmatmul.mubr.f32.gmra.mxu0 %v702
      %v1797 = vpop.f32.mrf.mxu0
      %v1798 = vadd.f32 0.0, %v1797
      %v1799 = vpop.f32.mrf.mxu0
      %1800 = vmatprep.mubr.f32.mxu0 0.0
      %1801 = vmatmul.mubr.f32.gmra.mxu0 %v705
      %v1802 = vpop.f32.mrf.mxu0
      %v1803 = vadd.f32 0.0, %v1802
      %v1804 = vpop.f32.mrf.mxu0
      %1805 = vmatprep.mubr.f32.mxu0 0.0
      %1806 = vmatmul.mubr.f32.gmra.mxu0 %v708
      %v1807 = vpop.f32.mrf.mxu0
      %v1808 = vadd.f32 0.0, %v1807
      %v1809 = vpop.f32.mrf.mxu0
      %1810 = vmatprep.mubr.f32.mxu0 0.0
      %1811 = vmatmul.mubr.f32.gmra.mxu0 %v711
      %v1812 = vpop.f32.mrf.mxu0
      %v1813 = vadd.f32 0.0, %v1812
      %v1814 = vpop.f32.mrf.mxu0
      %1815 = vmatprep.mubr.f32.mxu0 0.0
      %1816 = vmatmul.mubr.f32.gmra.mxu0 %v714
      %v1817 = vpop.f32.mrf.mxu0
      %v1818 = vadd.f32 0.0, %v1817
      %v1819 = vpop.f32.mrf.mxu0
      %1820 = vmatprep.mubr.f32.mxu0 0.0
      %1821 = vmatmul.mubr.f32.gmra.mxu0 %v717
      %v1822 = vpop.f32.mrf.mxu0
      %v1823 = vadd.f32 0.0, %v1822
      %v1824 = vpop.f32.mrf.mxu0
      %1825 = vmatprep.mubr.f32.mxu0 0.0
      %1826 = vmatmul.mubr.f32.gmra.mxu0 %v720
      %v1827 = vpop.f32.mrf.mxu0
      %v1828 = vadd.f32 0.0, %v1827
      %v1829 = vpop.f32.mrf.mxu0
      %1830 = vmatprep.mubr.f32.mxu0 0.0
      %1831 = vmatmul.mubr.f32.gmra.mxu0 %v723
      %v1832 = vpop.f32.mrf.mxu0
      %v1833 = vadd.f32 0.0, %v1832
      %v1834 = vpop.f32.mrf.mxu0
      %1835 = vmatprep.mubr.f32.mxu0 0.0
      %1836 = vmatmul.mubr.f32.gmra.mxu0 %v726
      %v1837 = vpop.f32.mrf.mxu0
      %v1838 = vadd.f32 0.0, %v1837
      %v1839 = vpop.f32.mrf.mxu0
      %1840 = vmatprep.mubr.f32.mxu0 0.0
      %1841 = vmatmul.mubr.f32.gmra.mxu0 %v729
      %v1842 = vpop.f32.mrf.mxu0
      %v1843 = vadd.f32 0.0, %v1842
      %v1844 = vpop.f32.mrf.mxu0
      %1845 = vmatprep.mubr.f32.mxu0 0.0
      %1846 = vmatmul.mubr.f32.gmra.mxu0 %v732
      %v1847 = vpop.f32.mrf.mxu0
      %v1848 = vadd.f32 0.0, %v1847
      %v1849 = vpop.f32.mrf.mxu0
      %1850 = vmatprep.mubr.f32.mxu0 0.0
      %1851 = vmatmul.mubr.f32.gmra.mxu0 %v735
      %v1852 = vpop.f32.mrf.mxu0
      %v1853 = vadd.f32 0.0, %v1852
      %v1854 = vpop.f32.mrf.mxu0
      %1855 = vmatprep.mubr.f32.mxu0 0.0
      %1856 = vmatmul.mubr.f32.gmra.mxu0 %v738
      %v1857 = vpop.f32.mrf.mxu0
      %v1858 = vadd.f32 0.0, %v1857
      %v1859 = vpop.f32.mrf.mxu0
      %1860 = vmatprep.mubr.f32.mxu0 0.0
      %1861 = vmatmul.mubr.f32.gmra.mxu0 %v741
      %v1862 = vpop.f32.mrf.mxu0
      %v1863 = vadd.f32 0.0, %v1862
      %v1864 = vpop.f32.mrf.mxu0
      %1865 = vmatprep.mubr.f32.mxu0 0.0
      %1866 = vmatmul.mubr.f32.gmra.mxu0 %v744
      %v1867 = vpop.f32.mrf.mxu0
      %v1868 = vadd.f32 0.0, %v1867
      %v1869 = vpop.f32.mrf.mxu0
      %1870 = vmatprep.mubr.f32.mxu0 0.0
      %1871 = vmatmul.mubr.f32.gmra.mxu0 %v747
      %v1872 = vpop.f32.mrf.mxu0
      %v1873 = vadd.f32 0.0, %v1872
      %v1874 = vpop.f32.mrf.mxu0
      %1875 = vmatprep.mubr.f32.mxu0 0.0
      %1876 = vmatmul.mubr.f32.gmra.mxu0 %v750
      %v1877 = vpop.f32.mrf.mxu0
      %v1878 = vadd.f32 0.0, %v1877
      %v1879 = vpop.f32.mrf.mxu0
      %1880 = vmatprep.mubr.f32.mxu0 0.0
      %1881 = vmatmul.mubr.f32.gmra.mxu0 %v753
      %v1882 = vpop.f32.mrf.mxu0
      %v1883 = vadd.f32 0.0, %v1882
      %v1884 = vpop.f32.mrf.mxu0
      %1885 = vmatprep.mubr.f32.mxu0 0.0
      %1886 = vmatmul.mubr.f32.gmra.mxu0 %v756
      %v1887 = vpop.f32.mrf.mxu0
      %v1888 = vadd.f32 0.0, %v1887
      %v1889 = vpop.f32.mrf.mxu0
      %1890 = vmatprep.mubr.f32.mxu0 0.0
      %1891 = vmatmul.mubr.f32.gmra.mxu0 %v759
      %v1892 = vpop.f32.mrf.mxu0
      %v1893 = vadd.f32 0.0, %v1892
      %v1894 = vpop.f32.mrf.mxu0
      %1895 = vmatprep.mubr.f32.mxu0 0.0
      %1896 = vmatmul.mubr.f32.gmra.mxu0 %v762
      %v1897 = vpop.f32.mrf.mxu0
      %v1898 = vadd.f32 0.0, %v1897
      %v1899 = vpop.f32.mrf.mxu0
      %1900 = vmatprep.mubr.f32.mxu0 0.0
      %1901 = vmatmul.mubr.f32.gmra.mxu0 %v765
      %v1902 = vpop.f32.mrf.mxu0
      %v1903 = vadd.f32 0.0, %v1902
      %v1904 = vpop.f32.mrf.mxu0
      %1905 = vmatprep.mubr.f32.mxu0 0.0
      %1906 = vmatmul.mubr.f32.gmra.mxu0 %v768
      %v1907 = vpop.f32.mrf.mxu0
      %v1908 = vadd.f32 0.0, %v1907
      %v1909 = vpop.f32.mrf.mxu0
      %1910 = vmatprep.mubr.f32.mxu0 0.0
      %1911 = vmatmul.mubr.f32.gmra.mxu0 %v771
      %v1912 = vpop.f32.mrf.mxu0
      %v1913 = vadd.f32 0.0, %v1912
      %v1914 = vpop.f32.mrf.mxu0
      %1915 = vmatprep.mubr.f32.mxu0 0.0
      %1916 = vmatmul.mubr.f32.gmra.mxu0 %v774
      %v1917 = vpop.f32.mrf.mxu0
      %v1918 = vadd.f32 0.0, %v1917
      %v1919 = vpop.f32.mrf.mxu0
      %1920 = vmatprep.mubr.f32.mxu0 0.0
      %1921 = vmatmul.mubr.f32.gmra.mxu0 %v777
      %v1922 = vpop.f32.mrf.mxu0
      %v1923 = vadd.f32 0.0, %v1922
      %v1924 = vpop.f32.mrf.mxu0
      %1925 = vmatprep.mubr.f32.mxu0 0.0
      %1926 = vmatmul.mubr.f32.gmra.mxu0 %v780
      %v1927 = vpop.f32.mrf.mxu0
      %v1928 = vadd.f32 0.0, %v1927
      %v1929 = vpop.f32.mrf.mxu0
      %1930 = vmatprep.mubr.f32.mxu0 0.0
      %1931 = vmatmul.mubr.f32.gmra.mxu0 %v783
      %v1932 = vpop.f32.mrf.mxu0
      %v1933 = vadd.f32 0.0, %v1932
      %v1934 = vpop.f32.mrf.mxu0
      %1935 = vmatprep.mubr.f32.mxu0 0.0
      %1936 = vmatmul.mubr.f32.gmra.mxu0 %v786
      %v1937 = vpop.f32.mrf.mxu0
      %v1938 = vadd.f32 0.0, %v1937
      %v1939 = vpop.f32.mrf.mxu0
      %1940 = vmatprep.mubr.f32.mxu0 0.0
      %1941 = vmatmul.mubr.f32.gmra.mxu0 %v789
      %v1942 = vpop.f32.mrf.mxu0
      %v1943 = vadd.f32 0.0, %v1942
      %v1944 = vpop.f32.mrf.mxu0
      %1945 = vmatprep.mubr.f32.mxu0 0.0
      %1946 = vmatmul.mubr.f32.gmra.mxu0 %v792
      %v1947 = vpop.f32.mrf.mxu0
      %v1948 = vadd.f32 0.0, %v1947
      %v1949 = vpop.f32.mrf.mxu0
      %1950 = vmatprep.mubr.f32.mxu0 0.0
      %1951 = vmatmul.mubr.f32.gmra.mxu0 %v795
      %v1952 = vpop.f32.mrf.mxu0
      %v1953 = vadd.f32 0.0, %v1952
      %v1954 = vpop.f32.mrf.mxu0
      %1955 = vmatprep.mubr.f32.mxu0 0.0
      %1956 = vmatmul.mubr.f32.gmra.mxu0 %v798
      %v1957 = vpop.f32.mrf.mxu0
      %v1958 = vadd.f32 0.0, %v1957
      %v1959 = vpop.f32.mrf.mxu0
      %1960 = vmatprep.mubr.f32.mxu0 0.0
      %1961 = vmatmul.mubr.f32.gmra.mxu0 %v801
      %v1962 = vpop.f32.mrf.mxu0
      %v1963 = vadd.f32 0.0, %v1962
      %v1964 = vpop.f32.mrf.mxu0
      %1965 = vmatprep.mubr.f32.mxu0 0.0
      %1966 = vmatmul.mubr.f32.gmra.mxu0 %v804
      %v1967 = vpop.f32.mrf.mxu0
      %v1968 = vadd.f32 0.0, %v1967
      %v1969 = vpop.f32.mrf.mxu0
      %1970 = vmatprep.mubr.f32.mxu0 0.0
      %1971 = vmatmul.mubr.f32.gmra.mxu0 %v807
      %v1972 = vpop.f32.mrf.mxu0
      %v1973 = vadd.f32 0.0, %v1972
      %v1974 = vpop.f32.mrf.mxu0
      %1975 = vmatprep.mubr.f32.mxu0 0.0
      %1976 = vmatmul.mubr.f32.gmra.mxu0 %v810
      %v1977 = vpop.f32.mrf.mxu0
      %v1978 = vadd.f32 0.0, %v1977
      %v1979 = vpop.f32.mrf.mxu0
      %1980 = vmatprep.mubr.f32.mxu0 0.0
      %1981 = vmatmul.mubr.f32.gmra.mxu0 %v813
      %v1982 = vpop.f32.mrf.mxu0
      %v1983 = vadd.f32 0.0, %v1982
      %v1984 = vpop.f32.mrf.mxu0
      %1985 = vmatprep.mubr.f32.mxu0 0.0
      %1986 = vmatmul.mubr.f32.gmra.mxu0 %v816
      %v1987 = vpop.f32.mrf.mxu0
      %v1988 = vadd.f32 0.0, %v1987
      %v1989 = vpop.f32.mrf.mxu0
      %1990 = vmatprep.mubr.f32.mxu0 0.0
      %1991 = vmatmul.mubr.f32.gmra.mxu0 %v819
      %v1992 = vpop.f32.mrf.mxu0
      %v1993 = vadd.f32 0.0, %v1992
      %v1994 = vpop.f32.mrf.mxu0
      %1995 = vmatprep.mubr.f32.mxu0 0.0
      %1996 = vmatmul.mubr.f32.gmra.mxu0 %v822
      %v1997 = vpop.f32.mrf.mxu0
      %v1998 = vadd.f32 0.0, %v1997
      %v1999 = vpop.f32.mrf.mxu0
      %2000 = vmatprep.mubr.f32.mxu0 0.0
      %2001 = vmatmul.mubr.f32.gmra.mxu0 %v825
      %v2002 = vpop.f32.mrf.mxu0
      %v2003 = vadd.f32 0.0, %v2002
      %v2004 = vpop.f32.mrf.mxu0
      %2005 = vmatprep.mubr.f32.mxu0 0.0
      %2006 = vmatmul.mubr.f32.gmra.mxu0 %v828
      %v2007 = vpop.f32.mrf.mxu0
      %v2008 = vadd.f32 0.0, %v2007
      %v2009 = vpop.f32.mrf.mxu0
      %2010 = vmatprep.mubr.f32.mxu0 0.0
      %2011 = vmatmul.mubr.f32.gmra.mxu0 %v831
      %v2012 = vpop.f32.mrf.mxu0
      %v2013 = vadd.f32 0.0, %v2012
      %v2014 = vpop.f32.mrf.mxu0
      %2015 = vmatprep.mubr.f32.mxu0 0.0
      %2016 = vmatmul.mubr.f32.gmra.mxu0 %v834
      %v2017 = vpop.f32.mrf.mxu0
      %v2018 = vadd.f32 0.0, %v2017
      %v2019 = vpop.f32.mrf.mxu0
      %2020 = vmatprep.mubr.f32.mxu0 0.0
      %2021 = vmatmul.mubr.f32.gmra.mxu0 %v837
      %v2022 = vpop.f32.mrf.mxu0
      %v2023 = vadd.f32 0.0, %v2022
      %v2024 = vpop.f32.mrf.mxu0
      %2025 = vmatprep.mubr.f32.mxu0 0.0
      %2026 = vmatmul.mubr.f32.gmra.mxu0 %v840
      %v2027 = vpop.f32.mrf.mxu0
      %v2028 = vadd.f32 0.0, %v2027
      %v2029 = vpop.f32.mrf.mxu0
      %2030 = vmatprep.mubr.f32.mxu0 0.0
      %2031 = vmatmul.mubr.f32.gmra.mxu0 %v843
      %v2032 = vpop.f32.mrf.mxu0
      %v2033 = vadd.f32 0.0, %v2032
      %v2034 = vpop.f32.mrf.mxu0
      %2035 = vmatprep.mubr.f32.mxu0 0.0
      %2036 = vmatmul.mubr.f32.gmra.mxu0 %v846
      %v2037 = vpop.f32.mrf.mxu0
      %v2038 = vadd.f32 0.0, %v2037
      %v2039 = vpop.f32.mrf.mxu0
      %2040 = vmatprep.mubr.f32.mxu0 0.0
      %2041 = vmatmul.mubr.f32.gmra.mxu0 %v849
      %v2042 = vpop.f32.mrf.mxu0
      %v2043 = vadd.f32 0.0, %v2042
      %v2044 = vpop.f32.mrf.mxu0
      %2045 = vmatprep.mubr.f32.mxu0 0.0
      %2046 = vmatmul.mubr.f32.gmra.mxu0 %v852
      %v2047 = vpop.f32.mrf.mxu0
      %v2048 = vadd.f32 0.0, %v2047
      %v2049 = vpop.f32.mrf.mxu0
      %2050 = vmatprep.mubr.f32.mxu0 0.0
      %2051 = vmatmul.mubr.f32.gmra.mxu0 %v855
      %v2052 = vpop.f32.mrf.mxu0
      %v2053 = vadd.f32 0.0, %v2052
      %v2054 = vpop.f32.mrf.mxu0
      %2055 = vmatprep.mubr.f32.mxu0 0.0
      %2056 = vmatmul.mubr.f32.gmra.mxu0 %v858
      %v2057 = vpop.f32.mrf.mxu0
      %v2058 = vadd.f32 0.0, %v2057
      %v2059 = vpop.f32.mrf.mxu0
      %2060 = vmatprep.mubr.f32.mxu0 0.0
      %2061 = vmatmul.mubr.f32.gmra.mxu0 %v861
      %v2062 = vpop.f32.mrf.mxu0
      %v2063 = vadd.f32 0.0, %v2062
      %v2064 = vpop.f32.mrf.mxu0
      %2065 = vmatprep.mubr.f32.mxu0 0.0
      %2066 = vmatmul.mubr.f32.gmra.mxu0 %v864
      %v2067 = vpop.f32.mrf.mxu0
      %v2068 = vadd.f32 0.0, %v2067
      %v2069 = vpop.f32.mrf.mxu0
      %2070 = vmatprep.mubr.f32.mxu0 0.0
      %2071 = vmatmul.mubr.f32.gmra.mxu0 %v867
      %v2072 = vpop.f32.mrf.mxu0
      %v2073 = vadd.f32 0.0, %v2072
      %v2074 = vpop.f32.mrf.mxu0
      %2075 = vmatprep.mubr.f32.mxu0 0.0
      %2076 = vmatmul.mubr.f32.gmra.mxu0 %v870
      %v2077 = vpop.f32.mrf.mxu0
      %v2078 = vadd.f32 0.0, %v2077
      %v2079 = vpop.f32.mrf.mxu0
      %2080 = vmatprep.mubr.f32.mxu0 0.0
      %2081 = vmatmul.mubr.f32.gmra.mxu0 %v873
      %v2082 = vpop.f32.mrf.mxu0
      %v2083 = vadd.f32 0.0, %v2082
      %v2084 = vpop.f32.mrf.mxu0
      %2085 = vmatprep.mubr.f32.mxu0 0.0
      %2086 = vmatmul.mubr.f32.gmra.mxu0 %v876
      %v2087 = vpop.f32.mrf.mxu0
      %v2088 = vadd.f32 0.0, %v2087
      %v2089 = vpop.f32.mrf.mxu0
      %2090 = vmatprep.mubr.f32.mxu0 0.0
      %2091 = vmatmul.mubr.f32.gmra.mxu0 %v879
      %v2092 = vpop.f32.mrf.mxu0
      %v2093 = vadd.f32 0.0, %v2092
      %v2094 = vpop.f32.mrf.mxu0
      %2095 = vmatprep.mubr.f32.mxu0 0.0
      %2096 = vmatmul.mubr.f32.gmra.mxu0 %v882
      %v2097 = vpop.f32.mrf.mxu0
      %v2098 = vadd.f32 0.0, %v2097
      %v2099 = vpop.f32.mrf.mxu0
      %2100 = vmatprep.mubr.f32.mxu0 0.0
      %2101 = vmatmul.mubr.f32.gmra.mxu0 %v885
      %v2102 = vpop.f32.mrf.mxu0
      %v2103 = vadd.f32 0.0, %v2102
      %v2104 = vpop.f32.mrf.mxu0
      %2105 = vmatprep.mubr.f32.mxu0 0.0
      %2106 = vmatmul.mubr.f32.gmra.mxu0 %v888
      %v2107 = vpop.f32.mrf.mxu0
      %v2108 = vadd.f32 0.0, %v2107
      %v2109 = vpop.f32.mrf.mxu0
      %2110 = vmatprep.mubr.f32.mxu0 0.0
      %2111 = vmatmul.mubr.f32.gmra.mxu0 %v891
      %v2112 = vpop.f32.mrf.mxu0
      %v2113 = vadd.f32 0.0, %v2112
      %v2114 = vpop.f32.mrf.mxu0
      %2115 = vmatprep.mubr.f32.mxu0 0.0
      %2116 = vmatmul.mubr.f32.gmra.mxu0 %v894
      %v2117 = vpop.f32.mrf.mxu0
      %v2118 = vadd.f32 0.0, %v2117
      %v2119 = vpop.f32.mrf.mxu0
      %2120 = vmatprep.mubr.f32.mxu0 0.0
      %2121 = vmatmul.mubr.f32.gmra.mxu0 %v897
      %v2122 = vpop.f32.mrf.mxu0
      %v2123 = vadd.f32 0.0, %v2122
      %v2124 = vpop.f32.mrf.mxu0
      %2125 = vmatprep.mubr.f32.mxu0 0.0
      %2126 = vmatmul.mubr.f32.gmra.mxu0 %v900
      %v2127 = vpop.f32.mrf.mxu0
      %v2128 = vadd.f32 0.0, %v2127
      %v2129 = vpop.f32.mrf.mxu0
      %2130 = vmatprep.mubr.f32.mxu0 0.0
      %2131 = vmatmul.mubr.f32.gmra.mxu0 %v903
      %v2132 = vpop.f32.mrf.mxu0
      %v2133 = vadd.f32 0.0, %v2132
      %v2134 = vpop.f32.mrf.mxu0
      %2135 = vmatprep.mubr.f32.mxu0 0.0
      %2136 = vmatmul.mubr.f32.gmra.mxu0 %v906
      %v2137 = vpop.f32.mrf.mxu0
      %v2138 = vadd.f32 0.0, %v2137
      %v2139 = vpop.f32.mrf.mxu0
      %2140 = vmatprep.mubr.f32.mxu0 0.0
      %2141 = vmatmul.mubr.f32.gmra.mxu0 %v909
      %v2142 = vpop.f32.mrf.mxu0
      %v2143 = vadd.f32 0.0, %v2142
      %v2144 = vpop.f32.mrf.mxu0
      %2145 = vmatprep.mubr.f32.mxu0 0.0
      %2146 = vmatmul.mubr.f32.gmra.mxu0 %v912
      %v2147 = vpop.f32.mrf.mxu0
      %v2148 = vadd.f32 0.0, %v2147
      %v2149 = vpop.f32.mrf.mxu0
      %2150 = vmatprep.mubr.f32.mxu0 0.0
      %2151 = vmatmul.mubr.f32.gmra.mxu0 %v915
      %v2152 = vpop.f32.mrf.mxu0
      %v2153 = vadd.f32 0.0, %v2152
      %v2154 = vpop.f32.mrf.mxu0
      %2155 = vmatprep.mubr.f32.mxu0 0.0
      %2156 = vmatmul.mubr.f32.gmra.mxu0 %v918
      %v2157 = vpop.f32.mrf.mxu0
      %v2158 = vadd.f32 0.0, %v2157
      %v2159 = vpop.f32.mrf.mxu0
      %2160 = vmatprep.mubr.f32.mxu0 0.0
      %2161 = vmatmul.mubr.f32.gmra.mxu0 %v921
      %v2162 = vpop.f32.mrf.mxu0
      %v2163 = vadd.f32 0.0, %v2162
      %v2164 = vpop.f32.mrf.mxu0
      %2165 = vmatprep.mubr.f32.mxu0 0.0
      %2166 = vmatmul.mubr.f32.gmra.mxu0 %v924
      %v2167 = vpop.f32.mrf.mxu0
      %v2168 = vadd.f32 0.0, %v2167
      %v2169 = vpop.f32.mrf.mxu0
      %2170 = vmatprep.mubr.f32.mxu0 0.0
      %2171 = vmatmul.mubr.f32.gmra.mxu0 %v927
      %v2172 = vpop.f32.mrf.mxu0
      %v2173 = vadd.f32 0.0, %v2172
      %v2174 = vpop.f32.mrf.mxu0
      %2175 = vmatprep.mubr.f32.mxu0 0.0
      %2176 = vmatmul.mubr.f32.gmra.mxu0 %v930
      %v2177 = vpop.f32.mrf.mxu0
      %v2178 = vadd.f32 0.0, %v2177
      %v2179 = vpop.f32.mrf.mxu0
      %2180 = vmatprep.mubr.f32.mxu0 0.0
      %2181 = vmatmul.mubr.f32.gmra.mxu0 %v933
      %v2182 = vpop.f32.mrf.mxu0
      %v2183 = vadd.f32 0.0, %v2182
      %v2184 = vpop.f32.mrf.mxu0
      %2185 = vmatprep.mubr.f32.mxu0 0.0
      %2186 = vmatmul.mubr.f32.gmra.mxu0 %v936
      %v2187 = vpop.f32.mrf.mxu0
      %v2188 = vadd.f32 0.0, %v2187
      %v2189 = vpop.f32.mrf.mxu0
      %2190 = vmatprep.mubr.f32.mxu0 0.0
      %2191 = vmatmul.mubr.f32.gmra.mxu0 %v939
      %v2192 = vpop.f32.mrf.mxu0
      %v2193 = vadd.f32 0.0, %v2192
      %v2194 = vpop.f32.mrf.mxu0
      %2195 = vmatprep.mubr.f32.mxu0 0.0
      %2196 = vmatmul.mubr.f32.gmra.mxu0 %v942
      %v2197 = vpop.f32.mrf.mxu0
      %v2198 = vadd.f32 0.0, %v2197
      %v2199 = vpop.f32.mrf.mxu0
      %2200 = vmatprep.mubr.f32.mxu0 0.0
      %2201 = vmatmul.mubr.f32.gmra.mxu0 %v945
      %v2202 = vpop.f32.mrf.mxu0
      %v2203 = vadd.f32 0.0, %v2202
      %v2204 = vpop.f32.mrf.mxu0
      %2205 = vmatprep.mubr.f32.mxu0 0.0
      %2206 = vmatmul.mubr.f32.gmra.mxu0 %v948
      %v2207 = vpop.f32.mrf.mxu0
      %v2208 = vadd.f32 0.0, %v2207
      %v2209 = vpop.f32.mrf.mxu0
      %2210 = vmatprep.mubr.f32.mxu0 0.0
      %2211 = vmatmul.mubr.f32.gmra.mxu0 %v951
      %v2212 = vpop.f32.mrf.mxu0
      %v2213 = vadd.f32 0.0, %v2212
      %v2214 = vpop.f32.mrf.mxu0
      %2215 = vmatprep.mubr.f32.mxu0 0.0
      %2216 = vmatmul.mubr.f32.gmra.mxu0 %v954
      %v2217 = vpop.f32.mrf.mxu0
      %v2218 = vadd.f32 0.0, %v2217
      %v2219 = vpop.f32.mrf.mxu0
      %2220 = vmatprep.mubr.f32.mxu0 0.0
      %2221 = vmatmul.mubr.f32.gmra.mxu0 %v957
      %v2222 = vpop.f32.mrf.mxu0
      %v2223 = vadd.f32 0.0, %v2222
      %v2224 = vpop.f32.mrf.mxu0
      %2225 = vmatprep.mubr.f32.mxu0 0.0
      %2226 = vmatmul.mubr.f32.gmra.mxu0 %v960
      %v2227 = vpop.f32.mrf.mxu0
      %v2228 = vadd.f32 0.0, %v2227
      %v2229 = vpop.f32.mrf.mxu0
      %2230 = vmatprep.mubr.f32.mxu0 0.0
      %2231 = vmatmul.mubr.f32.gmra.mxu0 %v963
      %v2232 = vpop.f32.mrf.mxu0
      %v2233 = vadd.f32 0.0, %v2232
      %v2234 = vpop.f32.mrf.mxu0
      %2235 = vmatprep.mubr.f32.mxu0 0.0
      %2236 = vmatmul.mubr.f32.gmra.mxu0 %v966
      %v2237 = vpop.f32.mrf.mxu0
      %v2238 = vadd.f32 0.0, %v2237
      %v2239 = vpop.f32.mrf.mxu0
      %2240 = vmatprep.mubr.f32.mxu0 0.0
      %2241 = vmatmul.mubr.f32.gmra.mxu0 %v969
      %v2242 = vpop.f32.mrf.mxu0
      %v2243 = vadd.f32 0.0, %v2242
      %v2244 = vpop.f32.mrf.mxu0
      %2245 = vmatprep.mubr.f32.mxu0 0.0
      %2246 = vmatmul.mubr.f32.gmra.mxu0 %v972
      %v2247 = vpop.f32.mrf.mxu0
      %v2248 = vadd.f32 0.0, %v2247
      %v2249 = vpop.f32.mrf.mxu0
      %2250 = vmatprep.mubr.f32.mxu0 0.0
      %2251 = vmatmul.mubr.f32.gmra.mxu0 %v975
      %v2252 = vpop.f32.mrf.mxu0
      %v2253 = vadd.f32 0.0, %v2252
      %v2254 = vpop.f32.mrf.mxu0
      %2255 = vmatprep.mubr.f32.mxu0 0.0
      %2256 = vmatmul.mubr.f32.gmra.mxu0 %v978
      %v2257 = vpop.f32.mrf.mxu0
      %v2258 = vadd.f32 0.0, %v2257
      %v2259 = vpop.f32.mrf.mxu0
      %2260 = vmatprep.mubr.f32.mxu0 0.0
      %2261 = vmatmul.mubr.f32.gmra.mxu0 %v981
      %v2262 = vpop.f32.mrf.mxu0
      %v2263 = vadd.f32 0.0, %v2262
      %v2264 = vpop.f32.mrf.mxu0
      %2265 = vmatprep.mubr.f32.mxu0 0.0
      %2266 = vmatmul.mubr.f32.gmra.mxu0 %v984
      %v2267 = vpop.f32.mrf.mxu0
      %v2268 = vadd.f32 0.0, %v2267
      %v2269 = vpop.f32.mrf.mxu0
      %2270 = vmatprep.mubr.f32.mxu0 0.0
      %2271 = vmatmul.mubr.f32.gmra.mxu0 %v987
      %v2272 = vpop.f32.mrf.mxu0
      %v2273 = vadd.f32 0.0, %v2272
      %v2274 = vpop.f32.mrf.mxu0
      %2275 = vmatprep.mubr.f32.mxu0 0.0
      %2276 = vmatmul.mubr.f32.gmra.mxu0 %v990
      %v2277 = vpop.f32.mrf.mxu0
      %v2278 = vadd.f32 0.0, %v2277
      %v2279 = vpop.f32.mrf.mxu0
      %2280 = vmatprep.mubr.f32.mxu0 0.0
      %2281 = vmatmul.mubr.f32.gmra.mxu0 %v993
      %v2282 = vpop.f32.mrf.mxu0
      %v2283 = vadd.f32 0.0, %v2282
      %v2284 = vpop.f32.mrf.mxu0
      %2285 = vmatprep.mubr.f32.mxu0 0.0
      %2286 = vmatmul.mubr.f32.gmra.mxu0 %v996
      %v2287 = vpop.f32.mrf.mxu0
      %v2288 = vadd.f32 0.0, %v2287
      %v2289 = vpop.f32.mrf.mxu0
      %2290 = vmatprep.mubr.f32.mxu0 0.0
      %2291 = vmatmul.mubr.f32.gmra.mxu0 %v999
      %v2292 = vpop.f32.mrf.mxu0
      %v2293 = vadd.f32 0.0, %v2292
      %v2294 = vpop.f32.mrf.mxu0
      %2295 = vmatprep.mubr.f32.mxu0 0.0
      %2296 = vmatmul.mubr.f32.gmra.mxu0 %v1002
      %v2297 = vpop.f32.mrf.mxu0
      %v2298 = vadd.f32 0.0, %v2297
      %v2299 = vpop.f32.mrf.mxu0
      %2300 = vmatprep.mubr.f32.mxu0 0.0
      %2301 = vmatmul.mubr.f32.gmra.mxu0 %v1005
      %v2302 = vpop.f32.mrf.mxu0
      %v2303 = vadd.f32 0.0, %v2302
      %v2304 = vpop.f32.mrf.mxu0
      %2305 = vmatprep.mubr.f32.mxu0 0.0
      %2306 = vmatmul.mubr.f32.gmra.mxu0 %v1008
      %v2307 = vpop.f32.mrf.mxu0
      %v2308 = vadd.f32 0.0, %v2307
      %v2309 = vpop.f32.mrf.mxu0
      %2310 = vmatprep.mubr.f32.mxu0 0.0
      %2311 = vmatmul.mubr.f32.gmra.mxu0 %v1011
      %v2312 = vpop.f32.mrf.mxu0
      %v2313 = vadd.f32 0.0, %v2312
      %v2314 = vpop.f32.mrf.mxu0
      %2315 = vmatprep.mubr.f32.mxu0 0.0
      %2316 = vmatmul.mubr.f32.gmra.mxu0 %v1014
      %v2317 = vpop.f32.mrf.mxu0
      %v2318 = vadd.f32 0.0, %v2317
      %v2319 = vpop.f32.mrf.mxu0
      %2320 = vmatprep.mubr.f32.mxu0 0.0
      %2321 = vmatmul.mubr.f32.gmra.mxu0 %v1017
      %v2322 = vpop.f32.mrf.mxu0
      %v2323 = vadd.f32 0.0, %v2322
      %v2324 = vpop.f32.mrf.mxu0
      %2325 = vmatprep.mubr.f32.mxu0 0.0
      %2326 = vmatmul.mubr.f32.gmra.mxu0 %v1020
      %v2327 = vpop.f32.mrf.mxu0
      %v2328 = vadd.f32 0.0, %v2327
      %v2329 = vpop.f32.mrf.mxu0
      %2330 = vmatprep.mubr.f32.mxu0 0.0
      %2331 = vmatmul.mubr.f32.gmra.mxu0 %v1023
      %v2332 = vpop.f32.mrf.mxu0
      %v2333 = vadd.f32 0.0, %v2332
      %v2334 = vpop.f32.mrf.mxu0
      %2335 = vmatprep.mubr.f32.mxu0 0.0
      %2336 = vmatmul.mubr.f32.gmra.mxu0 %v1026
      %v2337 = vpop.f32.mrf.mxu0
      %v2338 = vadd.f32 0.0, %v2337
      %v2339 = vpop.f32.mrf.mxu0
      %2340 = vmatprep.mubr.f32.mxu0 0.0
      %2341 = vmatmul.mubr.f32.gmra.mxu0 %v1029
      %v2342 = vpop.f32.mrf.mxu0
      %v2343 = vadd.f32 0.0, %v2342
      %v2344 = vpop.f32.mrf.mxu0
      %2345 = vmatprep.mubr.f32.mxu0 0.0
      %2346 = vmatmul.mubr.f32.gmra.mxu0 %v1032
      %v2347 = vpop.f32.mrf.mxu0
      %v2348 = vadd.f32 0.0, %v2347
      %v2349 = vpop.f32.mrf.mxu0
      %2350 = vmatprep.mubr.f32.mxu0 0.0
      %2351 = vmatmul.mubr.f32.gmra.mxu0 %v1035
      %v2352 = vpop.f32.mrf.mxu0
      %v2353 = vadd.f32 0.0, %v2352
      %v2354 = vpop.f32.mrf.mxu0
      %2355 = vmatprep.mubr.f32.mxu0 0.0
      %2356 = vmatmul.mubr.f32.gmra.mxu0 %v1038
      %v2357 = vpop.f32.mrf.mxu0
      %v2358 = vadd.f32 0.0, %v2357
      %v2359 = vpop.f32.mrf.mxu0
      %2360 = vmatprep.mubr.f32.mxu0 0.0
      %2361 = vmatmul.mubr.f32.gmra.mxu0 %v1041
      %v2362 = vpop.f32.mrf.mxu0
      %v2363 = vadd.f32 0.0, %v2362
      %v2364 = vpop.f32.mrf.mxu0
      %2365 = vmatprep.mubr.f32.mxu0 0.0
      %2366 = vmatmul.mubr.f32.gmra.mxu0 %v1044
      %v2367 = vpop.f32.mrf.mxu0
      %v2368 = vadd.f32 0.0, %v2367
      %v2369 = vpop.f32.mrf.mxu0
      %2370 = vmatprep.mubr.f32.mxu0 0.0
      %2371 = vmatmul.mubr.f32.gmra.mxu0 %v1047
      %v2372 = vpop.f32.mrf.mxu0
      %v2373 = vadd.f32 0.0, %v2372
      %v2374 = vpop.f32.mrf.mxu0
      %2375 = vmatprep.mubr.f32.mxu0 0.0
      %2376 = vmatmul.mubr.f32.gmra.mxu0 %v1050
      %v2377 = vpop.f32.mrf.mxu0
      %v2378 = vadd.f32 0.0, %v2377
      %v2379 = vpop.f32.mrf.mxu0
      %2380 = vmatprep.mubr.f32.mxu0 0.0
      %2381 = vmatmul.mubr.f32.gmra.mxu0 %v1053
      %v2382 = vpop.f32.mrf.mxu0
      %v2383 = vadd.f32 0.0, %v2382
      %v2384 = vpop.f32.mrf.mxu0
      %2385 = vmatprep.mubr.f32.mxu0 0.0
      %2386 = vmatmul.mubr.f32.gmra.mxu0 %v1056
      %v2387 = vpop.f32.mrf.mxu0
      %v2388 = vadd.f32 0.0, %v2387
      %v2389 = vpop.f32.mrf.mxu0
      %2390 = vmatprep.mubr.f32.mxu0 0.0
      %2391 = vmatmul.mubr.f32.gmra.mxu0 %v1059
      %v2392 = vpop.f32.mrf.mxu0
      %v2393 = vadd.f32 0.0, %v2392
      %v2394 = vpop.f32.mrf.mxu0
      %2395 = vmatprep.mubr.f32.mxu0 0.0
      %2396 = vmatmul.mubr.f32.gmra.mxu0 %v1062
      %v2397 = vpop.f32.mrf.mxu0
      %v2398 = vadd.f32 0.0, %v2397
      %v2399 = vpop.f32.mrf.mxu0
      %2400 = vmatprep.mubr.f32.mxu0 0.0
      %2401 = vmatmul.mubr.f32.gmra.mxu0 %v1065
      %v2402 = vpop.f32.mrf.mxu0
      %v2403 = vadd.f32 0.0, %v2402
      %v2404 = vpop.f32.mrf.mxu0
      %2405 = vmatprep.mubr.f32.mxu0 0.0
      %2406 = vmatmul.mubr.f32.gmra.mxu0 %v1068
      %v2407 = vpop.f32.mrf.mxu0
      %v2408 = vadd.f32 0.0, %v2407
      %v2409 = vpop.f32.mrf.mxu0
      %2410 = vmatprep.mubr.f32.mxu0 0.0
      %2411 = vmatmul.mubr.f32.gmra.mxu0 %v1071
      %v2412 = vpop.f32.mrf.mxu0
      %v2413 = vadd.f32 0.0, %v2412
      %v2414 = vpop.f32.mrf.mxu0
      %2415 = vmatprep.mubr.f32.mxu0 0.0
      %2416 = vmatmul.mubr.f32.gmra.mxu0 %v1074
      %v2417 = vpop.f32.mrf.mxu0
      %v2418 = vadd.f32 0.0, %v2417
      %v2419 = vpop.f32.mrf.mxu0
      %2420 = vmatprep.mubr.f32.mxu0 0.0
      %2421 = vmatmul.mubr.f32.gmra.mxu0 %v1077
      %v2422 = vpop.f32.mrf.mxu0
      %v2423 = vadd.f32 0.0, %v2422
      %v2424 = vpop.f32.mrf.mxu0
      %2425 = vmatprep.mubr.f32.mxu0 0.0
      %2426 = vmatmul.mubr.f32.gmra.mxu0 %v1080
      %v2427 = vpop.f32.mrf.mxu0
      %v2428 = vadd.f32 0.0, %v2427
      %v2429 = vpop.f32.mrf.mxu0
      %2430 = vmatprep.mubr.f32.mxu0 0.0
      %2431 = vmatmul.mubr.f32.gmra.mxu0 %v1083
      %v2432 = vpop.f32.mrf.mxu0
      %v2433 = vadd.f32 0.0, %v2432
      %v2434 = vpop.f32.mrf.mxu0
      %2435 = vmatprep.mubr.f32.mxu0 0.0
      %2436 = vmatmul.mubr.f32.gmra.mxu0 %v1086
      %v2437 = vpop.f32.mrf.mxu0
      %v2438 = vadd.f32 0.0, %v2437
      %v2439 = vpop.f32.mrf.mxu0
      %2440 = vmatprep.mubr.f32.mxu0 0.0
      %2441 = vmatmul.mubr.f32.gmra.mxu0 %v1089
      %v2442 = vpop.f32.mrf.mxu0
      %v2443 = vadd.f32 0.0, %v2442
      %v2444 = vpop.f32.mrf.mxu0
      %2445 = vmatprep.mubr.f32.mxu0 0.0
      %2446 = vmatmul.mubr.f32.gmra.mxu0 %v1092
      %v2447 = vpop.f32.mrf.mxu0
      %v2448 = vadd.f32 0.0, %v2447
      %v2449 = vpop.f32.mrf.mxu0
      %2450 = vmatprep.mubr.f32.mxu0 0.0
      %2451 = vmatmul.mubr.f32.gmra.mxu0 %v1095
      %v2452 = vpop.f32.mrf.mxu0
      %v2453 = vadd.f32 0.0, %v2452
      %v2454 = vpop.f32.mrf.mxu0
      %2455 = vmatprep.mubr.f32.mxu0 0.0
      %2456 = vmatmul.mubr.f32.gmra.mxu0 %v1098
      %v2457 = vpop.f32.mrf.mxu0
      %v2458 = vadd.f32 0.0, %v2457
      %v2459 = vpop.f32.mrf.mxu0
      %2460 = vmatprep.mubr.f32.mxu0 0.0
      %2461 = vmatmul.mubr.f32.gmra.mxu0 %v1101
      %v2462 = vpop.f32.mrf.mxu0
      %v2463 = vadd.f32 0.0, %v2462
      %v2464 = vpop.f32.mrf.mxu0
      %2465 = vmatprep.mubr.f32.mxu0 0.0
      %2466 = vmatmul.mubr.f32.gmra.mxu0 %v1104
      %v2467 = vpop.f32.mrf.mxu0
      %v2468 = vadd.f32 0.0, %v2467
      %v2469 = vpop.f32.mrf.mxu0
      %2470 = vmatprep.mubr.f32.mxu0 0.0
      %2471 = vmatmul.mubr.f32.gmra.mxu0 %v1107
      %v2472 = vpop.f32.mrf.mxu0
      %v2473 = vadd.f32 0.0, %v2472
      %v2474 = vpop.f32.mrf.mxu0
      %2475 = vmatprep.mubr.f32.mxu0 0.0
      %2476 = vmatmul.mubr.f32.gmra.mxu0 %v1110
      %v2477 = vpop.f32.mrf.mxu0
      %v2478 = vadd.f32 0.0, %v2477
      %v2479 = vpop.f32.mrf.mxu0
      %2480 = vmatprep.mubr.f32.mxu0 0.0
      %2481 = vmatmul.mubr.f32.gmra.mxu0 %v1113
      %v2482 = vpop.f32.mrf.mxu0
      %v2483 = vadd.f32 0.0, %v2482
      %v2484 = vpop.f32.mrf.mxu0
      %2485 = vmatprep.mubr.f32.mxu0 0.0
      %2486 = vmatmul.mubr.f32.gmra.mxu0 %v1116
      %v2487 = vpop.f32.mrf.mxu0
      %v2488 = vadd.f32 0.0, %v2487
      %v2489 = vpop.f32.mrf.mxu0
      %2490 = vmatprep.mubr.f32.mxu0 0.0
      %2491 = vmatmul.mubr.f32.gmra.mxu0 %v1119
      %v2492 = vpop.f32.mrf.mxu0
      %v2493 = vadd.f32 0.0, %v2492
      %v2494 = vpop.f32.mrf.mxu0
      %2495 = vmatprep.mubr.f32.mxu0 0.0
      %2496 = vmatmul.mubr.f32.gmra.mxu0 %v1122
      %v2497 = vpop.f32.mrf.mxu0
      %v2498 = vadd.f32 0.0, %v2497
      %v2499 = vpop.f32.mrf.mxu0
      %2500 = vmatprep.mubr.f32.mxu0 0.0
      %2501 = vmatmul.mubr.f32.gmra.mxu0 %v1125
      %v2502 = vpop.f32.mrf.mxu0
      %v2503 = vadd.f32 0.0, %v2502
      %v2504 = vpop.f32.mrf.mxu0
      %2505 = vmatprep.mubr.f32.mxu0 0.0
      %2506 = vmatmul.mubr.f32.gmra.mxu0 %v1128
      %v2507 = vpop.f32.mrf.mxu0
      %v2508 = vadd.f32 0.0, %v2507
      %v2509 = vpop.f32.mrf.mxu0
      %2510 = vmatprep.mubr.f32.mxu0 0.0
      %2511 = vmatmul.mubr.f32.gmra.mxu0 %v1131
      %v2512 = vpop.f32.mrf.mxu0
      %v2513 = vadd.f32 0.0, %v2512
      %v2514 = vpop.f32.mrf.mxu0
      %2515 = vmatprep.mubr.f32.mxu0 0.0
      %2516 = vmatmul.mubr.f32.gmra.mxu0 %v1134
      %v2517 = vpop.f32.mrf.mxu0
      %v2518 = vadd.f32 0.0, %v2517
      %v2519 = vpop.f32.mrf.mxu0
      %2520 = vmatprep.mubr.f32.mxu0 0.0
      %2521 = vmatmul.mubr.f32.gmra.mxu0 %v1137
      %v2522 = vpop.f32.mrf.mxu0
      %v2523 = vadd.f32 0.0, %v2522
      %v2524 = vpop.f32.mrf.mxu0
      %2525 = vmatprep.mubr.f32.mxu0 0.0
      %2526 = vmatmul.mubr.f32.gmra.mxu0 %v1140
      %v2527 = vpop.f32.mrf.mxu0
      %v2528 = vadd.f32 0.0, %v2527
      %v2529 = vpop.f32.mrf.mxu0
      %2530 = vmatprep.mubr.f32.mxu0 0.0
      %2531 = vmatmul.mubr.f32.gmra.mxu0 %v1143
      %v2532 = vpop.f32.mrf.mxu0
      %v2533 = vadd.f32 0.0, %v2532
      %v2534 = vpop.f32.mrf.mxu0
      %2535 = vmatprep.mubr.f32.mxu0 0.0
      %2536 = vmatmul.mubr.f32.gmra.mxu0 %v1146
      %v2537 = vpop.f32.mrf.mxu0
      %v2538 = vadd.f32 0.0, %v2537
      %v2539 = vpop.f32.mrf.mxu0
      %2540 = vmatprep.mubr.f32.mxu0 0.0
      %2541 = vmatmul.mubr.f32.gmra.mxu0 %v1149
      %v2542 = vpop.f32.mrf.mxu0
      %v2543 = vadd.f32 0.0, %v2542
      %v2544 = vpop.f32.mrf.mxu0
      %2545 = vmatprep.mubr.f32.mxu0 0.0
      %2546 = vmatmul.mubr.f32.gmra.mxu0 %v1152
      %v2547 = vpop.f32.mrf.mxu0
      %v2548 = vadd.f32 0.0, %v2547
      %v2549 = vpop.f32.mrf.mxu0
      %2550 = vmatprep.mubr.f32.mxu0 0.0
      %2551 = vmatmul.mubr.f32.gmra.mxu0 %v1155
      %v2552 = vpop.f32.mrf.mxu0
      %v2553 = vadd.f32 0.0, %v2552
      %v2554 = vpop.f32.mrf.mxu0
      %2555 = vmatprep.mubr.f32.mxu0 0.0
      %2556 = vmatmul.mubr.f32.gmra.mxu0 %v1158
      %v2557 = vpop.f32.mrf.mxu0
      %v2558 = vadd.f32 0.0, %v2557
      %v2559 = vpop.f32.mrf.mxu0
      %2560 = vmatprep.mubr.f32.mxu0 0.0
      %2561 = vmatmul.mubr.f32.gmra.mxu0 %v1161
      %v2562 = vpop.f32.mrf.mxu0
      %v2563 = vadd.f32 0.0, %v2562
      %v2564 = vpop.f32.mrf.mxu0
      %2565 = vmatprep.mubr.f32.mxu0 0.0
      %2566 = vmatmul.mubr.f32.gmra.mxu0 %v1164
      %v2567 = vpop.f32.mrf.mxu0
      %v2568 = vadd.f32 0.0, %v2567
      %v2569 = vpop.f32.mrf.mxu0
      %2570 = vmatprep.mubr.f32.mxu0 0.0
      %2571 = vmatmul.mubr.f32.gmra.mxu0 %v1167
      %v2572 = vpop.f32.mrf.mxu0
      %v2573 = vadd.f32 0.0, %v2572
      %v2574 = vpop.f32.mrf.mxu0
      %2575 = vmatprep.mubr.f32.mxu0 0.0
      %2576 = vmatmul.mubr.f32.gmra.mxu0 %v1170
      %v2577 = vpop.f32.mrf.mxu0
      %v2578 = vadd.f32 0.0, %v2577
      %v2579 = vpop.f32.mrf.mxu0
      %2580 = vmatprep.mubr.f32.mxu0 0.0
      %2581 = vmatmul.mubr.f32.gmra.mxu0 %v1173
      %v2582 = vpop.f32.mrf.mxu0
      %v2583 = vadd.f32 0.0, %v2582
      %v2584 = vpop.f32.mrf.mxu0
      %2585 = vmatprep.mubr.f32.mxu0 0.0
      %2586 = vmatmul.mubr.f32.gmra.mxu0 %v1176
      %v2587 = vpop.f32.mrf.mxu0
      %v2588 = vadd.f32 0.0, %v2587
      %v2589 = vpop.f32.mrf.mxu0
      %2590 = vmatprep.mubr.f32.mxu0 0.0
      %2591 = vmatmul.mubr.f32.gmra.mxu0 %v1179
      %v2592 = vpop.f32.mrf.mxu0
      %v2593 = vadd.f32 0.0, %v2592
      %v2594 = vpop.f32.mrf.mxu0
      %2595 = vmatprep.mubr.f32.mxu0 0.0
      %2596 = vmatmul.mubr.f32.gmra.mxu0 %v1182
      %v2597 = vpop.f32.mrf.mxu0
      %v2598 = vadd.f32 0.0, %v2597
      %v2599 = vpop.f32.mrf.mxu0
      %2600 = vmatprep.mubr.f32.mxu0 0.0
      %2601 = vmatmul.mubr.f32.gmra.mxu0 %v1185
      %v2602 = vpop.f32.mrf.mxu0
      %v2603 = vadd.f32 0.0, %v2602
      %v2604 = vpop.f32.mrf.mxu0
      %2605 = vmatprep.mubr.f32.mxu0 0.0
      %2606 = vmatmul.mubr.f32.gmra.mxu0 %v1188
      %v2607 = vpop.f32.mrf.mxu0
      %v2608 = vadd.f32 0.0, %v2607
      %v2609 = vpop.f32.mrf.mxu0
      %2610 = vmatprep.mubr.f32.mxu0 0.0
      %2611 = vmatmul.mubr.f32.gmra.mxu0 %v1191
      %v2612 = vpop.f32.mrf.mxu0
      %v2613 = vadd.f32 0.0, %v2612
      %v2614 = vpop.f32.mrf.mxu0
      %2615 = vmatprep.mubr.f32.mxu0 0.0
      %2616 = vmatmul.mubr.f32.gmra.mxu0 %v1194
      %v2617 = vpop.f32.mrf.mxu0
      %v2618 = vadd.f32 0.0, %v2617
      %v2619 = vpop.f32.mrf.mxu0
      %2620 = vmatprep.mubr.f32.mxu0 0.0
      %2621 = vmatmul.mubr.f32.gmra.mxu0 %v1197
      %v2622 = vpop.f32.mrf.mxu0
      %v2623 = vadd.f32 0.0, %v2622
      %v2624 = vpop.f32.mrf.mxu0
      %2625 = vmatprep.mubr.f32.mxu0 0.0
      %2626 = vmatmul.mubr.f32.gmra.mxu0 %v1200
      %v2627 = vpop.f32.mrf.mxu0
      %v2628 = vadd.f32 0.0, %v2627
      %v2629 = vpop.f32.mrf.mxu0
      %2630 = vmatprep.mubr.f32.mxu0 0.0
      %2631 = vmatmul.mubr.f32.gmra.mxu0 %v1203
      %v2632 = vpop.f32.mrf.mxu0
      %v2633 = vadd.f32 0.0, %v2632
      %v2634 = vpop.f32.mrf.mxu0
      %2635 = vmatprep.mubr.f32.mxu0 0.0
      %2636 = vmatmul.mubr.f32.gmra.mxu0 %v1206
      %v2637 = vpop.f32.mrf.mxu0
      %v2638 = vadd.f32 0.0, %v2637
      %v2639 = vpop.f32.mrf.mxu0
      %2640 = vmatprep.mubr.f32.mxu0 0.0
      %2641 = vmatmul.mubr.f32.gmra.mxu0 %v1209
      %v2642 = vpop.f32.mrf.mxu0
      %v2643 = vadd.f32 0.0, %v2642
      %v2644 = vpop.f32.mrf.mxu0
      %2645 = vmatprep.mubr.f32.mxu0 0.0
      %2646 = vmatmul.mubr.f32.gmra.mxu0 %v1212
      %v2647 = vpop.f32.mrf.mxu0
      %v2648 = vadd.f32 0.0, %v2647
      %v2649 = vpop.f32.mrf.mxu0
      %2650 = vmatprep.mubr.f32.mxu0 0.0
      %2651 = vmatmul.mubr.f32.gmra.mxu0 %v1215
      %v2652 = vpop.f32.mrf.mxu0
      %v2653 = vadd.f32 0.0, %v2652
      %v2654 = vpop.f32.mrf.mxu0
      %2655 = vmatprep.mubr.f32.mxu0 0.0
      %2656 = vmatmul.mubr.f32.gmra.mxu0 %v1218
      %v2657 = vpop.f32.mrf.mxu0
      %v2658 = vadd.f32 0.0, %v2657
      %v2659 = vpop.f32.mrf.mxu0
      %2660 = vmatprep.mubr.f32.mxu0 0.0
      %2661 = vmatmul.mubr.f32.gmra.mxu0 %v1221
      %v2662 = vpop.f32.mrf.mxu0
      %v2663 = vadd.f32 0.0, %v2662
      %v2664 = vpop.f32.mrf.mxu0
      %2665 = vmatprep.mubr.f32.mxu0 0.0
      %2666 = vmatmul.mubr.f32.gmra.mxu0 %v1224
      %v2667 = vpop.f32.mrf.mxu0
      %v2668 = vadd.f32 0.0, %v2667
      %v2669 = vpop.f32.mrf.mxu0
      %2670 = vmatprep.mubr.f32.mxu0 0.0
      %2671 = vmatmul.mubr.f32.gmra.mxu0 %v1227
      %v2672 = vpop.f32.mrf.mxu0
      %v2673 = vadd.f32 0.0, %v2672
      %v2674 = vpop.f32.mrf.mxu0
      %2675 = vmatprep.mubr.f32.mxu0 0.0
      %2676 = vmatmul.mubr.f32.gmra.mxu0 %v1230
      %v2677 = vpop.f32.mrf.mxu0
      %v2678 = vadd.f32 0.0, %v2677
      %v2679 = vpop.f32.mrf.mxu0
      %2680 = vmatprep.mubr.f32.mxu0 0.0
      %2681 = vmatmul.mubr.f32.gmra.mxu0 %v1233
      %v2682 = vpop.f32.mrf.mxu0
      %v2683 = vadd.f32 0.0, %v2682
      %v2684 = vpop.f32.mrf.mxu0
      %2685 = vmatprep.mubr.f32.mxu0 0.0
      %2686 = vmatmul.mubr.f32.gmra.mxu0 %v1236
      %v2687 = vpop.f32.mrf.mxu0
      %v2688 = vadd.f32 0.0, %v2687
      %v2689 = vpop.f32.mrf.mxu0
      %2690 = vmatprep.mubr.f32.mxu0 0.0
      %2691 = vmatmul.mubr.f32.gmra.mxu0 %v1239
      %v2692 = vpop.f32.mrf.mxu0
      %v2693 = vadd.f32 0.0, %v2692
      %v2694 = vpop.f32.mrf.mxu0
      %2695 = vmatprep.mubr.f32.mxu0 0.0
      %2696 = vmatmul.mubr.f32.gmra.mxu0 %v1242
      %v2697 = vpop.f32.mrf.mxu0
      %v2698 = vadd.f32 0.0, %v2697
      %v2699 = vpop.f32.mrf.mxu0
      %2700 = vmatprep.mubr.f32.mxu0 0.0
      %2701 = vmatmul.mubr.f32.gmra.mxu0 %v1245
      %v2702 = vpop.f32.mrf.mxu0
      %v2703 = vadd.f32 0.0, %v2702
      %v2704 = vpop.f32.mrf.mxu0
      %2705 = vmatprep.mubr.f32.mxu0 0.0
      %2706 = vmatmul.mubr.f32.gmra.mxu0 %v1248
      %v2707 = vpop.f32.mrf.mxu0
      %v2708 = vadd.f32 0.0, %v2707
      %v2709 = vpop.f32.mrf.mxu0
      %2710 = vmatprep.mubr.f32.mxu0 0.0
      %2711 = vmatmul.mubr.f32.gmra.mxu0 %v1251
      %v2712 = vpop.f32.mrf.mxu0
      %v2713 = vadd.f32 0.0, %v2712
      %v2714 = vpop.f32.mrf.mxu0
      %2715 = vmatprep.mubr.f32.mxu0 0.0
      %2716 = vmatmul.mubr.f32.gmra.mxu0 %v1254
      %v2717 = vpop.f32.mrf.mxu0
      %v2718 = vadd.f32 0.0, %v2717
      %v2719 = vpop.f32.mrf.mxu0
      %2720 = vmatprep.mubr.f32.mxu0 0.0
      %2721 = vmatmul.mubr.f32.gmra.mxu0 %v1257
      %v2722 = vpop.f32.mrf.mxu0
      %v2723 = vadd.f32 0.0, %v2722
      %v2724 = vpop.f32.mrf.mxu0
      %2725 = vmatprep.mubr.f32.mxu0 0.0
      %2726 = vmatmul.mubr.f32.gmra.mxu0 %v1260
      %v2727 = vpop.f32.mrf.mxu0
      %v2728 = vadd.f32 0.0, %v2727
      %v2729 = vpop.f32.mrf.mxu0
      %2730 = vmatprep.mubr.f32.mxu0 0.0
      %2731 = vmatmul.mubr.f32.gmra.mxu0 %v1263
      %v2732 = vpop.f32.mrf.mxu0
      %v2733 = vadd.f32 0.0, %v2732
      %v2734 = vpop.f32.mrf.mxu0
      %2735 = vmatprep.mubr.f32.mxu0 0.0
      %2736 = vmatmul.mubr.f32.gmra.mxu0 %v1266
      %v2737 = vpop.f32.mrf.mxu0
      %v2738 = vadd.f32 0.0, %v2737
      %v2739 = vpop.f32.mrf.mxu0
      %2740 = vmatprep.mubr.f32.mxu0 0.0
      %2741 = vmatmul.mubr.f32.gmra.mxu0 %v1269
      %v2742 = vpop.f32.mrf.mxu0
      %v2743 = vadd.f32 0.0, %v2742
      %v2744 = vpop.f32.mrf.mxu0
      %2745 = vmatprep.mubr.f32.mxu0 0.0
      %2746 = vmatmul.mubr.f32.gmra.mxu0 %v1272
      %v2747 = vpop.f32.mrf.mxu0
      %v2748 = vadd.f32 0.0, %v2747
      %v2749 = vpop.f32.mrf.mxu0
      %2750 = vmatprep.mubr.f32.mxu0 0.0
      %2751 = vmatmul.mubr.f32.gmra.mxu0 %v1275
      %v2752 = vpop.f32.mrf.mxu0
      %v2753 = vadd.f32 0.0, %v2752
      %v2754 = vpop.f32.mrf.mxu0
      %2755 = vmatprep.mubr.f32.mxu0 0.0
      %2756 = vmatmul.mubr.f32.gmra.mxu0 %v1278
      %v2757 = vpop.f32.mrf.mxu0
      %v2758 = vadd.f32 0.0, %v2757
      %v2759 = vpop.f32.mrf.mxu0
      %2760 = vmatprep.mubr.f32.mxu0 0.0
      %2761 = vmatmul.mubr.f32.gmra.mxu0 %v1281
      %v2762 = vpop.f32.mrf.mxu0
      %v2763 = vadd.f32 0.0, %v2762
      %v2764 = vpop.f32.mrf.mxu0
      %2765 = vmatprep.mubr.f32.mxu0 0.0
      %2766 = vmatmul.mubr.f32.gmra.mxu0 %v1284
      %v2767 = vpop.f32.mrf.mxu0
      %v2768 = vadd.f32 0.0, %v2767
      %v2769 = vpop.f32.mrf.mxu0
      %2770 = vmatprep.mubr.f32.mxu0 0.0
      %2771 = vmatmul.mubr.f32.gmra.mxu0 %v1287
      %v2772 = vpop.f32.mrf.mxu0
      %v2773 = vadd.f32 0.0, %v2772
      %v2774 = vpop.f32.mrf.mxu0
      %2775 = vmatprep.mubr.f32.mxu0 0.0
      %2776 = vmatmul.mubr.f32.gmra.mxu0 %v1290
      %v2777 = vpop.f32.mrf.mxu0
      %v2778 = vadd.f32 0.0, %v2777
      %v2779 = vpop.f32.mrf.mxu0
      %2780 = vmatprep.mubr.f32.mxu0 0.0
      %2781 = vmatmul.mubr.f32.gmra.mxu0 %v1293
      %v2782 = vpop.f32.mrf.mxu0
      %v2783 = vadd.f32 0.0, %v2782
      %v2784 = vpop.f32.mrf.mxu0
      %2785 = vmatprep.mubr.f32.mxu0 0.0
      %2786 = vmatmul.mubr.f32.gmra.mxu0 %v1296
      %v2787 = vpop.f32.mrf.mxu0
      %v2788 = vadd.f32 0.0, %v2787
      %v2789 = vpop.f32.mrf.mxu0
      %2790 = vmatprep.mubr.f32.mxu0 0.0
      %2791 = vmatmul.mubr.f32.gmra.mxu0 %v1299
      %v2792 = vpop.f32.mrf.mxu0
      %v2793 = vadd.f32 0.0, %v2792
      %v2794 = vpop.f32.mrf.mxu0
      %2795 = vmatprep.mubr.f32.mxu0 0.0
      %2796 = vmatmul.mubr.f32.gmra.mxu0 %v1302
      %v2797 = vpop.f32.mrf.mxu0
      %v2798 = vadd.f32 0.0, %v2797
      %v2799 = vpop.f32.mrf.mxu0
      %2800 = vmatprep.mubr.f32.mxu0 0.0
      %2801 = vmatmul.mubr.f32.gmra.mxu0 %v1305
      %v2802 = vpop.f32.mrf.mxu0
      %v2803 = vadd.f32 0.0, %v2802
      %v2804 = vpop.f32.mrf.mxu0
      %2805 = vmatprep.mubr.f32.mxu0 0.0
      %2806 = vmatmul.mubr.f32.gmra.mxu0 %v1308
      %v2807 = vpop.f32.mrf.mxu0
      %v2808 = vadd.f32 0.0, %v2807
      %v2809 = vpop.f32.mrf.mxu0
      %2810 = vmatprep.mubr.f32.mxu0 0.0
      %2811 = vmatmul.mubr.f32.gmra.mxu0 %v1311
      %v2812 = vpop.f32.mrf.mxu0
      %v2813 = vadd.f32 0.0, %v2812
      %v2814 = vpop.f32.mrf.mxu0
      %2815 = vmatprep.mubr.f32.mxu0 0.0
      %2816 = vmatmul.mubr.f32.gmra.mxu0 %v1314
      %v2817 = vpop.f32.mrf.mxu0
      %v2818 = vadd.f32 0.0, %v2817
      %v2819 = vpop.f32.mrf.mxu0
      %2820 = vmatprep.mubr.f32.mxu0 0.0
      %2821 = vmatmul.mubr.f32.gmra.mxu0 %v1317
      %v2822 = vpop.f32.mrf.mxu0
      %v2823 = vadd.f32 0.0, %v2822
      %v2824 = vpop.f32.mrf.mxu0
      %2825 = vmatprep.mubr.f32.mxu0 0.0
      %2826 = vmatmul.mubr.f32.gmra.mxu0 %v1320
      %v2827 = vpop.f32.mrf.mxu0
      %v2828 = vadd.f32 0.0, %v2827
      %v2829 = vpop.f32.mrf.mxu0
      %2830 = vmatprep.mubr.f32.mxu0 0.0
      %2831 = vmatmul.mubr.f32.gmra.mxu0 %v1323
      %v2832 = vpop.f32.mrf.mxu0
      %v2833 = vadd.f32 0.0, %v2832
      %v2834 = vpop.f32.mrf.mxu0
      %2835 = vmatprep.mubr.f32.mxu0 0.0
      %2836 = vmatmul.mubr.f32.gmra.mxu0 %v1326
      %v2837 = vpop.f32.mrf.mxu0
      %v2838 = vadd.f32 0.0, %v2837
      %v2839 = vpop.f32.mrf.mxu0
      %2840 = vmatprep.mubr.f32.mxu0 0.0
      %2841 = vmatmul.mubr.f32.gmra.mxu0 %v1329
      %v2842 = vpop.f32.mrf.mxu0
      %v2843 = vadd.f32 0.0, %v2842
      %v2844 = vpop.f32.mrf.mxu0
      %2845 = vmatprep.mubr.f32.mxu0 0.0
      %2846 = vmatmul.mubr.f32.gmra.mxu0 %v1332
      %v2847 = vpop.f32.mrf.mxu0
      %v2848 = vadd.f32 0.0, %v2847
      %v2849 = vpop.f32.mrf.mxu0
      %2850 = vmatprep.mubr.f32.mxu0 0.0
      %2851 = vmatmul.mubr.f32.gmra.mxu0 %v1335
      %v2852 = vpop.f32.mrf.mxu0
      %v2853 = vadd.f32 0.0, %v2852
      %v2854 = vpop.f32.mrf.mxu0
      %2855 = vmatprep.mubr.f32.mxu0 0.0
      %2856 = vmatmul.mubr.f32.gmra.mxu0 %v1338
      %v2857 = vpop.f32.mrf.mxu0
      %v2858 = vadd.f32 0.0, %v2857
      %v2859 = vpop.f32.mrf.mxu0
      %2860 = vmatprep.mubr.f32.mxu0 0.0
      %2861 = vmatmul.mubr.f32.gmra.mxu0 %v1341
      %v2862 = vpop.f32.mrf.mxu0
      %v2863 = vadd.f32 0.0, %v2862
      %v2864 = vpop.f32.mrf.mxu0
      %2865 = vmatprep.mubr.f32.mxu0 0.0
      %2866 = vmatmul.mubr.f32.gmra.mxu0 %v1344
      %v2867 = vpop.f32.mrf.mxu0
      %v2868 = vadd.f32 0.0, %v2867
      %v2869 = vpop.f32.mrf.mxu0
      %2870 = vmatprep.mubr.f32.mxu0 0.0
      %2871 = vmatmul.mubr.f32.gmra.mxu0 %v1347
      %v2872 = vpop.f32.mrf.mxu0
      %v2873 = vadd.f32 0.0, %v2872
      %v2874 = vpop.f32.mrf.mxu0
      %2875 = vmatprep.mubr.f32.mxu0 0.0
      %2876 = vmatmul.mubr.f32.gmra.mxu0 %v1350
      %v2877 = vpop.f32.mrf.mxu0
      %v2878 = vadd.f32 0.0, %v2877
      %v2879 = vpop.f32.mrf.mxu0
      %2880 = vmatprep.mubr.f32.mxu0 0.0
      %2881 = vmatmul.mubr.f32.gmra.mxu0 %v1353
      %v2882 = vpop.f32.mrf.mxu0
      %v2883 = vadd.f32 0.0, %v2882
      %v2884 = vpop.f32.mrf.mxu0
      %2885 = vmatprep.mubr.f32.mxu0 0.0
      %2886 = vmatmul.mubr.f32.gmra.mxu0 %v1356
      %v2887 = vpop.f32.mrf.mxu0
      %v2888 = vadd.f32 0.0, %v2887
      %v2889 = vpop.f32.mrf.mxu0
      %2890 = vmatprep.mubr.f32.mxu0 0.0
      %2891 = vmatmul.mubr.f32.gmra.mxu0 %v1359
      %v2892 = vpop.f32.mrf.mxu0
      %v2893 = vadd.f32 0.0, %v2892
      %v2894 = vpop.f32.mrf.mxu0
      %2895 = vmatprep.mubr.f32.mxu0 0.0
      %2896 = vmatmul.mubr.f32.gmra.mxu0 %v1362
      %v2897 = vpop.f32.mrf.mxu0
      %v2898 = vadd.f32 0.0, %v2897
      %v2899 = vpop.f32.mrf.mxu0
      %2900 = vmatprep.mubr.f32.mxu0 0.0
      %2901 = vmatmul.mubr.f32.gmra.mxu0 %v1365
      %v2902 = vpop.f32.mrf.mxu0
      %v2903 = vadd.f32 0.0, %v2902
      %v2904 = vpop.f32.mrf.mxu0
      %2905 = vmatprep.mubr.f32.mxu0 0.0
      %2906 = vmatmul.mubr.f32.gmra.mxu0 %v1368
      %v2907 = vpop.f32.mrf.mxu0
      %v2908 = vadd.f32 0.0, %v2907
      %v2909 = vpop.f32.mrf.mxu0
      %2910 = vmatprep.mubr.f32.mxu0 0.0
      %2911 = vmatmul.mubr.f32.gmra.mxu0 %v1371
      %v2912 = vpop.f32.mrf.mxu0
      %v2913 = vadd.f32 0.0, %v2912
      %v2914 = vpop.f32.mrf.mxu0
      %2915 = vmatprep.mubr.f32.mxu0 0.0
      %2916 = vmatmul.mubr.f32.gmra.mxu0 %v1374
      %v2917 = vpop.f32.mrf.mxu0
      %v2918 = vadd.f32 0.0, %v2917
      %v2919 = vpop.f32.mrf.mxu0
      %2920 = vmatprep.mubr.f32.mxu0 0.0
      %2921 = vmatmul.mubr.f32.gmra.mxu0 %v1377
      %v2922 = vpop.f32.mrf.mxu0
      %v2923 = vadd.f32 0.0, %v2922
      %v2924 = vpop.f32.mrf.mxu0
      %2925 = vmatprep.mubr.f32.mxu0 0.0
      %2926 = vmatmul.mubr.f32.gmra.mxu0 %v1380
      %v2927 = vpop.f32.mrf.mxu0
      %v2928 = vadd.f32 0.0, %v2927
      %v2929 = vpop.f32.mrf.mxu0
      %2930 = vmatprep.mubr.f32.mxu0 0.0
      %2931 = vmatmul.mubr.f32.gmra.mxu0 %v1383
      %v2932 = vpop.f32.mrf.mxu0
      %v2933 = vadd.f32 0.0, %v2932
      %v2934 = vpop.f32.mrf.mxu0
      %2935 = vmatprep.mubr.f32.mxu0 0.0
      %2936 = vmatmul.mubr.f32.gmra.mxu0 %v1386
      %v2937 = vpop.f32.mrf.mxu0
      %v2938 = vadd.f32 0.0, %v2937
      %v2939 = vpop.f32.mrf.mxu0
      %2940 = vmatprep.mubr.f32.mxu0 0.0
      %2941 = vmatmul.mubr.f32.gmra.mxu0 %v1389
      %v2942 = vpop.f32.mrf.mxu0
      %v2943 = vadd.f32 0.0, %v2942
      %v2944 = vpop.f32.mrf.mxu0
      %2945 = vmatprep.mubr.f32.mxu0 0.0
      %2946 = vmatmul.mubr.f32.gmra.mxu0 %v1392
      %v2947 = vpop.f32.mrf.mxu0
      %v2948 = vadd.f32 0.0, %v2947
      %v2949 = vpop.f32.mrf.mxu0
      %2950 = vmatprep.mubr.f32.mxu0 0.0
      %2951 = vmatmul.mubr.f32.gmra.mxu0 %v1395
      %v2952 = vpop.f32.mrf.mxu0
      %v2953 = vadd.f32 0.0, %v2952
      %v2954 = vpop.f32.mrf.mxu0
      %2955 = vmatprep.mubr.f32.mxu0 0.0
      %2956 = vmatmul.mubr.f32.gmra.mxu0 %v1398
      %v2957 = vpop.f32.mrf.mxu0
      %v2958 = vadd.f32 0.0, %v2957
      %v2959 = vpop.f32.mrf.mxu0
      %2960 = vmatprep.mubr.f32.mxu0 0.0
      %2961 = vmatmul.mubr.f32.gmra.mxu0 %v1401
      %v2962 = vpop.f32.mrf.mxu0
      %v2963 = vadd.f32 0.0, %v2962
      %v2964 = vpop.f32.mrf.mxu0
      %2965 = vmatprep.mubr.f32.mxu0 0.0
      %2966 = vmatmul.mubr.f32.gmra.mxu0 %v1404
      %v2967 = vpop.f32.mrf.mxu0
      %v2968 = vadd.f32 0.0, %v2967
      %v2969 = vpop.f32.mrf.mxu0
      %2970 = vmatprep.mubr.f32.mxu0 0.0
      %2971 = vmatmul.mubr.f32.gmra.mxu0 %v1407
      %v2972 = vpop.f32.mrf.mxu0
      %v2973 = vadd.f32 0.0, %v2972
      %v2974 = vpop.f32.mrf.mxu0
      %2975 = vmatprep.mubr.f32.mxu0 0.0
      %2976 = vmatmul.mubr.f32.gmra.mxu0 %v1410
      %v2977 = vpop.f32.mrf.mxu0
      %v2978 = vadd.f32 0.0, %v2977
      %v2979 = vpop.f32.mrf.mxu0
      %2980 = vdwg.mxu0
      %v2981 = vld [vmem:[%s2] sm:$0x1]
      %v2983 = vlaneseq
      %v2984 = vshrl.u32 %v2983, 7
      %v2985 = vsub.s32 0, %v2984
      %v2986 = vrot.slane %v2981, %v2985
      %v2988 = vmul.f32 %v1483, %v2986
      %v2989 = vmul.f32 %v1488, %v2986
      %v2990 = vmul.f32 %v1493, %v2986
      %v2991 = vmul.f32 %v1498, %v2986
      %v2992 = vmul.f32 %v1503, %v2986
      %v2993 = vmul.f32 %v1508, %v2986
      %v2994 = vmul.f32 %v1513, %v2986
      %v2995 = vmul.f32 %v1518, %v2986
      %v2996 = vmul.f32 %v1523, %v2986
      %v2997 = vmul.f32 %v1528, %v2986
      %v2998 = vmul.f32 %v1533, %v2986
      %v2999 = vmul.f32 %v1538, %v2986
      %v3000 = vmul.f32 %v1543, %v2986
      %v3001 = vmul.f32 %v1548, %v2986
      %v3002 = vmul.f32 %v1553, %v2986
      %v3003 = vmul.f32 %v1558, %v2986
      %v3004 = vmul.f32 %v1563, %v2986
      %v3005 = vmul.f32 %v1568, %v2986
      %v3006 = vmul.f32 %v1573, %v2986
      %v3007 = vmul.f32 %v1578, %v2986
      %v3008 = vmul.f32 %v1583, %v2986
      %v3009 = vmul.f32 %v1588, %v2986
      %v3010 = vmul.f32 %v1593, %v2986
      %v3011 = vmul.f32 %v1598, %v2986
      %v3012 = vmul.f32 %v1603, %v2986
      %v3013 = vmul.f32 %v1608, %v2986
      %v3014 = vmul.f32 %v1613, %v2986
      %v3015 = vmul.f32 %v1618, %v2986
      %v3016 = vmul.f32 %v1623, %v2986
      %v3017 = vmul.f32 %v1628, %v2986
      %v3018 = vmul.f32 %v1633, %v2986
      %v3019 = vmul.f32 %v1638, %v2986
      %v3020 = vmul.f32 %v1643, %v2986
      %v3021 = vmul.f32 %v1648, %v2986
      %v3022 = vmul.f32 %v1653, %v2986
      %v3023 = vmul.f32 %v1658, %v2986
      %v3024 = vmul.f32 %v1663, %v2986
      %v3025 = vmul.f32 %v1668, %v2986
      %v3026 = vmul.f32 %v1673, %v2986
      %v3027 = vmul.f32 %v1678, %v2986
      %v3028 = vmul.f32 %v1683, %v2986
      %v3029 = vmul.f32 %v1688, %v2986
      %v3030 = vmul.f32 %v1693, %v2986
      %v3031 = vmul.f32 %v1698, %v2986
      %v3032 = vmul.f32 %v1703, %v2986
      %v3033 = vmul.f32 %v1708, %v2986
      %v3034 = vmul.f32 %v1713, %v2986
      %v3035 = vmul.f32 %v1718, %v2986
      %v3036 = vmul.f32 %v1723, %v2986
      %v3037 = vmul.f32 %v1728, %v2986
      %v3038 = vmul.f32 %v1733, %v2986
      %v3039 = vmul.f32 %v1738, %v2986
      %v3040 = vmul.f32 %v1743, %v2986
      %v3041 = vmul.f32 %v1748, %v2986
      %v3042 = vmul.f32 %v1753, %v2986
      %v3043 = vmul.f32 %v1758, %v2986
      %v3044 = vmul.f32 %v1763, %v2986
      %v3045 = vmul.f32 %v1768, %v2986
      %v3046 = vmul.f32 %v1773, %v2986
      %v3047 = vmul.f32 %v1778, %v2986
      %v3048 = vmul.f32 %v1783, %v2986
      %v3049 = vmul.f32 %v1788, %v2986
      %v3050 = vmul.f32 %v1793, %v2986
      %v3051 = vmul.f32 %v1798, %v2986
      %v3052 = vmul.f32 %v1803, %v2986
      %v3053 = vmul.f32 %v1808, %v2986
      %v3054 = vmul.f32 %v1813, %v2986
      %v3055 = vmul.f32 %v1818, %v2986
      %v3056 = vmul.f32 %v1823, %v2986
      %v3057 = vmul.f32 %v1828, %v2986
      %v3058 = vmul.f32 %v1833, %v2986
      %v3059 = vmul.f32 %v1838, %v2986
      %v3060 = vmul.f32 %v1843, %v2986
      %v3061 = vmul.f32 %v1848, %v2986
      %v3062 = vmul.f32 %v1853, %v2986
      %v3063 = vmul.f32 %v1858, %v2986
      %v3064 = vmul.f32 %v1863, %v2986
      %v3065 = vmul.f32 %v1868, %v2986
      %v3066 = vmul.f32 %v1873, %v2986
      %v3067 = vmul.f32 %v1878, %v2986
      %v3068 = vmul.f32 %v1883, %v2986
      %v3069 = vmul.f32 %v1888, %v2986
      %v3070 = vmul.f32 %v1893, %v2986
      %v3071 = vmul.f32 %v1898, %v2986
      %v3072 = vmul.f32 %v1903, %v2986
      %v3073 = vmul.f32 %v1908, %v2986
      %v3074 = vmul.f32 %v1913, %v2986
      %v3075 = vmul.f32 %v1918, %v2986
      %v3076 = vmul.f32 %v1923, %v2986
      %v3077 = vmul.f32 %v1928, %v2986
      %v3078 = vmul.f32 %v1933, %v2986
      %v3079 = vmul.f32 %v1938, %v2986
      %v3080 = vmul.f32 %v1943, %v2986
      %v3081 = vmul.f32 %v1948, %v2986
      %v3082 = vmul.f32 %v1953, %v2986
      %v3083 = vmul.f32 %v1958, %v2986
      %v3084 = vmul.f32 %v1963, %v2986
      %v3085 = vmul.f32 %v1968, %v2986
      %v3086 = vmul.f32 %v1973, %v2986
      %v3087 = vmul.f32 %v1978, %v2986
      %v3088 = vmul.f32 %v1983, %v2986
      %v3089 = vmul.f32 %v1988, %v2986
      %v3090 = vmul.f32 %v1993, %v2986
      %v3091 = vmul.f32 %v1998, %v2986
      %v3092 = vmul.f32 %v2003, %v2986
      %v3093 = vmul.f32 %v2008, %v2986
      %v3094 = vmul.f32 %v2013, %v2986
      %v3095 = vmul.f32 %v2018, %v2986
      %v3096 = vmul.f32 %v2023, %v2986
      %v3097 = vmul.f32 %v2028, %v2986
      %v3098 = vmul.f32 %v2033, %v2986
      %v3099 = vmul.f32 %v2038, %v2986
      %v3100 = vmul.f32 %v2043, %v2986
      %v3101 = vmul.f32 %v2048, %v2986
      %v3102 = vmul.f32 %v2053, %v2986
      %v3103 = vmul.f32 %v2058, %v2986
      %v3104 = vmul.f32 %v2063, %v2986
      %v3105 = vmul.f32 %v2068, %v2986
      %v3106 = vmul.f32 %v2073, %v2986
      %v3107 = vmul.f32 %v2078, %v2986
      %v3108 = vmul.f32 %v2083, %v2986
      %v3109 = vmul.f32 %v2088, %v2986
      %v3110 = vmul.f32 %v2093, %v2986
      %v3111 = vmul.f32 %v2098, %v2986
      %v3112 = vmul.f32 %v2103, %v2986
      %v3113 = vmul.f32 %v2108, %v2986
      %v3114 = vmul.f32 %v2113, %v2986
      %v3115 = vmul.f32 %v2118, %v2986
      %v3116 = vmul.f32 %v2123, %v2986
      %v3117 = vmul.f32 %v2128, %v2986
      %v3118 = vmul.f32 %v2133, %v2986
      %v3119 = vmul.f32 %v2138, %v2986
      %v3120 = vmul.f32 %v2143, %v2986
      %v3121 = vmul.f32 %v2148, %v2986
      %v3122 = vmul.f32 %v2153, %v2986
      %v3123 = vmul.f32 %v2158, %v2986
      %v3124 = vmul.f32 %v2163, %v2986
      %v3125 = vmul.f32 %v2168, %v2986
      %v3126 = vmul.f32 %v2173, %v2986
      %v3127 = vmul.f32 %v2178, %v2986
      %v3128 = vmul.f32 %v2183, %v2986
      %v3129 = vmul.f32 %v2188, %v2986
      %v3130 = vmul.f32 %v2193, %v2986
      %v3131 = vmul.f32 %v2198, %v2986
      %v3132 = vmul.f32 %v2203, %v2986
      %v3133 = vmul.f32 %v2208, %v2986
      %v3134 = vmul.f32 %v2213, %v2986
      %v3135 = vmul.f32 %v2218, %v2986
      %v3136 = vmul.f32 %v2223, %v2986
      %v3137 = vmul.f32 %v2228, %v2986
      %v3138 = vmul.f32 %v2233, %v2986
      %v3139 = vmul.f32 %v2238, %v2986
      %v3140 = vmul.f32 %v2243, %v2986
      %v3141 = vmul.f32 %v2248, %v2986
      %v3142 = vmul.f32 %v2253, %v2986
      %v3143 = vmul.f32 %v2258, %v2986
      %v3144 = vmul.f32 %v2263, %v2986
      %v3145 = vmul.f32 %v2268, %v2986
      %v3146 = vmul.f32 %v2273, %v2986
      %v3147 = vmul.f32 %v2278, %v2986
      %v3148 = vmul.f32 %v2283, %v2986
      %v3149 = vmul.f32 %v2288, %v2986
      %v3150 = vmul.f32 %v2293, %v2986
      %v3151 = vmul.f32 %v2298, %v2986
      %v3152 = vmul.f32 %v2303, %v2986
      %v3153 = vmul.f32 %v2308, %v2986
      %v3154 = vmul.f32 %v2313, %v2986
      %v3155 = vmul.f32 %v2318, %v2986
      %v3156 = vmul.f32 %v2323, %v2986
      %v3157 = vmul.f32 %v2328, %v2986
      %v3158 = vmul.f32 %v2333, %v2986
      %v3159 = vmul.f32 %v2338, %v2986
      %v3160 = vmul.f32 %v2343, %v2986
      %v3161 = vmul.f32 %v2348, %v2986
      %v3162 = vmul.f32 %v2353, %v2986
      %v3163 = vmul.f32 %v2358, %v2986
      %v3164 = vmul.f32 %v2363, %v2986
      %v3165 = vmul.f32 %v2368, %v2986
      %v3166 = vmul.f32 %v2373, %v2986
      %v3167 = vmul.f32 %v2378, %v2986
      %v3168 = vmul.f32 %v2383, %v2986
      %v3169 = vmul.f32 %v2388, %v2986
      %v3170 = vmul.f32 %v2393, %v2986
      %v3171 = vmul.f32 %v2398, %v2986
      %v3172 = vmul.f32 %v2403, %v2986
      %v3173 = vmul.f32 %v2408, %v2986
      %v3174 = vmul.f32 %v2413, %v2986
      %v3175 = vmul.f32 %v2418, %v2986
      %v3176 = vmul.f32 %v2423, %v2986
      %v3177 = vmul.f32 %v2428, %v2986
      %v3178 = vmul.f32 %v2433, %v2986
      %v3179 = vmul.f32 %v2438, %v2986
      %v3180 = vmul.f32 %v2443, %v2986
      %v3181 = vmul.f32 %v2448, %v2986
      %v3182 = vmul.f32 %v2453, %v2986
      %v3183 = vmul.f32 %v2458, %v2986
      %v3184 = vmul.f32 %v2463, %v2986
      %v3185 = vmul.f32 %v2468, %v2986
      %v3186 = vmul.f32 %v2473, %v2986
      %v3187 = vmul.f32 %v2478, %v2986
      %v3188 = vmul.f32 %v2483, %v2986
      %v3189 = vmul.f32 %v2488, %v2986
      %v3190 = vmul.f32 %v2493, %v2986
      %v3191 = vmul.f32 %v2498, %v2986
      %v3192 = vmul.f32 %v2503, %v2986
      %v3193 = vmul.f32 %v2508, %v2986
      %v3194 = vmul.f32 %v2513, %v2986
      %v3195 = vmul.f32 %v2518, %v2986
      %v3196 = vmul.f32 %v2523, %v2986
      %v3197 = vmul.f32 %v2528, %v2986
      %v3198 = vmul.f32 %v2533, %v2986
      %v3199 = vmul.f32 %v2538, %v2986
      %v3200 = vmul.f32 %v2543, %v2986
      %v3201 = vmul.f32 %v2548, %v2986
      %v3202 = vmul.f32 %v2553, %v2986
      %v3203 = vmul.f32 %v2558, %v2986
      %v3204 = vmul.f32 %v2563, %v2986
      %v3205 = vmul.f32 %v2568, %v2986
      %v3206 = vmul.f32 %v2573, %v2986
      %v3207 = vmul.f32 %v2578, %v2986
      %v3208 = vmul.f32 %v2583, %v2986
      %v3209 = vmul.f32 %v2588, %v2986
      %v3210 = vmul.f32 %v2593, %v2986
      %v3211 = vmul.f32 %v2598, %v2986
      %v3212 = vmul.f32 %v2603, %v2986
      %v3213 = vmul.f32 %v2608, %v2986
      %v3214 = vmul.f32 %v2613, %v2986
      %v3215 = vmul.f32 %v2618, %v2986
      %v3216 = vmul.f32 %v2623, %v2986
      %v3217 = vmul.f32 %v2628, %v2986
      %v3218 = vmul.f32 %v2633, %v2986
      %v3219 = vmul.f32 %v2638, %v2986
      %v3220 = vmul.f32 %v2643, %v2986
      %v3221 = vmul.f32 %v2648, %v2986
      %v3222 = vmul.f32 %v2653, %v2986
      %v3223 = vmul.f32 %v2658, %v2986
      %v3224 = vmul.f32 %v2663, %v2986
      %v3225 = vmul.f32 %v2668, %v2986
      %v3226 = vmul.f32 %v2673, %v2986
      %v3227 = vmul.f32 %v2678, %v2986
      %v3228 = vmul.f32 %v2683, %v2986
      %v3229 = vmul.f32 %v2688, %v2986
      %v3230 = vmul.f32 %v2693, %v2986
      %v3231 = vmul.f32 %v2698, %v2986
      %v3232 = vmul.f32 %v2703, %v2986
      %v3233 = vmul.f32 %v2708, %v2986
      %v3234 = vmul.f32 %v2713, %v2986
      %v3235 = vmul.f32 %v2718, %v2986
      %v3236 = vmul.f32 %v2723, %v2986
      %v3237 = vmul.f32 %v2728, %v2986
      %v3238 = vmul.f32 %v2733, %v2986
      %v3239 = vmul.f32 %v2738, %v2986
      %v3240 = vmul.f32 %v2743, %v2986
      %v3241 = vmul.f32 %v2748, %v2986
      %v3242 = vmul.f32 %v2753, %v2986
      %v3243 = vmul.f32 %v2758, %v2986
      %v3244 = vmul.f32 %v2763, %v2986
      %v3245 = vmul.f32 %v2768, %v2986
      %v3246 = vmul.f32 %v2773, %v2986
      %v3247 = vmul.f32 %v2778, %v2986
      %v3248 = vmul.f32 %v2783, %v2986
      %v3249 = vmul.f32 %v2788, %v2986
      %v3250 = vmul.f32 %v2793, %v2986
      %v3251 = vmul.f32 %v2798, %v2986
      %v3252 = vmul.f32 %v2803, %v2986
      %v3253 = vmul.f32 %v2808, %v2986
      %v3254 = vmul.f32 %v2813, %v2986
      %v3255 = vmul.f32 %v2818, %v2986
      %v3256 = vmul.f32 %v2823, %v2986
      %v3257 = vmul.f32 %v2828, %v2986
      %v3258 = vmul.f32 %v2833, %v2986
      %v3259 = vmul.f32 %v2838, %v2986
      %v3260 = vmul.f32 %v2843, %v2986
      %v3261 = vmul.f32 %v2848, %v2986
      %v3262 = vmul.f32 %v2853, %v2986
      %v3263 = vmul.f32 %v2858, %v2986
      %v3264 = vmul.f32 %v2863, %v2986
      %v3265 = vmul.f32 %v2868, %v2986
      %v3266 = vmul.f32 %v2873, %v2986
      %v3267 = vmul.f32 %v2878, %v2986
      %v3268 = vmul.f32 %v2883, %v2986
      %v3269 = vmul.f32 %v2888, %v2986
      %v3270 = vmul.f32 %v2893, %v2986
      %v3271 = vmul.f32 %v2898, %v2986
      %v3272 = vmul.f32 %v2903, %v2986
      %v3273 = vmul.f32 %v2908, %v2986
      %v3274 = vmul.f32 %v2913, %v2986
      %v3275 = vmul.f32 %v2918, %v2986
      %v3276 = vmul.f32 %v2923, %v2986
      %v3277 = vmul.f32 %v2928, %v2986
      %v3278 = vmul.f32 %v2933, %v2986
      %v3279 = vmul.f32 %v2938, %v2986
      %v3280 = vmul.f32 %v2943, %v2986
      %v3281 = vmul.f32 %v2948, %v2986
      %v3282 = vmul.f32 %v2953, %v2986
      %v3283 = vmul.f32 %v2958, %v2986
      %v3284 = vmul.f32 %v2963, %v2986
      %v3285 = vmul.f32 %v2968, %v2986
      %v3286 = vmul.f32 %v2973, %v2986
      %v3287 = vmul.f32 %v2978, %v2986
      %v3288 = vld [vmem:[%s3] sm:$0x1]
      %v3290 = vlaneseq
      %v3291 = vshrl.u32 %v3290, 7
      %v3292 = vsub.s32 0, %v3291
      %v3293 = vrot.slane %v3288, %v3292
      %v3295 = vadd.f32 %v2988, %v3293
      %v3296 = vadd.f32 %v2989, %v3293
      %v3297 = vadd.f32 %v2990, %v3293
      %v3298 = vadd.f32 %v2991, %v3293
      %v3299 = vadd.f32 %v2992, %v3293
      %v3300 = vadd.f32 %v2993, %v3293
      %v3301 = vadd.f32 %v2994, %v3293
      %v3302 = vadd.f32 %v2995, %v3293
      %v3303 = vadd.f32 %v2996, %v3293
      %v3304 = vadd.f32 %v2997, %v3293
      %v3305 = vadd.f32 %v2998, %v3293
      %v3306 = vadd.f32 %v2999, %v3293
      %v3307 = vadd.f32 %v3000, %v3293
      %v3308 = vadd.f32 %v3001, %v3293
      %v3309 = vadd.f32 %v3002, %v3293
      %v3310 = vadd.f32 %v3003, %v3293
      %v3311 = vadd.f32 %v3004, %v3293
      %v3312 = vadd.f32 %v3005, %v3293
      %v3313 = vadd.f32 %v3006, %v3293
      %v3314 = vadd.f32 %v3007, %v3293
      %v3315 = vadd.f32 %v3008, %v3293
      %v3316 = vadd.f32 %v3009, %v3293
      %v3317 = vadd.f32 %v3010, %v3293
      %v3318 = vadd.f32 %v3011, %v3293
      %v3319 = vadd.f32 %v3012, %v3293
      %v3320 = vadd.f32 %v3013, %v3293
      %v3321 = vadd.f32 %v3014, %v3293
      %v3322 = vadd.f32 %v3015, %v3293
      %v3323 = vadd.f32 %v3016, %v3293
      %v3324 = vadd.f32 %v3017, %v3293
      %v3325 = vadd.f32 %v3018, %v3293
      %v3326 = vadd.f32 %v3019, %v3293
      %v3327 = vadd.f32 %v3020, %v3293
      %v3328 = vadd.f32 %v3021, %v3293
      %v3329 = vadd.f32 %v3022, %v3293
      %v3330 = vadd.f32 %v3023, %v3293
      %v3331 = vadd.f32 %v3024, %v3293
      %v3332 = vadd.f32 %v3025, %v3293
      %v3333 = vadd.f32 %v3026, %v3293
      %v3334 = vadd.f32 %v3027, %v3293
      %v3335 = vadd.f32 %v3028, %v3293
      %v3336 = vadd.f32 %v3029, %v3293
      %v3337 = vadd.f32 %v3030, %v3293
      %v3338 = vadd.f32 %v3031, %v3293
      %v3339 = vadd.f32 %v3032, %v3293
      %v3340 = vadd.f32 %v3033, %v3293
      %v3341 = vadd.f32 %v3034, %v3293
      %v3342 = vadd.f32 %v3035, %v3293
      %v3343 = vadd.f32 %v3036, %v3293
      %v3344 = vadd.f32 %v3037, %v3293
      %v3345 = vadd.f32 %v3038, %v3293
      %v3346 = vadd.f32 %v3039, %v3293
      %v3347 = vadd.f32 %v3040, %v3293
      %v3348 = vadd.f32 %v3041, %v3293
      %v3349 = vadd.f32 %v3042, %v3293
      %v3350 = vadd.f32 %v3043, %v3293
      %v3351 = vadd.f32 %v3044, %v3293
      %v3352 = vadd.f32 %v3045, %v3293
      %v3353 = vadd.f32 %v3046, %v3293
      %v3354 = vadd.f32 %v3047, %v3293
      %v3355 = vadd.f32 %v3048, %v3293
      %v3356 = vadd.f32 %v3049, %v3293
      %v3357 = vadd.f32 %v3050, %v3293
      %v3358 = vadd.f32 %v3051, %v3293
      %v3359 = vadd.f32 %v3052, %v3293
      %v3360 = vadd.f32 %v3053, %v3293
      %v3361 = vadd.f32 %v3054, %v3293
      %v3362 = vadd.f32 %v3055, %v3293
      %v3363 = vadd.f32 %v3056, %v3293
      %v3364 = vadd.f32 %v3057, %v3293
      %v3365 = vadd.f32 %v3058, %v3293
      %v3366 = vadd.f32 %v3059, %v3293
      %v3367 = vadd.f32 %v3060, %v3293
      %v3368 = vadd.f32 %v3061, %v3293
      %v3369 = vadd.f32 %v3062, %v3293
      %v3370 = vadd.f32 %v3063, %v3293
      %v3371 = vadd.f32 %v3064, %v3293
      %v3372 = vadd.f32 %v3065, %v3293
      %v3373 = vadd.f32 %v3066, %v3293
      %v3374 = vadd.f32 %v3067, %v3293
      %v3375 = vadd.f32 %v3068, %v3293
      %v3376 = vadd.f32 %v3069, %v3293
      %v3377 = vadd.f32 %v3070, %v3293
      %v3378 = vadd.f32 %v3071, %v3293
      %v3379 = vadd.f32 %v3072, %v3293
      %v3380 = vadd.f32 %v3073, %v3293
      %v3381 = vadd.f32 %v3074, %v3293
      %v3382 = vadd.f32 %v3075, %v3293
      %v3383 = vadd.f32 %v3076, %v3293
      %v3384 = vadd.f32 %v3077, %v3293
      %v3385 = vadd.f32 %v3078, %v3293
      %v3386 = vadd.f32 %v3079, %v3293
      %v3387 = vadd.f32 %v3080, %v3293
      %v3388 = vadd.f32 %v3081, %v3293
      %v3389 = vadd.f32 %v3082, %v3293
      %v3390 = vadd.f32 %v3083, %v3293
      %v3391 = vadd.f32 %v3084, %v3293
      %v3392 = vadd.f32 %v3085, %v3293
      %v3393 = vadd.f32 %v3086, %v3293
      %v3394 = vadd.f32 %v3087, %v3293
      %v3395 = vadd.f32 %v3088, %v3293
      %v3396 = vadd.f32 %v3089, %v3293
      %v3397 = vadd.f32 %v3090, %v3293
      %v3398 = vadd.f32 %v3091, %v3293
      %v3399 = vadd.f32 %v3092, %v3293
      %v3400 = vadd.f32 %v3093, %v3293
      %v3401 = vadd.f32 %v3094, %v3293
      %v3402 = vadd.f32 %v3095, %v3293
      %v3403 = vadd.f32 %v3096, %v3293
      %v3404 = vadd.f32 %v3097, %v3293
      %v3405 = vadd.f32 %v3098, %v3293
      %v3406 = vadd.f32 %v3099, %v3293
      %v3407 = vadd.f32 %v3100, %v3293
      %v3408 = vadd.f32 %v3101, %v3293
      %v3409 = vadd.f32 %v3102, %v3293
      %v3410 = vadd.f32 %v3103, %v3293
      %v3411 = vadd.f32 %v3104, %v3293
      %v3412 = vadd.f32 %v3105, %v3293
      %v3413 = vadd.f32 %v3106, %v3293
      %v3414 = vadd.f32 %v3107, %v3293
      %v3415 = vadd.f32 %v3108, %v3293
      %v3416 = vadd.f32 %v3109, %v3293
      %v3417 = vadd.f32 %v3110, %v3293
      %v3418 = vadd.f32 %v3111, %v3293
      %v3419 = vadd.f32 %v3112, %v3293
      %v3420 = vadd.f32 %v3113, %v3293
      %v3421 = vadd.f32 %v3114, %v3293
      %v3422 = vadd.f32 %v3115, %v3293
      %v3423 = vadd.f32 %v3116, %v3293
      %v3424 = vadd.f32 %v3117, %v3293
      %v3425 = vadd.f32 %v3118, %v3293
      %v3426 = vadd.f32 %v3119, %v3293
      %v3427 = vadd.f32 %v3120, %v3293
      %v3428 = vadd.f32 %v3121, %v3293
      %v3429 = vadd.f32 %v3122, %v3293
      %v3430 = vadd.f32 %v3123, %v3293
      %v3431 = vadd.f32 %v3124, %v3293
      %v3432 = vadd.f32 %v3125, %v3293
      %v3433 = vadd.f32 %v3126, %v3293
      %v3434 = vadd.f32 %v3127, %v3293
      %v3435 = vadd.f32 %v3128, %v3293
      %v3436 = vadd.f32 %v3129, %v3293
      %v3437 = vadd.f32 %v3130, %v3293
      %v3438 = vadd.f32 %v3131, %v3293
      %v3439 = vadd.f32 %v3132, %v3293
      %v3440 = vadd.f32 %v3133, %v3293
      %v3441 = vadd.f32 %v3134, %v3293
      %v3442 = vadd.f32 %v3135, %v3293
      %v3443 = vadd.f32 %v3136, %v3293
      %v3444 = vadd.f32 %v3137, %v3293
      %v3445 = vadd.f32 %v3138, %v3293
      %v3446 = vadd.f32 %v3139, %v3293
      %v3447 = vadd.f32 %v3140, %v3293
      %v3448 = vadd.f32 %v3141, %v3293
      %v3449 = vadd.f32 %v3142, %v3293
      %v3450 = vadd.f32 %v3143, %v3293
      %v3451 = vadd.f32 %v3144, %v3293
      %v3452 = vadd.f32 %v3145, %v3293
      %v3453 = vadd.f32 %v3146, %v3293
      %v3454 = vadd.f32 %v3147, %v3293
      %v3455 = vadd.f32 %v3148, %v3293
      %v3456 = vadd.f32 %v3149, %v3293
      %v3457 = vadd.f32 %v3150, %v3293
      %v3458 = vadd.f32 %v3151, %v3293
      %v3459 = vadd.f32 %v3152, %v3293
      %v3460 = vadd.f32 %v3153, %v3293
      %v3461 = vadd.f32 %v3154, %v3293
      %v3462 = vadd.f32 %v3155, %v3293
      %v3463 = vadd.f32 %v3156, %v3293
      %v3464 = vadd.f32 %v3157, %v3293
      %v3465 = vadd.f32 %v3158, %v3293
      %v3466 = vadd.f32 %v3159, %v3293
      %v3467 = vadd.f32 %v3160, %v3293
      %v3468 = vadd.f32 %v3161, %v3293
      %v3469 = vadd.f32 %v3162, %v3293
      %v3470 = vadd.f32 %v3163, %v3293
      %v3471 = vadd.f32 %v3164, %v3293
      %v3472 = vadd.f32 %v3165, %v3293
      %v3473 = vadd.f32 %v3166, %v3293
      %v3474 = vadd.f32 %v3167, %v3293
      %v3475 = vadd.f32 %v3168, %v3293
      %v3476 = vadd.f32 %v3169, %v3293
      %v3477 = vadd.f32 %v3170, %v3293
      %v3478 = vadd.f32 %v3171, %v3293
      %v3479 = vadd.f32 %v3172, %v3293
      %v3480 = vadd.f32 %v3173, %v3293
      %v3481 = vadd.f32 %v3174, %v3293
      %v3482 = vadd.f32 %v3175, %v3293
      %v3483 = vadd.f32 %v3176, %v3293
      %v3484 = vadd.f32 %v3177, %v3293
      %v3485 = vadd.f32 %v3178, %v3293
      %v3486 = vadd.f32 %v3179, %v3293
      %v3487 = vadd.f32 %v3180, %v3293
      %v3488 = vadd.f32 %v3181, %v3293
      %v3489 = vadd.f32 %v3182, %v3293
      %v3490 = vadd.f32 %v3183, %v3293
      %v3491 = vadd.f32 %v3184, %v3293
      %v3492 = vadd.f32 %v3185, %v3293
      %v3493 = vadd.f32 %v3186, %v3293
      %v3494 = vadd.f32 %v3187, %v3293
      %v3495 = vadd.f32 %v3188, %v3293
      %v3496 = vadd.f32 %v3189, %v3293
      %v3497 = vadd.f32 %v3190, %v3293
      %v3498 = vadd.f32 %v3191, %v3293
      %v3499 = vadd.f32 %v3192, %v3293
      %v3500 = vadd.f32 %v3193, %v3293
      %v3501 = vadd.f32 %v3194, %v3293
      %v3502 = vadd.f32 %v3195, %v3293
      %v3503 = vadd.f32 %v3196, %v3293
      %v3504 = vadd.f32 %v3197, %v3293
      %v3505 = vadd.f32 %v3198, %v3293
      %v3506 = vadd.f32 %v3199, %v3293
      %v3507 = vadd.f32 %v3200, %v3293
      %v3508 = vadd.f32 %v3201, %v3293
      %v3509 = vadd.f32 %v3202, %v3293
      %v3510 = vadd.f32 %v3203, %v3293
      %v3511 = vadd.f32 %v3204, %v3293
      %v3512 = vadd.f32 %v3205, %v3293
      %v3513 = vadd.f32 %v3206, %v3293
      %v3514 = vadd.f32 %v3207, %v3293
      %v3515 = vadd.f32 %v3208, %v3293
      %v3516 = vadd.f32 %v3209, %v3293
      %v3517 = vadd.f32 %v3210, %v3293
      %v3518 = vadd.f32 %v3211, %v3293
      %v3519 = vadd.f32 %v3212, %v3293
      %v3520 = vadd.f32 %v3213, %v3293
      %v3521 = vadd.f32 %v3214, %v3293
      %v3522 = vadd.f32 %v3215, %v3293
      %v3523 = vadd.f32 %v3216, %v3293
      %v3524 = vadd.f32 %v3217, %v3293
      %v3525 = vadd.f32 %v3218, %v3293
      %v3526 = vadd.f32 %v3219, %v3293
      %v3527 = vadd.f32 %v3220, %v3293
      %v3528 = vadd.f32 %v3221, %v3293
      %v3529 = vadd.f32 %v3222, %v3293
      %v3530 = vadd.f32 %v3223, %v3293
      %v3531 = vadd.f32 %v3224, %v3293
      %v3532 = vadd.f32 %v3225, %v3293
      %v3533 = vadd.f32 %v3226, %v3293
      %v3534 = vadd.f32 %v3227, %v3293
      %v3535 = vadd.f32 %v3228, %v3293
      %v3536 = vadd.f32 %v3229, %v3293
      %v3537 = vadd.f32 %v3230, %v3293
      %v3538 = vadd.f32 %v3231, %v3293
      %v3539 = vadd.f32 %v3232, %v3293
      %v3540 = vadd.f32 %v3233, %v3293
      %v3541 = vadd.f32 %v3234, %v3293
      %v3542 = vadd.f32 %v3235, %v3293
      %v3543 = vadd.f32 %v3236, %v3293
      %v3544 = vadd.f32 %v3237, %v3293
      %v3545 = vadd.f32 %v3238, %v3293
      %v3546 = vadd.f32 %v3239, %v3293
      %v3547 = vadd.f32 %v3240, %v3293
      %v3548 = vadd.f32 %v3241, %v3293
      %v3549 = vadd.f32 %v3242, %v3293
      %v3550 = vadd.f32 %v3243, %v3293
      %v3551 = vadd.f32 %v3244, %v3293
      %v3552 = vadd.f32 %v3245, %v3293
      %v3553 = vadd.f32 %v3246, %v3293
      %v3554 = vadd.f32 %v3247, %v3293
      %v3555 = vadd.f32 %v3248, %v3293
      %v3556 = vadd.f32 %v3249, %v3293
      %v3557 = vadd.f32 %v3250, %v3293
      %v3558 = vadd.f32 %v3251, %v3293
      %v3559 = vadd.f32 %v3252, %v3293
      %v3560 = vadd.f32 %v3253, %v3293
      %v3561 = vadd.f32 %v3254, %v3293
      %v3562 = vadd.f32 %v3255, %v3293
      %v3563 = vadd.f32 %v3256, %v3293
      %v3564 = vadd.f32 %v3257, %v3293
      %v3565 = vadd.f32 %v3258, %v3293
      %v3566 = vadd.f32 %v3259, %v3293
      %v3567 = vadd.f32 %v3260, %v3293
      %v3568 = vadd.f32 %v3261, %v3293
      %v3569 = vadd.f32 %v3262, %v3293
      %v3570 = vadd.f32 %v3263, %v3293
      %v3571 = vadd.f32 %v3264, %v3293
      %v3572 = vadd.f32 %v3265, %v3293
      %v3573 = vadd.f32 %v3266, %v3293
      %v3574 = vadd.f32 %v3267, %v3293
      %v3575 = vadd.f32 %v3268, %v3293
      %v3576 = vadd.f32 %v3269, %v3293
      %v3577 = vadd.f32 %v3270, %v3293
      %v3578 = vadd.f32 %v3271, %v3293
      %v3579 = vadd.f32 %v3272, %v3293
      %v3580 = vadd.f32 %v3273, %v3293
      %v3581 = vadd.f32 %v3274, %v3293
      %v3582 = vadd.f32 %v3275, %v3293
      %v3583 = vadd.f32 %v3276, %v3293
      %v3584 = vadd.f32 %v3277, %v3293
      %v3585 = vadd.f32 %v3278, %v3293
      %v3586 = vadd.f32 %v3279, %v3293
      %v3587 = vadd.f32 %v3280, %v3293
      %v3588 = vadd.f32 %v3281, %v3293
      %v3589 = vadd.f32 %v3282, %v3293
      %v3590 = vadd.f32 %v3283, %v3293
      %v3591 = vadd.f32 %v3284, %v3293
      %v3592 = vadd.f32 %v3285, %v3293
      %v3593 = vadd.f32 %v3286, %v3293
      %v3594 = vadd.f32 %v3287, %v3293
      %v3595 = vmax.f32 %v3295, 0.0
      %v3596 = vmax.f32 %v3296, 0.0
      %v3597 = vmax.f32 %v3297, 0.0
      %v3598 = vmax.f32 %v3298, 0.0
      %v3599 = vmax.f32 %v3299, 0.0
      %v3600 = vmax.f32 %v3300, 0.0
      %v3601 = vmax.f32 %v3301, 0.0
      %v3602 = vmax.f32 %v3302, 0.0
      %v3603 = vmax.f32 %v3303, 0.0
      %v3604 = vmax.f32 %v3304, 0.0
      %v3605 = vmax.f32 %v3305, 0.0
      %v3606 = vmax.f32 %v3306, 0.0
      %v3607 = vmax.f32 %v3307, 0.0
      %v3608 = vmax.f32 %v3308, 0.0
      %v3609 = vmax.f32 %v3309, 0.0
      %v3610 = vmax.f32 %v3310, 0.0
      %v3611 = vmax.f32 %v3311, 0.0
      %v3612 = vmax.f32 %v3312, 0.0
      %v3613 = vmax.f32 %v3313, 0.0
      %v3614 = vmax.f32 %v3314, 0.0
      %v3615 = vmax.f32 %v3315, 0.0
      %v3616 = vmax.f32 %v3316, 0.0
      %v3617 = vmax.f32 %v3317, 0.0
      %v3618 = vmax.f32 %v3318, 0.0
      %v3619 = vmax.f32 %v3319, 0.0
      %v3620 = vmax.f32 %v3320, 0.0
      %v3621 = vmax.f32 %v3321, 0.0
      %v3622 = vmax.f32 %v3322, 0.0
      %v3623 = vmax.f32 %v3323, 0.0
      %v3624 = vmax.f32 %v3324, 0.0
      %v3625 = vmax.f32 %v3325, 0.0
      %v3626 = vmax.f32 %v3326, 0.0
      %v3627 = vmax.f32 %v3327, 0.0
      %v3628 = vmax.f32 %v3328, 0.0
      %v3629 = vmax.f32 %v3329, 0.0
      %v3630 = vmax.f32 %v3330, 0.0
      %v3631 = vmax.f32 %v3331, 0.0
      %v3632 = vmax.f32 %v3332, 0.0
      %v3633 = vmax.f32 %v3333, 0.0
      %v3634 = vmax.f32 %v3334, 0.0
      %v3635 = vmax.f32 %v3335, 0.0
      %v3636 = vmax.f32 %v3336, 0.0
      %v3637 = vmax.f32 %v3337, 0.0
      %v3638 = vmax.f32 %v3338, 0.0
      %v3639 = vmax.f32 %v3339, 0.0
      %v3640 = vmax.f32 %v3340, 0.0
      %v3641 = vmax.f32 %v3341, 0.0
      %v3642 = vmax.f32 %v3342, 0.0
      %v3643 = vmax.f32 %v3343, 0.0
      %v3644 = vmax.f32 %v3344, 0.0
      %v3645 = vmax.f32 %v3345, 0.0
      %v3646 = vmax.f32 %v3346, 0.0
      %v3647 = vmax.f32 %v3347, 0.0
      %v3648 = vmax.f32 %v3348, 0.0
      %v3649 = vmax.f32 %v3349, 0.0
      %v3650 = vmax.f32 %v3350, 0.0
      %v3651 = vmax.f32 %v3351, 0.0
      %v3652 = vmax.f32 %v3352, 0.0
      %v3653 = vmax.f32 %v3353, 0.0
      %v3654 = vmax.f32 %v3354, 0.0
      %v3655 = vmax.f32 %v3355, 0.0
      %v3656 = vmax.f32 %v3356, 0.0
      %v3657 = vmax.f32 %v3357, 0.0
      %v3658 = vmax.f32 %v3358, 0.0
      %v3659 = vmax.f32 %v3359, 0.0
      %v3660 = vmax.f32 %v3360, 0.0
      %v3661 = vmax.f32 %v3361, 0.0
      %v3662 = vmax.f32 %v3362, 0.0
      %v3663 = vmax.f32 %v3363, 0.0
      %v3664 = vmax.f32 %v3364, 0.0
      %v3665 = vmax.f32 %v3365, 0.0
      %v3666 = vmax.f32 %v3366, 0.0
      %v3667 = vmax.f32 %v3367, 0.0
      %v3668 = vmax.f32 %v3368, 0.0
      %v3669 = vmax.f32 %v3369, 0.0
      %v3670 = vmax.f32 %v3370, 0.0
      %v3671 = vmax.f32 %v3371, 0.0
      %v3672 = vmax.f32 %v3372, 0.0
      %v3673 = vmax.f32 %v3373, 0.0
      %v3674 = vmax.f32 %v3374, 0.0
      %v3675 = vmax.f32 %v3375, 0.0
      %v3676 = vmax.f32 %v3376, 0.0
      %v3677 = vmax.f32 %v3377, 0.0
      %v3678 = vmax.f32 %v3378, 0.0
      %v3679 = vmax.f32 %v3379, 0.0
      %v3680 = vmax.f32 %v3380, 0.0
      %v3681 = vmax.f32 %v3381, 0.0
      %v3682 = vmax.f32 %v3382, 0.0
      %v3683 = vmax.f32 %v3383, 0.0
      %v3684 = vmax.f32 %v3384, 0.0
      %v3685 = vmax.f32 %v3385, 0.0
      %v3686 = vmax.f32 %v3386, 0.0
      %v3687 = vmax.f32 %v3387, 0.0
      %v3688 = vmax.f32 %v3388, 0.0
      %v3689 = vmax.f32 %v3389, 0.0
      %v3690 = vmax.f32 %v3390, 0.0
      %v3691 = vmax.f32 %v3391, 0.0
      %v3692 = vmax.f32 %v3392, 0.0
      %v3693 = vmax.f32 %v3393, 0.0
      %v3694 = vmax.f32 %v3394, 0.0
      %v3695 = vmax.f32 %v3395, 0.0
      %v3696 = vmax.f32 %v3396, 0.0
      %v3697 = vmax.f32 %v3397, 0.0
      %v3698 = vmax.f32 %v3398, 0.0
      %v3699 = vmax.f32 %v3399, 0.0
      %v3700 = vmax.f32 %v3400, 0.0
      %v3701 = vmax.f32 %v3401, 0.0
      %v3702 = vmax.f32 %v3402, 0.0
      %v3703 = vmax.f32 %v3403, 0.0
      %v3704 = vmax.f32 %v3404, 0.0
      %v3705 = vmax.f32 %v3405, 0.0
      %v3706 = vmax.f32 %v3406, 0.0
      %v3707 = vmax.f32 %v3407, 0.0
      %v3708 = vmax.f32 %v3408, 0.0
      %v3709 = vmax.f32 %v3409, 0.0
      %v3710 = vmax.f32 %v3410, 0.0
      %v3711 = vmax.f32 %v3411, 0.0
      %v3712 = vmax.f32 %v3412, 0.0
      %v3713 = vmax.f32 %v3413, 0.0
      %v3714 = vmax.f32 %v3414, 0.0
      %v3715 = vmax.f32 %v3415, 0.0
      %v3716 = vmax.f32 %v3416, 0.0
      %v3717 = vmax.f32 %v3417, 0.0
      %v3718 = vmax.f32 %v3418, 0.0
      %v3719 = vmax.f32 %v3419, 0.0
      %v3720 = vmax.f32 %v3420, 0.0
      %v3721 = vmax.f32 %v3421, 0.0
      %v3722 = vmax.f32 %v3422, 0.0
      %v3723 = vmax.f32 %v3423, 0.0
      %v3724 = vmax.f32 %v3424, 0.0
      %v3725 = vmax.f32 %v3425, 0.0
      %v3726 = vmax.f32 %v3426, 0.0
      %v3727 = vmax.f32 %v3427, 0.0
      %v3728 = vmax.f32 %v3428, 0.0
      %v3729 = vmax.f32 %v3429, 0.0
      %v3730 = vmax.f32 %v3430, 0.0
      %v3731 = vmax.f32 %v3431, 0.0
      %v3732 = vmax.f32 %v3432, 0.0
      %v3733 = vmax.f32 %v3433, 0.0
      %v3734 = vmax.f32 %v3434, 0.0
      %v3735 = vmax.f32 %v3435, 0.0
      %v3736 = vmax.f32 %v3436, 0.0
      %v3737 = vmax.f32 %v3437, 0.0
      %v3738 = vmax.f32 %v3438, 0.0
      %v3739 = vmax.f32 %v3439, 0.0
      %v3740 = vmax.f32 %v3440, 0.0
      %v3741 = vmax.f32 %v3441, 0.0
      %v3742 = vmax.f32 %v3442, 0.0
      %v3743 = vmax.f32 %v3443, 0.0
      %v3744 = vmax.f32 %v3444, 0.0
      %v3745 = vmax.f32 %v3445, 0.0
      %v3746 = vmax.f32 %v3446, 0.0
      %v3747 = vmax.f32 %v3447, 0.0
      %v3748 = vmax.f32 %v3448, 0.0
      %v3749 = vmax.f32 %v3449, 0.0
      %v3750 = vmax.f32 %v3450, 0.0
      %v3751 = vmax.f32 %v3451, 0.0
      %v3752 = vmax.f32 %v3452, 0.0
      %v3753 = vmax.f32 %v3453, 0.0
      %v3754 = vmax.f32 %v3454, 0.0
      %v3755 = vmax.f32 %v3455, 0.0
      %v3756 = vmax.f32 %v3456, 0.0
      %v3757 = vmax.f32 %v3457, 0.0
      %v3758 = vmax.f32 %v3458, 0.0
      %v3759 = vmax.f32 %v3459, 0.0
      %v3760 = vmax.f32 %v3460, 0.0
      %v3761 = vmax.f32 %v3461, 0.0
      %v3762 = vmax.f32 %v3462, 0.0
      %v3763 = vmax.f32 %v3463, 0.0
      %v3764 = vmax.f32 %v3464, 0.0
      %v3765 = vmax.f32 %v3465, 0.0
      %v3766 = vmax.f32 %v3466, 0.0
      %v3767 = vmax.f32 %v3467, 0.0
      %v3768 = vmax.f32 %v3468, 0.0
      %v3769 = vmax.f32 %v3469, 0.0
      %v3770 = vmax.f32 %v3470, 0.0
      %v3771 = vmax.f32 %v3471, 0.0
      %v3772 = vmax.f32 %v3472, 0.0
      %v3773 = vmax.f32 %v3473, 0.0
      %v3774 = vmax.f32 %v3474, 0.0
      %v3775 = vmax.f32 %v3475, 0.0
      %v3776 = vmax.f32 %v3476, 0.0
      %v3777 = vmax.f32 %v3477, 0.0
      %v3778 = vmax.f32 %v3478, 0.0
      %v3779 = vmax.f32 %v3479, 0.0
      %v3780 = vmax.f32 %v3480, 0.0
      %v3781 = vmax.f32 %v3481, 0.0
      %v3782 = vmax.f32 %v3482, 0.0
      %v3783 = vmax.f32 %v3483, 0.0
      %v3784 = vmax.f32 %v3484, 0.0
      %v3785 = vmax.f32 %v3485, 0.0
      %v3786 = vmax.f32 %v3486, 0.0
      %v3787 = vmax.f32 %v3487, 0.0
      %v3788 = vmax.f32 %v3488, 0.0
      %v3789 = vmax.f32 %v3489, 0.0
      %v3790 = vmax.f32 %v3490, 0.0
      %v3791 = vmax.f32 %v3491, 0.0
      %v3792 = vmax.f32 %v3492, 0.0
      %v3793 = vmax.f32 %v3493, 0.0
      %v3794 = vmax.f32 %v3494, 0.0
      %v3795 = vmax.f32 %v3495, 0.0
      %v3796 = vmax.f32 %v3496, 0.0
      %v3797 = vmax.f32 %v3497, 0.0
      %v3798 = vmax.f32 %v3498, 0.0
      %v3799 = vmax.f32 %v3499, 0.0
      %v3800 = vmax.f32 %v3500, 0.0
      %v3801 = vmax.f32 %v3501, 0.0
      %v3802 = vmax.f32 %v3502, 0.0
      %v3803 = vmax.f32 %v3503, 0.0
      %v3804 = vmax.f32 %v3504, 0.0
      %v3805 = vmax.f32 %v3505, 0.0
      %v3806 = vmax.f32 %v3506, 0.0
      %v3807 = vmax.f32 %v3507, 0.0
      %v3808 = vmax.f32 %v3508, 0.0
      %v3809 = vmax.f32 %v3509, 0.0
      %v3810 = vmax.f32 %v3510, 0.0
      %v3811 = vmax.f32 %v3511, 0.0
      %v3812 = vmax.f32 %v3512, 0.0
      %v3813 = vmax.f32 %v3513, 0.0
      %v3814 = vmax.f32 %v3514, 0.0
      %v3815 = vmax.f32 %v3515, 0.0
      %v3816 = vmax.f32 %v3516, 0.0
      %v3817 = vmax.f32 %v3517, 0.0
      %v3818 = vmax.f32 %v3518, 0.0
      %v3819 = vmax.f32 %v3519, 0.0
      %v3820 = vmax.f32 %v3520, 0.0
      %v3821 = vmax.f32 %v3521, 0.0
      %v3822 = vmax.f32 %v3522, 0.0
      %v3823 = vmax.f32 %v3523, 0.0
      %v3824 = vmax.f32 %v3524, 0.0
      %v3825 = vmax.f32 %v3525, 0.0
      %v3826 = vmax.f32 %v3526, 0.0
      %v3827 = vmax.f32 %v3527, 0.0
      %v3828 = vmax.f32 %v3528, 0.0
      %v3829 = vmax.f32 %v3529, 0.0
      %v3830 = vmax.f32 %v3530, 0.0
      %v3831 = vmax.f32 %v3531, 0.0
      %v3832 = vmax.f32 %v3532, 0.0
      %v3833 = vmax.f32 %v3533, 0.0
      %v3834 = vmax.f32 %v3534, 0.0
      %v3835 = vmax.f32 %v3535, 0.0
      %v3836 = vmax.f32 %v3536, 0.0
      %v3837 = vmax.f32 %v3537, 0.0
      %v3838 = vmax.f32 %v3538, 0.0
      %v3839 = vmax.f32 %v3539, 0.0
      %v3840 = vmax.f32 %v3540, 0.0
      %v3841 = vmax.f32 %v3541, 0.0
      %v3842 = vmax.f32 %v3542, 0.0
      %v3843 = vmax.f32 %v3543, 0.0
      %v3844 = vmax.f32 %v3544, 0.0
      %v3845 = vmax.f32 %v3545, 0.0
      %v3846 = vmax.f32 %v3546, 0.0
      %v3847 = vmax.f32 %v3547, 0.0
      %v3848 = vmax.f32 %v3548, 0.0
      %v3849 = vmax.f32 %v3549, 0.0
      %v3850 = vmax.f32 %v3550, 0.0
      %v3851 = vmax.f32 %v3551, 0.0
      %v3852 = vmax.f32 %v3552, 0.0
      %v3853 = vmax.f32 %v3553, 0.0
      %v3854 = vmax.f32 %v3554, 0.0
      %v3855 = vmax.f32 %v3555, 0.0
      %v3856 = vmax.f32 %v3556, 0.0
      %v3857 = vmax.f32 %v3557, 0.0
      %v3858 = vmax.f32 %v3558, 0.0
      %v3859 = vmax.f32 %v3559, 0.0
      %v3860 = vmax.f32 %v3560, 0.0
      %v3861 = vmax.f32 %v3561, 0.0
      %v3862 = vmax.f32 %v3562, 0.0
      %v3863 = vmax.f32 %v3563, 0.0
      %v3864 = vmax.f32 %v3564, 0.0
      %v3865 = vmax.f32 %v3565, 0.0
      %v3866 = vmax.f32 %v3566, 0.0
      %v3867 = vmax.f32 %v3567, 0.0
      %v3868 = vmax.f32 %v3568, 0.0
      %v3869 = vmax.f32 %v3569, 0.0
      %v3870 = vmax.f32 %v3570, 0.0
      %v3871 = vmax.f32 %v3571, 0.0
      %v3872 = vmax.f32 %v3572, 0.0
      %v3873 = vmax.f32 %v3573, 0.0
      %v3874 = vmax.f32 %v3574, 0.0
      %v3875 = vmax.f32 %v3575, 0.0
      %v3876 = vmax.f32 %v3576, 0.0
      %v3877 = vmax.f32 %v3577, 0.0
      %v3878 = vmax.f32 %v3578, 0.0
      %v3879 = vmax.f32 %v3579, 0.0
      %v3880 = vmax.f32 %v3580, 0.0
      %v3881 = vmax.f32 %v3581, 0.0
      %v3882 = vmax.f32 %v3582, 0.0
      %v3883 = vmax.f32 %v3583, 0.0
      %v3884 = vmax.f32 %v3584, 0.0
      %v3885 = vmax.f32 %v3585, 0.0
      %v3886 = vmax.f32 %v3586, 0.0
      %v3887 = vmax.f32 %v3587, 0.0
      %v3888 = vmax.f32 %v3588, 0.0
      %v3889 = vmax.f32 %v3589, 0.0
      %v3890 = vmax.f32 %v3590, 0.0
      %v3891 = vmax.f32 %v3591, 0.0
      %v3892 = vmax.f32 %v3592, 0.0
      %v3893 = vmax.f32 %v3593, 0.0
      %v3894 = vmax.f32 %v3594, 0.0
      %vm3895 = vcmask 130048
      %3896 = vst.msk [vmem:[%s199] sm:$0xff] %vm3895, %v3595
      %3897 = vst.msk [vmem:[%s199 + $0x8] sm:$0xff] %vm3895, %v3596
      %3898 = vst.msk [vmem:[%s199 + $0x10] sm:$0xff] %vm3895, %v3597
      %3899 = vst.msk [vmem:[%s199 + $0x18] sm:$0xff] %vm3895, %v3598
      %3900 = vst.msk [vmem:[%s199 + $0x20] sm:$0xff] %vm3895, %v3599
      %3901 = vst.msk [vmem:[%s199 + $0x28] sm:$0xff] %vm3895, %v3600
      %3902 = vst.msk [vmem:[%s199 + $0x30] sm:$0xff] %vm3895, %v3601
      %3903 = vst.msk [vmem:[%s199 + $0x38] sm:$0xff] %vm3895, %v3602
      %3904 = vst.msk [vmem:[%s199 + $0x40] sm:$0xff] %vm3895, %v3603
      %3905 = vst.msk [vmem:[%s199 + $0x48] sm:$0xff] %vm3895, %v3604
      %3906 = vst.msk [vmem:[%s199 + $0x50] sm:$0xff] %vm3895, %v3605
      %3907 = vst.msk [vmem:[%s199 + $0x58] sm:$0xff] %vm3895, %v3606
      %3908 = vst.msk [vmem:[%s199 + $0x60] sm:$0xff] %vm3895, %v3607
      %3909 = vst.msk [vmem:[%s199 + $0x68] sm:$0xff] %vm3895, %v3608
      %3910 = vst.msk [vmem:[%s199 + $0x70] sm:$0xff] %vm3895, %v3609
      %3911 = vst.msk [vmem:[%s199 + $0x78] sm:$0xff] %vm3895, %v3610
      %3912 = vst.msk [vmem:[%s199 + $0x80] sm:$0xff] %vm3895, %v3611
      %3913 = vst.msk [vmem:[%s199 + $0x88] sm:$0xff] %vm3895, %v3612
      %3914 = vst.msk [vmem:[%s199 + $0x90] sm:$0xff] %vm3895, %v3613
      %3915 = vst.msk [vmem:[%s199 + $0x98] sm:$0xff] %vm3895, %v3614
      %3916 = vst.msk [vmem:[%s199 + $0xa0] sm:$0xff] %vm3895, %v3615
      %3917 = vst.msk [vmem:[%s199 + $0xa8] sm:$0xff] %vm3895, %v3616
      %3918 = vst.msk [vmem:[%s199 + $0xb0] sm:$0xff] %vm3895, %v3617
      %3919 = vst.msk [vmem:[%s199 + $0xb8] sm:$0xff] %vm3895, %v3618
      %3920 = vst.msk [vmem:[%s199 + $0xc0] sm:$0xff] %vm3895, %v3619
      %3921 = vst.msk [vmem:[%s199 + $0xc8] sm:$0xff] %vm3895, %v3620
      %3922 = vst.msk [vmem:[%s199 + $0xd0] sm:$0xff] %vm3895, %v3621
      %3923 = vst.msk [vmem:[%s199 + $0xd8] sm:$0xff] %vm3895, %v3622
      %3924 = vst.msk [vmem:[%s199 + $0xe0] sm:$0xff] %vm3895, %v3623
      %3925 = vst.msk [vmem:[%s199 + $0xe8] sm:$0xff] %vm3895, %v3624
      %3926 = vst.msk [vmem:[%s199 + $0xf0] sm:$0xff] %vm3895, %v3625
      %3927 = vst.msk [vmem:[%s199 + $0xf8] sm:$0xff] %vm3895, %v3626
      %3928 = vst.msk [vmem:[%s199 + $0x100] sm:$0xff] %vm3895, %v3627
      %3929 = vst.msk [vmem:[%s199 + $0x108] sm:$0xff] %vm3895, %v3628
      %3930 = vst.msk [vmem:[%s199 + $0x110] sm:$0xff] %vm3895, %v3629
      %3931 = vst.msk [vmem:[%s199 + $0x118] sm:$0xff] %vm3895, %v3630
      %3932 = vst.msk [vmem:[%s199 + $0x120] sm:$0xff] %vm3895, %v3631
      %3933 = vst.msk [vmem:[%s199 + $0x128] sm:$0xff] %vm3895, %v3632
      %3934 = vst.msk [vmem:[%s199 + $0x130] sm:$0xff] %vm3895, %v3633
      %3935 = vst.msk [vmem:[%s199 + $0x138] sm:$0xff] %vm3895, %v3634
      %3936 = vst.msk [vmem:[%s199 + $0x140] sm:$0xff] %vm3895, %v3635
      %3937 = vst.msk [vmem:[%s199 + $0x148] sm:$0xff] %vm3895, %v3636
      %3938 = vst.msk [vmem:[%s199 + $0x150] sm:$0xff] %vm3895, %v3637
      %3939 = vst.msk [vmem:[%s199 + $0x158] sm:$0xff] %vm3895, %v3638
      %3940 = vst.msk [vmem:[%s199 + $0x160] sm:$0xff] %vm3895, %v3639
      %3941 = vst.msk [vmem:[%s199 + $0x168] sm:$0xff] %vm3895, %v3640
      %3942 = vst.msk [vmem:[%s199 + $0x170] sm:$0xff] %vm3895, %v3641
      %3943 = vst.msk [vmem:[%s199 + $0x178] sm:$0xff] %vm3895, %v3642
      %3944 = vst.msk [vmem:[%s199 + $0x180] sm:$0xff] %vm3895, %v3643
      %3945 = vst.msk [vmem:[%s199 + $0x188] sm:$0xff] %vm3895, %v3644
      %3946 = vst.msk [vmem:[%s199 + $0x190] sm:$0xff] %vm3895, %v3645
      %3947 = vst.msk [vmem:[%s199 + $0x198] sm:$0xff] %vm3895, %v3646
      %3948 = vst.msk [vmem:[%s199 + $0x1a0] sm:$0xff] %vm3895, %v3647
      %3949 = vst.msk [vmem:[%s199 + $0x1a8] sm:$0xff] %vm3895, %v3648
      %3950 = vst.msk [vmem:[%s199 + $0x1b0] sm:$0xff] %vm3895, %v3649
      %3951 = vst.msk [vmem:[%s199 + $0x1b8] sm:$0xff] %vm3895, %v3650
      %3952 = vst.msk [vmem:[%s199 + $0x1c0] sm:$0xff] %vm3895, %v3651
      %3953 = vst.msk [vmem:[%s199 + $0x1c8] sm:$0xff] %vm3895, %v3652
      %3954 = vst.msk [vmem:[%s199 + $0x1d0] sm:$0xff] %vm3895, %v3653
      %3955 = vst.msk [vmem:[%s199 + $0x1d8] sm:$0xff] %vm3895, %v3654
      %3956 = vst.msk [vmem:[%s199 + $0x1e0] sm:$0xff] %vm3895, %v3655
      %3957 = vst.msk [vmem:[%s199 + $0x1e8] sm:$0xff] %vm3895, %v3656
      %3958 = vst.msk [vmem:[%s199 + $0x1f0] sm:$0xff] %vm3895, %v3657
      %3959 = vst.msk [vmem:[%s199 + $0x1f8] sm:$0xff] %vm3895, %v3658
      %3960 = vst.msk [vmem:[%s199 + $0x200] sm:$0xff] %vm3895, %v3659
      %3961 = vst.msk [vmem:[%s199 + $0x208] sm:$0xff] %vm3895, %v3660
      %3962 = vst.msk [vmem:[%s199 + $0x210] sm:$0xff] %vm3895, %v3661
      %3963 = vst.msk [vmem:[%s199 + $0x218] sm:$0xff] %vm3895, %v3662
      %3964 = vst.msk [vmem:[%s199 + $0x220] sm:$0xff] %vm3895, %v3663
      %3965 = vst.msk [vmem:[%s199 + $0x228] sm:$0xff] %vm3895, %v3664
      %3966 = vst.msk [vmem:[%s199 + $0x230] sm:$0xff] %vm3895, %v3665
      %3967 = vst.msk [vmem:[%s199 + $0x238] sm:$0xff] %vm3895, %v3666
      %3968 = vst.msk [vmem:[%s199 + $0x240] sm:$0xff] %vm3895, %v3667
      %3969 = vst.msk [vmem:[%s199 + $0x248] sm:$0xff] %vm3895, %v3668
      %3970 = vst.msk [vmem:[%s199 + $0x250] sm:$0xff] %vm3895, %v3669
      %3971 = vst.msk [vmem:[%s199 + $0x258] sm:$0xff] %vm3895, %v3670
      %3972 = vst.msk [vmem:[%s199 + $0x260] sm:$0xff] %vm3895, %v3671
      %3973 = vst.msk [vmem:[%s199 + $0x268] sm:$0xff] %vm3895, %v3672
      %3974 = vst.msk [vmem:[%s199 + $0x270] sm:$0xff] %vm3895, %v3673
      %3975 = vst.msk [vmem:[%s199 + $0x278] sm:$0xff] %vm3895, %v3674
      %3976 = vst.msk [vmem:[%s199 + $0x280] sm:$0xff] %vm3895, %v3675
      %3977 = vst.msk [vmem:[%s199 + $0x288] sm:$0xff] %vm3895, %v3676
      %3978 = vst.msk [vmem:[%s199 + $0x290] sm:$0xff] %vm3895, %v3677
      %3979 = vst.msk [vmem:[%s199 + $0x298] sm:$0xff] %vm3895, %v3678
      %3980 = vst.msk [vmem:[%s199 + $0x2a0] sm:$0xff] %vm3895, %v3679
      %3981 = vst.msk [vmem:[%s199 + $0x2a8] sm:$0xff] %vm3895, %v3680
      %3982 = vst.msk [vmem:[%s199 + $0x2b0] sm:$0xff] %vm3895, %v3681
      %3983 = vst.msk [vmem:[%s199 + $0x2b8] sm:$0xff] %vm3895, %v3682
      %3984 = vst.msk [vmem:[%s199 + $0x2c0] sm:$0xff] %vm3895, %v3683
      %3985 = vst.msk [vmem:[%s199 + $0x2c8] sm:$0xff] %vm3895, %v3684
      %3986 = vst.msk [vmem:[%s199 + $0x2d0] sm:$0xff] %vm3895, %v3685
      %3987 = vst.msk [vmem:[%s199 + $0x2d8] sm:$0xff] %vm3895, %v3686
      %3988 = vst.msk [vmem:[%s199 + $0x2e0] sm:$0xff] %vm3895, %v3687
      %3989 = vst.msk [vmem:[%s199 + $0x2e8] sm:$0xff] %vm3895, %v3688
      %3990 = vst.msk [vmem:[%s199 + $0x2f0] sm:$0xff] %vm3895, %v3689
      %3991 = vst.msk [vmem:[%s199 + $0x2f8] sm:$0xff] %vm3895, %v3690
      %3992 = vst.msk [vmem:[%s199 + $0x300] sm:$0xff] %vm3895, %v3691
      %3993 = vst.msk [vmem:[%s199 + $0x308] sm:$0xff] %vm3895, %v3692
      %3994 = vst.msk [vmem:[%s199 + $0x310] sm:$0xff] %vm3895, %v3693
      %3995 = vst.msk [vmem:[%s199 + $0x318] sm:$0xff] %vm3895, %v3694
      %3996 = vst.msk [vmem:[%s199 + $0x320] sm:$0xff] %vm3895, %v3695
      %3997 = vst.msk [vmem:[%s199 + $0x328] sm:$0xff] %vm3895, %v3696
      %3998 = vst.msk [vmem:[%s199 + $0x330] sm:$0xff] %vm3895, %v3697
      %3999 = vst.msk [vmem:[%s199 + $0x338] sm:$0xff] %vm3895, %v3698
      %4000 = vst.msk [vmem:[%s199 + $0x340] sm:$0xff] %vm3895, %v3699
      %4001 = vst.msk [vmem:[%s199 + $0x348] sm:$0xff] %vm3895, %v3700
      %4002 = vst.msk [vmem:[%s199 + $0x350] sm:$0xff] %vm3895, %v3701
      %4003 = vst.msk [vmem:[%s199 + $0x358] sm:$0xff] %vm3895, %v3702
      %4004 = vst.msk [vmem:[%s199 + $0x360] sm:$0xff] %vm3895, %v3703
      %4005 = vst.msk [vmem:[%s199 + $0x368] sm:$0xff] %vm3895, %v3704
      %4006 = vst.msk [vmem:[%s199 + $0x370] sm:$0xff] %vm3895, %v3705
      %4007 = vst.msk [vmem:[%s199 + $0x378] sm:$0xff] %vm3895, %v3706
      %4008 = vst.msk [vmem:[%s199 + $0x380] sm:$0xff] %vm3895, %v3707
      %4009 = vst.msk [vmem:[%s199 + $0x388] sm:$0xff] %vm3895, %v3708
      %4010 = vst.msk [vmem:[%s199 + $0x390] sm:$0xff] %vm3895, %v3709
      %4011 = vst.msk [vmem:[%s199 + $0x398] sm:$0xff] %vm3895, %v3710
      %4012 = vst.msk [vmem:[%s199 + $0x3a0] sm:$0xff] %vm3895, %v3711
      %4013 = vst.msk [vmem:[%s199 + $0x3a8] sm:$0xff] %vm3895, %v3712
      %4014 = vst.msk [vmem:[%s199 + $0x3b0] sm:$0xff] %vm3895, %v3713
      %4015 = vst.msk [vmem:[%s199 + $0x3b8] sm:$0xff] %vm3895, %v3714
      %4016 = vst.msk [vmem:[%s199 + $0x3c0] sm:$0xff] %vm3895, %v3715
      %4017 = vst.msk [vmem:[%s199 + $0x3c8] sm:$0xff] %vm3895, %v3716
      %4018 = vst.msk [vmem:[%s199 + $0x3d0] sm:$0xff] %vm3895, %v3717
      %4019 = vst.msk [vmem:[%s199 + $0x3d8] sm:$0xff] %vm3895, %v3718
      %4020 = vst.msk [vmem:[%s199 + $0x3e0] sm:$0xff] %vm3895, %v3719
      %4021 = vst.msk [vmem:[%s199 + $0x3e8] sm:$0xff] %vm3895, %v3720
      %4022 = vst.msk [vmem:[%s199 + $0x3f0] sm:$0xff] %vm3895, %v3721
      %4023 = vst.msk [vmem:[%s199 + $0x3f8] sm:$0xff] %vm3895, %v3722
      %4024 = vst.msk [vmem:[%s199 + $0x400] sm:$0xff] %vm3895, %v3723
      %4025 = vst.msk [vmem:[%s199 + $0x408] sm:$0xff] %vm3895, %v3724
      %4026 = vst.msk [vmem:[%s199 + $0x410] sm:$0xff] %vm3895, %v3725
      %4027 = vst.msk [vmem:[%s199 + $0x418] sm:$0xff] %vm3895, %v3726
      %4028 = vst.msk [vmem:[%s199 + $0x420] sm:$0xff] %vm3895, %v3727
      %4029 = vst.msk [vmem:[%s199 + $0x428] sm:$0xff] %vm3895, %v3728
      %4030 = vst.msk [vmem:[%s199 + $0x430] sm:$0xff] %vm3895, %v3729
      %4031 = vst.msk [vmem:[%s199 + $0x438] sm:$0xff] %vm3895, %v3730
      %4032 = vst.msk [vmem:[%s199 + $0x440] sm:$0xff] %vm3895, %v3731
      %4033 = vst.msk [vmem:[%s199 + $0x448] sm:$0xff] %vm3895, %v3732
      %4034 = vst.msk [vmem:[%s199 + $0x450] sm:$0xff] %vm3895, %v3733
      %4035 = vst.msk [vmem:[%s199 + $0x458] sm:$0xff] %vm3895, %v3734
      %4036 = vst.msk [vmem:[%s199 + $0x460] sm:$0xff] %vm3895, %v3735
      %4037 = vst.msk [vmem:[%s199 + $0x468] sm:$0xff] %vm3895, %v3736
      %4038 = vst.msk [vmem:[%s199 + $0x470] sm:$0xff] %vm3895, %v3737
      %4039 = vst.msk [vmem:[%s199 + $0x478] sm:$0xff] %vm3895, %v3738
      %4040 = vst.msk [vmem:[%s199 + $0x480] sm:$0xff] %vm3895, %v3739
      %4041 = vst.msk [vmem:[%s199 + $0x488] sm:$0xff] %vm3895, %v3740
      %4042 = vst.msk [vmem:[%s199 + $0x490] sm:$0xff] %vm3895, %v3741
      %4043 = vst.msk [vmem:[%s199 + $0x498] sm:$0xff] %vm3895, %v3742
      %4044 = vst.msk [vmem:[%s199 + $0x4a0] sm:$0xff] %vm3895, %v3743
      %4045 = vst.msk [vmem:[%s199 + $0x4a8] sm:$0xff] %vm3895, %v3744
      %4046 = vst.msk [vmem:[%s199 + $0x4b0] sm:$0xff] %vm3895, %v3745
      %4047 = vst.msk [vmem:[%s199 + $0x4b8] sm:$0xff] %vm3895, %v3746
      %4048 = vst.msk [vmem:[%s199 + $0x4c0] sm:$0xff] %vm3895, %v3747
      %4049 = vst.msk [vmem:[%s199 + $0x4c8] sm:$0xff] %vm3895, %v3748
      %4050 = vst.msk [vmem:[%s199 + $0x4d0] sm:$0xff] %vm3895, %v3749
      %4051 = vst.msk [vmem:[%s199 + $0x4d8] sm:$0xff] %vm3895, %v3750
      %4052 = vst.msk [vmem:[%s199 + $0x4e0] sm:$0xff] %vm3895, %v3751
      %4053 = vst.msk [vmem:[%s199 + $0x4e8] sm:$0xff] %vm3895, %v3752
      %4054 = vst.msk [vmem:[%s199 + $0x4f0] sm:$0xff] %vm3895, %v3753
      %4055 = vst.msk [vmem:[%s199 + $0x4f8] sm:$0xff] %vm3895, %v3754
      %4056 = vst.msk [vmem:[%s199 + $0x500] sm:$0xff] %vm3895, %v3755
      %4057 = vst.msk [vmem:[%s199 + $0x508] sm:$0xff] %vm3895, %v3756
      %4058 = vst.msk [vmem:[%s199 + $0x510] sm:$0xff] %vm3895, %v3757
      %4059 = vst.msk [vmem:[%s199 + $0x518] sm:$0xff] %vm3895, %v3758
      %4060 = vst.msk [vmem:[%s199 + $0x520] sm:$0xff] %vm3895, %v3759
      %4061 = vst.msk [vmem:[%s199 + $0x528] sm:$0xff] %vm3895, %v3760
      %4062 = vst.msk [vmem:[%s199 + $0x530] sm:$0xff] %vm3895, %v3761
      %4063 = vst.msk [vmem:[%s199 + $0x538] sm:$0xff] %vm3895, %v3762
      %4064 = vst.msk [vmem:[%s199 + $0x540] sm:$0xff] %vm3895, %v3763
      %4065 = vst.msk [vmem:[%s199 + $0x548] sm:$0xff] %vm3895, %v3764
      %4066 = vst.msk [vmem:[%s199 + $0x550] sm:$0xff] %vm3895, %v3765
      %4067 = vst.msk [vmem:[%s199 + $0x558] sm:$0xff] %vm3895, %v3766
      %4068 = vst.msk [vmem:[%s199 + $0x560] sm:$0xff] %vm3895, %v3767
      %4069 = vst.msk [vmem:[%s199 + $0x568] sm:$0xff] %vm3895, %v3768
      %4070 = vst.msk [vmem:[%s199 + $0x570] sm:$0xff] %vm3895, %v3769
      %4071 = vst.msk [vmem:[%s199 + $0x578] sm:$0xff] %vm3895, %v3770
      %4072 = vst.msk [vmem:[%s199 + $0x580] sm:$0xff] %vm3895, %v3771
      %4073 = vst.msk [vmem:[%s199 + $0x588] sm:$0xff] %vm3895, %v3772
      %4074 = vst.msk [vmem:[%s199 + $0x590] sm:$0xff] %vm3895, %v3773
      %4075 = vst.msk [vmem:[%s199 + $0x598] sm:$0xff] %vm3895, %v3774
      %4076 = vst.msk [vmem:[%s199 + $0x5a0] sm:$0xff] %vm3895, %v3775
      %4077 = vst.msk [vmem:[%s199 + $0x5a8] sm:$0xff] %vm3895, %v3776
      %4078 = vst.msk [vmem:[%s199 + $0x5b0] sm:$0xff] %vm3895, %v3777
      %4079 = vst.msk [vmem:[%s199 + $0x5b8] sm:$0xff] %vm3895, %v3778
      %4080 = vst.msk [vmem:[%s199 + $0x5c0] sm:$0xff] %vm3895, %v3779
      %4081 = vst.msk [vmem:[%s199 + $0x5c8] sm:$0xff] %vm3895, %v3780
      %4082 = vst.msk [vmem:[%s199 + $0x5d0] sm:$0xff] %vm3895, %v3781
      %4083 = vst.msk [vmem:[%s199 + $0x5d8] sm:$0xff] %vm3895, %v3782
      %4084 = vst.msk [vmem:[%s199 + $0x5e0] sm:$0xff] %vm3895, %v3783
      %4085 = vst.msk [vmem:[%s199 + $0x5e8] sm:$0xff] %vm3895, %v3784
      %4086 = vst.msk [vmem:[%s199 + $0x5f0] sm:$0xff] %vm3895, %v3785
      %4087 = vst.msk [vmem:[%s199 + $0x5f8] sm:$0xff] %vm3895, %v3786
      %4088 = vst.msk [vmem:[%s199 + $0x600] sm:$0xff] %vm3895, %v3787
      %4089 = vst.msk [vmem:[%s199 + $0x608] sm:$0xff] %vm3895, %v3788
      %4090 = vst.msk [vmem:[%s199 + $0x610] sm:$0xff] %vm3895, %v3789
      %4091 = vst.msk [vmem:[%s199 + $0x618] sm:$0xff] %vm3895, %v3790
      %4092 = vst.msk [vmem:[%s199 + $0x620] sm:$0xff] %vm3895, %v3791
      %4093 = vst.msk [vmem:[%s199 + $0x628] sm:$0xff] %vm3895, %v3792
      %4094 = vst.msk [vmem:[%s199 + $0x630] sm:$0xff] %vm3895, %v3793
      %4095 = vst.msk [vmem:[%s199 + $0x638] sm:$0xff] %vm3895, %v3794
      %4096 = vst.msk [vmem:[%s199 + $0x640] sm:$0xff] %vm3895, %v3795
      %4097 = vst.msk [vmem:[%s199 + $0x648] sm:$0xff] %vm3895, %v3796
      %4098 = vst.msk [vmem:[%s199 + $0x650] sm:$0xff] %vm3895, %v3797
      %4099 = vst.msk [vmem:[%s199 + $0x658] sm:$0xff] %vm3895, %v3798
      %4100 = vst.msk [vmem:[%s199 + $0x660] sm:$0xff] %vm3895, %v3799
      %4101 = vst.msk [vmem:[%s199 + $0x668] sm:$0xff] %vm3895, %v3800
      %4102 = vst.msk [vmem:[%s199 + $0x670] sm:$0xff] %vm3895, %v3801
      %4103 = vst.msk [vmem:[%s199 + $0x678] sm:$0xff] %vm3895, %v3802
      %4104 = vst.msk [vmem:[%s199 + $0x680] sm:$0xff] %vm3895, %v3803
      %4105 = vst.msk [vmem:[%s199 + $0x688] sm:$0xff] %vm3895, %v3804
      %4106 = vst.msk [vmem:[%s199 + $0x690] sm:$0xff] %vm3895, %v3805
      %4107 = vst.msk [vmem:[%s199 + $0x698] sm:$0xff] %vm3895, %v3806
      %4108 = vst.msk [vmem:[%s199 + $0x6a0] sm:$0xff] %vm3895, %v3807
      %4109 = vst.msk [vmem:[%s199 + $0x6a8] sm:$0xff] %vm3895, %v3808
      %4110 = vst.msk [vmem:[%s199 + $0x6b0] sm:$0xff] %vm3895, %v3809
      %4111 = vst.msk [vmem:[%s199 + $0x6b8] sm:$0xff] %vm3895, %v3810
      %4112 = vst.msk [vmem:[%s199 + $0x6c0] sm:$0xff] %vm3895, %v3811
      %4113 = vst.msk [vmem:[%s199 + $0x6c8] sm:$0xff] %vm3895, %v3812
      %4114 = vst.msk [vmem:[%s199 + $0x6d0] sm:$0xff] %vm3895, %v3813
      %4115 = vst.msk [vmem:[%s199 + $0x6d8] sm:$0xff] %vm3895, %v3814
      %4116 = vst.msk [vmem:[%s199 + $0x6e0] sm:$0xff] %vm3895, %v3815
      %4117 = vst.msk [vmem:[%s199 + $0x6e8] sm:$0xff] %vm3895, %v3816
      %4118 = vst.msk [vmem:[%s199 + $0x6f0] sm:$0xff] %vm3895, %v3817
      %4119 = vst.msk [vmem:[%s199 + $0x6f8] sm:$0xff] %vm3895, %v3818
      %4120 = vst.msk [vmem:[%s199 + $0x700] sm:$0xff] %vm3895, %v3819
      %4121 = vst.msk [vmem:[%s199 + $0x708] sm:$0xff] %vm3895, %v3820
      %4122 = vst.msk [vmem:[%s199 + $0x710] sm:$0xff] %vm3895, %v3821
      %4123 = vst.msk [vmem:[%s199 + $0x718] sm:$0xff] %vm3895, %v3822
      %4124 = vst.msk [vmem:[%s199 + $0x720] sm:$0xff] %vm3895, %v3823
      %4125 = vst.msk [vmem:[%s199 + $0x728] sm:$0xff] %vm3895, %v3824
      %4126 = vst.msk [vmem:[%s199 + $0x730] sm:$0xff] %vm3895, %v3825
      %4127 = vst.msk [vmem:[%s199 + $0x738] sm:$0xff] %vm3895, %v3826
      %4128 = vst.msk [vmem:[%s199 + $0x740] sm:$0xff] %vm3895, %v3827
      %4129 = vst.msk [vmem:[%s199 + $0x748] sm:$0xff] %vm3895, %v3828
      %4130 = vst.msk [vmem:[%s199 + $0x750] sm:$0xff] %vm3895, %v3829
      %4131 = vst.msk [vmem:[%s199 + $0x758] sm:$0xff] %vm3895, %v3830
      %4132 = vst.msk [vmem:[%s199 + $0x760] sm:$0xff] %vm3895, %v3831
      %4133 = vst.msk [vmem:[%s199 + $0x768] sm:$0xff] %vm3895, %v3832
      %4134 = vst.msk [vmem:[%s199 + $0x770] sm:$0xff] %vm3895, %v3833
      %4135 = vst.msk [vmem:[%s199 + $0x778] sm:$0xff] %vm3895, %v3834
      %4136 = vst.msk [vmem:[%s199 + $0x780] sm:$0xff] %vm3895, %v3835
      %4137 = vst.msk [vmem:[%s199 + $0x788] sm:$0xff] %vm3895, %v3836
      %4138 = vst.msk [vmem:[%s199 + $0x790] sm:$0xff] %vm3895, %v3837
      %4139 = vst.msk [vmem:[%s199 + $0x798] sm:$0xff] %vm3895, %v3838
      %4140 = vst.msk [vmem:[%s199 + $0x7a0] sm:$0xff] %vm3895, %v3839
      %4141 = vst.msk [vmem:[%s199 + $0x7a8] sm:$0xff] %vm3895, %v3840
      %4142 = vst.msk [vmem:[%s199 + $0x7b0] sm:$0xff] %vm3895, %v3841
      %4143 = vst.msk [vmem:[%s199 + $0x7b8] sm:$0xff] %vm3895, %v3842
      %4144 = vst.msk [vmem:[%s199 + $0x7c0] sm:$0xff] %vm3895, %v3843
      %4145 = vst.msk [vmem:[%s199 + $0x7c8] sm:$0xff] %vm3895, %v3844
      %4146 = vst.msk [vmem:[%s199 + $0x7d0] sm:$0xff] %vm3895, %v3845
      %4147 = vst.msk [vmem:[%s199 + $0x7d8] sm:$0xff] %vm3895, %v3846
      %4148 = vst.msk [vmem:[%s199 + $0x7e0] sm:$0xff] %vm3895, %v3847
      %4149 = vst.msk [vmem:[%s199 + $0x7e8] sm:$0xff] %vm3895, %v3848
      %4150 = vst.msk [vmem:[%s199 + $0x7f0] sm:$0xff] %vm3895, %v3849
      %4151 = vst.msk [vmem:[%s199 + $0x7f8] sm:$0xff] %vm3895, %v3850
      %4152 = vst.msk [vmem:[%s199 + $0x800] sm:$0xff] %vm3895, %v3851
      %4153 = vst.msk [vmem:[%s199 + $0x808] sm:$0xff] %vm3895, %v3852
      %4154 = vst.msk [vmem:[%s199 + $0x810] sm:$0xff] %vm3895, %v3853
      %4155 = vst.msk [vmem:[%s199 + $0x818] sm:$0xff] %vm3895, %v3854
      %4156 = vst.msk [vmem:[%s199 + $0x820] sm:$0xff] %vm3895, %v3855
      %4157 = vst.msk [vmem:[%s199 + $0x828] sm:$0xff] %vm3895, %v3856
      %4158 = vst.msk [vmem:[%s199 + $0x830] sm:$0xff] %vm3895, %v3857
      %4159 = vst.msk [vmem:[%s199 + $0x838] sm:$0xff] %vm3895, %v3858
      %4160 = vst.msk [vmem:[%s199 + $0x840] sm:$0xff] %vm3895, %v3859
      %4161 = vst.msk [vmem:[%s199 + $0x848] sm:$0xff] %vm3895, %v3860
      %4162 = vst.msk [vmem:[%s199 + $0x850] sm:$0xff] %vm3895, %v3861
      %4163 = vst.msk [vmem:[%s199 + $0x858] sm:$0xff] %vm3895, %v3862
      %4164 = vst.msk [vmem:[%s199 + $0x860] sm:$0xff] %vm3895, %v3863
      %4165 = vst.msk [vmem:[%s199 + $0x868] sm:$0xff] %vm3895, %v3864
      %4166 = vst.msk [vmem:[%s199 + $0x870] sm:$0xff] %vm3895, %v3865
      %4167 = vst.msk [vmem:[%s199 + $0x878] sm:$0xff] %vm3895, %v3866
      %4168 = vst.msk [vmem:[%s199 + $0x880] sm:$0xff] %vm3895, %v3867
      %4169 = vst.msk [vmem:[%s199 + $0x888] sm:$0xff] %vm3895, %v3868
      %4170 = vst.msk [vmem:[%s199 + $0x890] sm:$0xff] %vm3895, %v3869
      %4171 = vst.msk [vmem:[%s199 + $0x898] sm:$0xff] %vm3895, %v3870
      %4172 = vst.msk [vmem:[%s199 + $0x8a0] sm:$0xff] %vm3895, %v3871
      %4173 = vst.msk [vmem:[%s199 + $0x8a8] sm:$0xff] %vm3895, %v3872
      %4174 = vst.msk [vmem:[%s199 + $0x8b0] sm:$0xff] %vm3895, %v3873
      %4175 = vst.msk [vmem:[%s199 + $0x8b8] sm:$0xff] %vm3895, %v3874
      %4176 = vst.msk [vmem:[%s199 + $0x8c0] sm:$0xff] %vm3895, %v3875
      %4177 = vst.msk [vmem:[%s199 + $0x8c8] sm:$0xff] %vm3895, %v3876
      %4178 = vst.msk [vmem:[%s199 + $0x8d0] sm:$0xff] %vm3895, %v3877
      %4179 = vst.msk [vmem:[%s199 + $0x8d8] sm:$0xff] %vm3895, %v3878
      %4180 = vst.msk [vmem:[%s199 + $0x8e0] sm:$0xff] %vm3895, %v3879
      %4181 = vst.msk [vmem:[%s199 + $0x8e8] sm:$0xff] %vm3895, %v3880
      %4182 = vst.msk [vmem:[%s199 + $0x8f0] sm:$0xff] %vm3895, %v3881
      %4183 = vst.msk [vmem:[%s199 + $0x8f8] sm:$0xff] %vm3895, %v3882
      %4184 = vst.msk [vmem:[%s199 + $0x900] sm:$0xff] %vm3895, %v3883
      %4185 = vst.msk [vmem:[%s199 + $0x908] sm:$0xff] %vm3895, %v3884
      %4186 = vst.msk [vmem:[%s199 + $0x910] sm:$0xff] %vm3895, %v3885
      %4187 = vst.msk [vmem:[%s199 + $0x918] sm:$0xff] %vm3895, %v3886
      %4188 = vst.msk [vmem:[%s199 + $0x920] sm:$0xff] %vm3895, %v3887
      %4189 = vst.msk [vmem:[%s199 + $0x928] sm:$0xff] %vm3895, %v3888
      %4190 = vst.msk [vmem:[%s199 + $0x930] sm:$0xff] %vm3895, %v3889
      %4191 = vst.msk [vmem:[%s199 + $0x938] sm:$0xff] %vm3895, %v3890
      %4192 = vst.msk [vmem:[%s199 + $0x940] sm:$0xff] %vm3895, %v3891
      %4193 = vst.msk [vmem:[%s199 + $0x948] sm:$0xff] %vm3895, %v3892
      %4194 = vst.msk [vmem:[%s199 + $0x950] sm:$0xff] %vm3895, %v3893
      %4195 = vst.msk [vmem:[%s199 + $0x958] sm:$0xff] %vm3895, %v3894
      %s4196 = smul.u32 300, %s15
      %p4197 = scmp.lt.s32.totalorder %s4196, 2399
      %s4198 = scalar_select %p4197, %s4196, 2399
      %s4199 = smul.addr %s4198, 8
      %s4200 = scalar_lea.vmem %s4, %s4199
      // Predicated region
      $region37: #{tpu_custom_call.1} parent=35 // pred_check
        %p4201 = pneg %p122
      $region38: #{tpu_custom_call.1} parent=35 // pred_check_branch
        %4203 = sbr.rel (%p4201) target = $region40
      $region39: #{tpu_custom_call.1} parent=35 // pred_region
        %s4204 = smul.u32 300, %s15
      $region40: #{tpu_custom_call.1} parent=35 // pred_fallthru
        _
    $region36: #{tpu_custom_call.1} parent=5 // pred_fallthru
      _
    %p4205 = scmp.le.s32.totalorder 2, %s10
    // Predicated region
    $region41: #{tpu_custom_call.1} parent=5 // pred_check
      %p4206 = pneg %p4205
    $region42: #{tpu_custom_call.1} parent=5 // pred_check_branch
      %4208 = sbr.rel (%p4206) target = $region44
    $region43: #{tpu_custom_call.1} parent=5 // pred_region
      %s4209 = ssub.s32 %s10, 2
      // Predicated region
      $region45: #{tpu_custom_call.1} parent=43 // pred_check
        %p4210 = pneg %p128
      $region46: #{tpu_custom_call.1} parent=43 // pred_check_branch
        %4212 = sbr.rel (%p4210) target = $region48
      $region47: #{tpu_custom_call.1} parent=43 // pred_region
        %s4213 = smul.u32 300, %s16
        %p4214 = scmp.lt.s32.totalorder %s4213, 2399
        %s4215 = scalar_select %p4214, %s4213, 2399
        %s4216 = smul.addr %s4215, 8
        %s4217 = scalar_lea.vmem %s4, %s4216
      $region48: #{tpu_custom_call.1} parent=43 // pred_fallthru
        _
    $region44: #{tpu_custom_call.1} parent=5 // pred_fallthru
      _
  $region6: #{tpu_custom_call.1} parent=0 // loop_footer
    %s14 = sadd.s32 1, %s10
  $region7: #{tpu_custom_call.1} parent=0 // loop_footer_branch
    %9 = sbr.rel target = $region3
  $region8: #{tpu_custom_call.1} parent=0 // loop_exit
    _

</llo_original>
